<compile_context>
chip_gen: v7x
topology: tpu7x:2x2x1
jax: 0.10.0
libtpu: 0.0.40
codegen_flags: <defaults>
</compile_context>

<pallas_src>
import jax
import jax.numpy as jnp
from jax.experimental import pallas as pl
from jax.experimental.pallas import tpu as pltpu


_TAPS = tuple((ky, kx) for ky in range(3) for kx in range(3))   # t = 3*ky + kx


# ------------------------------ small in-kernel helpers ------------------------------ #

def _pad_front_rows(v):
    """Prepend one zero row along axis 0 of [R, C, K]."""
    _, W, C = v.shape
    return jnp.concatenate([jnp.zeros((1, W, C), v.dtype), v], axis=0)


def _pad_front_cols(v):
    """Prepend one zero column along axis 1 of [R, C, K]."""
    H, _, C = v.shape
    return jnp.concatenate([jnp.zeros((H, 1, C), v.dtype), v], axis=1)


def _pad_border1(v):
    """Zero-pad 1 pixel on all sides of the first two dims of [R, C, K]."""
    H, W, C = v.shape
    zr = jnp.zeros((1, W, C), v.dtype)
    v = jnp.concatenate([zr, v, zr], axis=0)
    zc = jnp.zeros((H + 2, 1, C), v.dtype)
    return jnp.concatenate([zc, v, zc], axis=1)


# ------------------------------ fused per-batch kernel ------------------------------ #

def _fused_kernel(alpha_ref, p_ref, w1_ref, w2_ref, w3_ref,
                  gw1_ref, gb1_ref, gw2_ref, gb2_ref, o_ref):
    _, Ho, Wo, C3 = o_ref.shape
    HoWo = Ho * Wo
    C1 = w1_ref.shape[1]          # 64
    C2 = w2_ref.shape[2]          # (128 + out_channels) // 3

    # ---- conv1: single K = 9*Cin matmul on parity-grouped im2col patches ----
    patches = p_ref[0]                                             # [4*HoWo, 9*Cin] bf16
    a1 = jnp.dot(patches, w1_ref[...], preferred_element_type=jnp.float32)
    a1 = jnp.where(a1 >= 0.0, a1, alpha_ref[0] * a1)               # PReLU (shared alpha)
    a1 = a1.astype(jnp.bfloat16)                                   # cast once for the MXU

    # parity planes of the conv1 activation: group g = parity_y*2 + parity_x
    ee = a1[0 * HoWo:1 * HoWo].reshape(Ho, Wo, C1)                 # even rows, even cols
    eo = a1[1 * HoWo:2 * HoWo].reshape(Ho, Wo, C1)                 # even rows, odd  cols
    oe = a1[2 * HoWo:3 * HoWo].reshape(Ho, Wo, C1)                 # odd  rows, even cols
    oo = a1[3 * HoWo:4 * HoWo].reshape(Ho, Wo, C1)                 # odd  rows, odd  cols
    # one-time front pads so the "-1" (padding=1) positions of odd planes are zeros
    eo = _pad_front_cols(eo)                                       # [Ho,   Wo+1, C1]
    oe = _pad_front_rows(oe)                                       # [Ho+1, Wo,   C1]
    oo = _pad_front_cols(_pad_front_rows(oo))                      # [Ho+1, Wo+1, C1]
    planes = {(0, 0): ee, (0, 1): eo, (1, 0): oe, (1, 1): oo}

    # ---- conv2 with stride 2 folded in: 9 static-slice taps at Ho*Wo positions ----
    # output (oy, ox), tap (ky, kx) reads a1[2*oy + ky - 1, 2*ox + kx - 1]
    acc2 = jnp.zeros((HoWo, C2), jnp.float32)
    for t, (ky, kx) in enumerate(_TAPS):
        py = 0 if ky == 1 else 1                                   # row parity of the tap
        px = 0 if kx == 1 else 1
        sy = 1 if ky == 2 else 0                                   # shift within odd plane
        sx = 1 if kx == 2 else 0
        v = planes[(py, px)][sy:sy + Ho, sx:sx + Wo, :].reshape(HoWo, C1)
        acc2 = acc2 + jnp.dot(v, w2_ref[t], preferred_element_type=jnp.float32)
    a2 = jnp.where(acc2 >= 0.0, acc2, alpha_ref[1] * acc2)         # PReLU (shared alpha)
    a2 = _pad_border1(a2.astype(jnp.bfloat16).reshape(Ho, Wo, C2)) # [Ho+2, Wo+2, C2]

    # ---- conv3 (stride 1, padding 1): 9 static-slice taps ----
    acc3 = jnp.zeros((HoWo, C3), jnp.float32)
    for t, (ky, kx) in enumerate(_TAPS):
        v = a2[ky:ky + Ho, kx:kx + Wo, :].reshape(HoWo, C2)
        acc3 = acc3 + jnp.dot(v, w3_ref[t], preferred_element_type=jnp.float32)

    # ---- ChannelGate: avg & max pooled rows stacked -> shared MLP is 2 matmuls ----
    avg = jnp.mean(acc3, axis=0, keepdims=True)                    # [1, C3]
    mx = jnp.max(acc3, axis=0, keepdims=True)                      # [1, C3]
    pooled = jnp.concatenate([avg, mx], axis=0)                    # [2, C3]
    h = jnp.dot(pooled, gw1_ref[...], preferred_element_type=jnp.float32) + gb1_ref[...]
    h = jnp.maximum(h, 0.0)                                        # [2, Cr]
    z = jnp.dot(h, gw2_ref[...], preferred_element_type=jnp.float32) + gb2_ref[...]
    att = jax.nn.sigmoid(z[0:1, :] + z[1:2, :])                    # [1, C3] mlp(avg)+mlp(max)

    y = acc3 * att                                                 # broadcast over positions
    o_ref[0] = y.reshape(Ho, Wo, C3).astype(o_ref.dtype)


# ------------------------------------- wrapper -------------------------------------- #

def _taps(w_oihw):
    """PyTorch [Cout, Cin, 3, 3] -> [9, Cin, Cout] bf16, taps ordered t = 3*ky + kx."""
    cout, cin = w_oihw.shape[0], w_oihw.shape[1]
    return jnp.transpose(w_oihw, (2, 3, 1, 0)).reshape(9, cin, cout).astype(jnp.bfloat16)


def grid_dense_channel_ext(x_nchw, params):
    B, Cin, H, W = x_nchw.shape
    Ho, Wo = H // 2, W // 2
    HoWo = Ho * Wo

    w1 = jnp.transpose(params["w1"], (2, 3, 1, 0)).reshape(9 * Cin, -1).astype(jnp.bfloat16)
    w2 = _taps(params["w2"])                                        # [9, 64, C2]
    w3 = _taps(params["w3"])                                        # [9, C2, C3]
    C1, C2, C3 = w1.shape[-1], w2.shape[-1], w3.shape[-1]
    Cr = params["gw1"].shape[1]
    alphas = jnp.stack([params["prelu1"], params["prelu2"]]).astype(jnp.float32)   # (2,)

    # conv1 im2col (only 9*Cin columns -> tiny), rows grouped by output-position parity
    # (py, px) so the kernel's conv2 can gather its stride-2 taps with static slices.
    x = jnp.transpose(x_nchw, (0, 2, 3, 1)).astype(jnp.float32)     # NHWC
    xp = jnp.pad(x, ((0, 0), (1, 1), (1, 1), (0, 0)))
    cols = [xp[:, ky:ky + H, kx:kx + W, :] for ky in range(3) for kx in range(3)]
    patches = jnp.concatenate(cols, axis=-1)                        # [B, H, W, 9*Cin]
    patches = patches.reshape(B, Ho, 2, Wo, 2, 9 * Cin)
    patches = jnp.transpose(patches, (0, 2, 4, 1, 3, 5))            # [B, py, px, Ho, Wo, K]
    patches = patches.reshape(B, 4 * HoWo, 9 * Cin).astype(jnp.bfloat16)

    out_nhwc = pl.pallas_call(
        _fused_kernel,
        out_shape=jax.ShapeDtypeStruct((B, Ho, Wo, C3), jnp.float32),
        grid=(B,),
        in_specs=[
            pl.BlockSpec(memory_space=pltpu.MemorySpace.SMEM),              # PReLU alphas
            pl.BlockSpec((1, 4 * HoWo, 9 * Cin), lambda b: (b, 0, 0)),      # conv1 patches
            pl.BlockSpec((9 * Cin, C1), lambda b: (0, 0)),                  # conv1 weight
            pl.BlockSpec((9, C1, C2), lambda b: (0, 0, 0)),                 # conv2 taps
            pl.BlockSpec((9, C2, C3), lambda b: (0, 0, 0)),                 # conv3 taps
            pl.BlockSpec((C3, Cr), lambda b: (0, 0)),                       # gate fc1 W
            pl.BlockSpec((1, Cr), lambda b: (0, 0)),                        # gate fc1 b
            pl.BlockSpec((Cr, C3), lambda b: (0, 0)),                       # gate fc2 W
            pl.BlockSpec((1, C3), lambda b: (0, 0)),                        # gate fc2 b
        ],
        out_specs=pl.BlockSpec((1, Ho, Wo, C3), lambda b: (b, 0, 0, 0)),
        compiler_params=pltpu.CompilerParams(dimension_semantics=("parallel",)),
    )(alphas, patches, w1, w2, w3,
      params["gw1"], params["gb1"], params["gw2"], params["gb2"])

    # NHWC -> NCHW (tiny layout glue; kernel stores stay lane-dense 256-channel)
    return jnp.transpose(out_nhwc, (0, 3, 1, 2))


# --------------------------------------- params -------------------------------------- #

def init_params(key, in_channels, out_channels=256):
    mid = (128 + out_channels) // 3          # 128 for out_channels=256
    red = out_channels // 16                 # ChannelGate reduction_ratio = 16
    ks = jax.random.split(key, 6)

    def conv_w(k, co, ci):
        fan_in = ci * 9
        return jax.random.normal(k, (co, ci, 3, 3), jnp.float32) / jnp.sqrt(fan_in)

    return dict(
        w1=conv_w(ks[0], 64, in_channels),
        w2=conv_w(ks[1], mid, 64),
        w3=conv_w(ks[2], out_channels, mid),
        prelu1=0.25,   # nn.PReLU() default: single shared parameter, init 0.25
        prelu2=0.25,
        gw1=jax.random.normal(ks[3], (out_channels, red), jnp.float32) * 0.05,
        gb1=jnp.zeros((1, red), jnp.float32),
        gw2=jax.random.normal(ks[4], (red, out_channels), jnp.float32) * 0.05,
        gb2=jnp.zeros((1, out_channels), jnp.float32),
    )


# ---------------------------------------- main --------------------------------------- #

if __name__ == "__main__":
    key = jax.random.PRNGKey(0)
    kx, kp = jax.random.split(key)
    B, Cin, H, W = 2, 4, 16, 16
    x = jax.random.normal(kx, (B, Cin, H, W), jnp.float32)
    params = init_params(kp, Cin, out_channels=256)

    out = jax.jit(grid_dense_channel_ext)(x, params)
    out = jax.block_until_ready(out)
    assert out.shape == (B, 256, H // 2, W // 2), out.shape
    assert bool(jnp.all(jnp.isfinite(out)))
    print("KERNEL_OK")
</pallas_src>

<mosaic_0001>
module attributes {stable_mosaic.version = 11 : i64} {
  func.func @_fused_kernel(%arg0: i32, %arg1: memref<2xf32, #tpu.memory_space<smem>>, %arg2: memref<1x256x36xbf16, #tpu.memory_space<vmem>>, %arg3: memref<36x64xbf16, #tpu.memory_space<vmem>>, %arg4: memref<9x64x128xbf16, #tpu.memory_space<vmem>>, %arg5: memref<9x128x256xbf16, #tpu.memory_space<vmem>>, %arg6: memref<256x16xf32, #tpu.memory_space<vmem>>, %arg7: memref<1x16xf32, #tpu.memory_space<vmem>>, %arg8: memref<16x256xf32, #tpu.memory_space<vmem>>, %arg9: memref<1x256xf32, #tpu.memory_space<vmem>>, %arg10: memref<1x8x8x256xf32, #tpu.memory_space<vmem>>) attributes {dimension_semantics = [#tpu.dimension_semantics<parallel>], iteration_bounds = array<i64: 2>, scalar_prefetch = 0 : i64, scratch_operands = 0 : i64, tpu.core_type = #tpu.core_type<tc>, window_params = [{transform_indices = @transform_0, window_bounds = array<i64: 2>}, {transform_indices = @transform_1, window_bounds = array<i64: 1, 256, 36>}, {pipeline_mode = #tpu.pipeline_mode<synchronous>, transform_indices = @transform_2, window_bounds = array<i64: 36, 64>}, {pipeline_mode = #tpu.pipeline_mode<synchronous>, transform_indices = @transform_3, window_bounds = array<i64: 9, 64, 128>}, {pipeline_mode = #tpu.pipeline_mode<synchronous>, transform_indices = @transform_4, window_bounds = array<i64: 9, 128, 256>}, {pipeline_mode = #tpu.pipeline_mode<synchronous>, transform_indices = @transform_5, window_bounds = array<i64: 256, 16>}, {pipeline_mode = #tpu.pipeline_mode<synchronous>, transform_indices = @transform_6, window_bounds = array<i64: 1, 16>}, {pipeline_mode = #tpu.pipeline_mode<synchronous>, transform_indices = @transform_7, window_bounds = array<i64: 16, 256>}, {pipeline_mode = #tpu.pipeline_mode<synchronous>, transform_indices = @transform_8, window_bounds = array<i64: 1, 256>}, {transform_indices = @transform_9, window_bounds = array<i64: 1, 8, 8, 256>}]} {
    %c0 = arith.constant 0 : index
    %c0_0 = arith.constant 0 : index
    %c0_1 = arith.constant 0 : index
    %0 = vector.load %arg2[%c0, %c0_0, %c0_1] : memref<1x256x36xbf16, #tpu.memory_space<vmem>>, vector<1x256x36xbf16>
    %1 = vector.shape_cast %0 : vector<1x256x36xbf16> to vector<256x36xbf16>
    %c0_2 = arith.constant 0 : index
    %c0_3 = arith.constant 0 : index
    %2 = vector.load %arg3[%c0_2, %c0_3] : memref<36x64xbf16, #tpu.memory_space<vmem>>, vector<36x64xbf16>
    %cst = arith.constant dense<0.000000e+00> : vector<256x64xf32>
    %3 = tpu.matmul %1, %2, %cst {dimension_numbers = #tpu.dot_dimension_numbers<[1], [0], [0], [1], [0, 0, 1, 1], [], []>} : vector<256x36xbf16>, vector<36x64xbf16>, vector<256x64xf32> -> vector<256x64xf32>
    %cst_4 = arith.constant 0.000000e+00 : f32
    %4 = vector.broadcast %cst_4 : f32 to vector<256x64xf32>
    %5 = arith.cmpf oge, %3, %4 : vector<256x64xf32>
    %c0_5 = arith.constant 0 : index
    %6 = memref.load %arg1[%c0_5] : memref<2xf32, #tpu.memory_space<smem>>
    %7 = vector.broadcast %6 : f32 to vector<256x64xf32>
    %8 = arith.mulf %7, %3 : vector<256x64xf32>
    %9 = arith.select %5, %3, %8 : vector<256x64xi1>, vector<256x64xf32>
    %10 = arith.truncf %9 : vector<256x64xf32> to vector<256x64xbf16>
    %11 = vector.extract_strided_slice %10 {offsets = [0, 0], sizes = [64, 64], strides = [1, 1]} : vector<256x64xbf16> to vector<64x64xbf16>
    %12 = vector.shape_cast %11 : vector<64x64xbf16> to vector<8x8x64xbf16>
    %13 = vector.extract_strided_slice %10 {offsets = [64, 0], sizes = [64, 64], strides = [1, 1]} : vector<256x64xbf16> to vector<64x64xbf16>
    %14 = vector.shape_cast %13 : vector<64x64xbf16> to vector<8x8x64xbf16>
    %15 = vector.extract_strided_slice %10 {offsets = [128, 0], sizes = [64, 64], strides = [1, 1]} : vector<256x64xbf16> to vector<64x64xbf16>
    %16 = vector.shape_cast %15 : vector<64x64xbf16> to vector<8x8x64xbf16>
    %17 = vector.extract_strided_slice %10 {offsets = [192, 0], sizes = [64, 64], strides = [1, 1]} : vector<256x64xbf16> to vector<64x64xbf16>
    %18 = vector.shape_cast %17 : vector<64x64xbf16> to vector<8x8x64xbf16>
    %cst_6 = arith.constant 0.000000e+00 : bf16
    %19 = vector.broadcast %cst_6 : bf16 to vector<8x1x64xbf16>
    %20 = tpu.concatenate %19, %14 in 1 : vector<8x1x64xbf16>, vector<8x8x64xbf16> -> vector<8x9x64xbf16>
    %cst_7 = arith.constant 0.000000e+00 : bf16
    %21 = vector.broadcast %cst_7 : bf16 to vector<1x8x64xbf16>
    %22 = tpu.concatenate %21, %16 in 0 : vector<1x8x64xbf16>, vector<8x8x64xbf16> -> vector<9x8x64xbf16>
    %cst_8 = arith.constant 0.000000e+00 : bf16
    %23 = vector.broadcast %cst_8 : bf16 to vector<1x8x64xbf16>
    %24 = tpu.concatenate %23, %18 in 0 : vector<1x8x64xbf16>, vector<8x8x64xbf16> -> vector<9x8x64xbf16>
    %cst_9 = arith.constant 0.000000e+00 : bf16
    %25 = vector.broadcast %cst_9 : bf16 to vector<9x1x64xbf16>
    %26 = tpu.concatenate %25, %24 in 1 : vector<9x1x64xbf16>, vector<9x8x64xbf16> -> vector<9x9x64xbf16>
    %cst_10 = arith.constant 0.000000e+00 : f32
    %27 = vector.broadcast %cst_10 : f32 to vector<64x128xf32>
    %28 = vector.extract_strided_slice %26 {offsets = [0, 0, 0], sizes = [8, 8, 64], strides = [1, 1, 1]} : vector<9x9x64xbf16> to vector<8x8x64xbf16>
    %29 = vector.shape_cast %28 : vector<8x8x64xbf16> to vector<64x64xbf16>
    %c0_11 = arith.constant 0 : index
    %c0_12 = arith.constant 0 : index
    %c0_13 = arith.constant 0 : index
    %30 = vector.load %arg4[%c0_11, %c0_12, %c0_13] : memref<9x64x128xbf16, #tpu.memory_space<vmem>>, vector<1x64x128xbf16>
    %31 = vector.shape_cast %30 : vector<1x64x128xbf16> to vector<64x128xbf16>
    %cst_14 = arith.constant dense<0.000000e+00> : vector<64x128xf32>
    %32 = tpu.matmul %29, %31, %cst_14 {dimension_numbers = #tpu.dot_dimension_numbers<[1], [0], [0], [1], [0, 0, 1, 1], [], []>} : vector<64x64xbf16>, vector<64x128xbf16>, vector<64x128xf32> -> vector<64x128xf32>
    %33 = arith.addf %27, %32 : vector<64x128xf32>
    %34 = vector.extract_strided_slice %22 {offsets = [0, 0, 0], sizes = [8, 8, 64], strides = [1, 1, 1]} : vector<9x8x64xbf16> to vector<8x8x64xbf16>
    %35 = vector.shape_cast %34 : vector<8x8x64xbf16> to vector<64x64xbf16>
    %c1 = arith.constant 1 : index
    %c0_15 = arith.constant 0 : index
    %c0_16 = arith.constant 0 : index
    %36 = vector.load %arg4[%c1, %c0_15, %c0_16] : memref<9x64x128xbf16, #tpu.memory_space<vmem>>, vector<1x64x128xbf16>
    %37 = vector.shape_cast %36 : vector<1x64x128xbf16> to vector<64x128xbf16>
    %cst_17 = arith.constant dense<0.000000e+00> : vector<64x128xf32>
    %38 = tpu.matmul %35, %37, %cst_17 {dimension_numbers = #tpu.dot_dimension_numbers<[1], [0], [0], [1], [0, 0, 1, 1], [], []>} : vector<64x64xbf16>, vector<64x128xbf16>, vector<64x128xf32> -> vector<64x128xf32>
    %39 = arith.addf %33, %38 : vector<64x128xf32>
    %40 = vector.extract_strided_slice %26 {offsets = [0, 1, 0], sizes = [8, 8, 64], strides = [1, 1, 1]} : vector<9x9x64xbf16> to vector<8x8x64xbf16>
    %41 = vector.shape_cast %40 : vector<8x8x64xbf16> to vector<64x64xbf16>
    %c2 = arith.constant 2 : index
    %c0_18 = arith.constant 0 : index
    %c0_19 = arith.constant 0 : index
    %42 = vector.load %arg4[%c2, %c0_18, %c0_19] : memref<9x64x128xbf16, #tpu.memory_space<vmem>>, vector<1x64x128xbf16>
    %43 = vector.shape_cast %42 : vector<1x64x128xbf16> to vector<64x128xbf16>
    %cst_20 = arith.constant dense<0.000000e+00> : vector<64x128xf32>
    %44 = tpu.matmul %41, %43, %cst_20 {dimension_numbers = #tpu.dot_dimension_numbers<[1], [0], [0], [1], [0, 0, 1, 1], [], []>} : vector<64x64xbf16>, vector<64x128xbf16>, vector<64x128xf32> -> vector<64x128xf32>
    %45 = arith.addf %39, %44 : vector<64x128xf32>
    %46 = vector.extract_strided_slice %20 {offsets = [0, 0, 0], sizes = [8, 8, 64], strides = [1, 1, 1]} : vector<8x9x64xbf16> to vector<8x8x64xbf16>
    %47 = vector.shape_cast %46 : vector<8x8x64xbf16> to vector<64x64xbf16>
    %c3 = arith.constant 3 : index
    %c0_21 = arith.constant 0 : index
    %c0_22 = arith.constant 0 : index
    %48 = vector.load %arg4[%c3, %c0_21, %c0_22] : memref<9x64x128xbf16, #tpu.memory_space<vmem>>, vector<1x64x128xbf16>
    %49 = vector.shape_cast %48 : vector<1x64x128xbf16> to vector<64x128xbf16>
    %cst_23 = arith.constant dense<0.000000e+00> : vector<64x128xf32>
    %50 = tpu.matmul %47, %49, %cst_23 {dimension_numbers = #tpu.dot_dimension_numbers<[1], [0], [0], [1], [0, 0, 1, 1], [], []>} : vector<64x64xbf16>, vector<64x128xbf16>, vector<64x128xf32> -> vector<64x128xf32>
    %51 = arith.addf %45, %50 : vector<64x128xf32>
    %52 = vector.shape_cast %12 : vector<8x8x64xbf16> to vector<64x64xbf16>
    %c4 = arith.constant 4 : index
    %c0_24 = arith.constant 0 : index
    %c0_25 = arith.constant 0 : index
    %53 = vector.load %arg4[%c4, %c0_24, %c0_25] : memref<9x64x128xbf16, #tpu.memory_space<vmem>>, vector<1x64x128xbf16>
    %54 = vector.shape_cast %53 : vector<1x64x128xbf16> to vector<64x128xbf16>
    %cst_26 = arith.constant dense<0.000000e+00> : vector<64x128xf32>
    %55 = tpu.matmul %52, %54, %cst_26 {dimension_numbers = #tpu.dot_dimension_numbers<[1], [0], [0], [1], [0, 0, 1, 1], [], []>} : vector<64x64xbf16>, vector<64x128xbf16>, vector<64x128xf32> -> vector<64x128xf32>
    %56 = arith.addf %51, %55 : vector<64x128xf32>
    %57 = vector.extract_strided_slice %20 {offsets = [0, 1, 0], sizes = [8, 8, 64], strides = [1, 1, 1]} : vector<8x9x64xbf16> to vector<8x8x64xbf16>
    %58 = vector.shape_cast %57 : vector<8x8x64xbf16> to vector<64x64xbf16>
    %c5 = arith.constant 5 : index
    %c0_27 = arith.constant 0 : index
    %c0_28 = arith.constant 0 : index
    %59 = vector.load %arg4[%c5, %c0_27, %c0_28] : memref<9x64x128xbf16, #tpu.memory_space<vmem>>, vector<1x64x128xbf16>
    %60 = vector.shape_cast %59 : vector<1x64x128xbf16> to vector<64x128xbf16>
    %cst_29 = arith.constant dense<0.000000e+00> : vector<64x128xf32>
    %61 = tpu.matmul %58, %60, %cst_29 {dimension_numbers = #tpu.dot_dimension_numbers<[1], [0], [0], [1], [0, 0, 1, 1], [], []>} : vector<64x64xbf16>, vector<64x128xbf16>, vector<64x128xf32> -> vector<64x128xf32>
    %62 = arith.addf %56, %61 : vector<64x128xf32>
    %63 = vector.extract_strided_slice %26 {offsets = [1, 0, 0], sizes = [8, 8, 64], strides = [1, 1, 1]} : vector<9x9x64xbf16> to vector<8x8x64xbf16>
    %64 = vector.shape_cast %63 : vector<8x8x64xbf16> to vector<64x64xbf16>
    %c6 = arith.constant 6 : index
    %c0_30 = arith.constant 0 : index
    %c0_31 = arith.constant 0 : index
    %65 = vector.load %arg4[%c6, %c0_30, %c0_31] : memref<9x64x128xbf16, #tpu.memory_space<vmem>>, vector<1x64x128xbf16>
    %66 = vector.shape_cast %65 : vector<1x64x128xbf16> to vector<64x128xbf16>
    %cst_32 = arith.constant dense<0.000000e+00> : vector<64x128xf32>
    %67 = tpu.matmul %64, %66, %cst_32 {dimension_numbers = #tpu.dot_dimension_numbers<[1], [0], [0], [1], [0, 0, 1, 1], [], []>} : vector<64x64xbf16>, vector<64x128xbf16>, vector<64x128xf32> -> vector<64x128xf32>
    %68 = arith.addf %62, %67 : vector<64x128xf32>
    %69 = vector.extract_strided_slice %22 {offsets = [1, 0, 0], sizes = [8, 8, 64], strides = [1, 1, 1]} : vector<9x8x64xbf16> to vector<8x8x64xbf16>
    %70 = vector.shape_cast %69 : vector<8x8x64xbf16> to vector<64x64xbf16>
    %c7 = arith.constant 7 : index
    %c0_33 = arith.constant 0 : index
    %c0_34 = arith.constant 0 : index
    %71 = vector.load %arg4[%c7, %c0_33, %c0_34] : memref<9x64x128xbf16, #tpu.memory_space<vmem>>, vector<1x64x128xbf16>
    %72 = vector.shape_cast %71 : vector<1x64x128xbf16> to vector<64x128xbf16>
    %cst_35 = arith.constant dense<0.000000e+00> : vector<64x128xf32>
    %73 = tpu.matmul %70, %72, %cst_35 {dimension_numbers = #tpu.dot_dimension_numbers<[1], [0], [0], [1], [0, 0, 1, 1], [], []>} : vector<64x64xbf16>, vector<64x128xbf16>, vector<64x128xf32> -> vector<64x128xf32>
    %74 = arith.addf %68, %73 : vector<64x128xf32>
    %75 = vector.extract_strided_slice %26 {offsets = [1, 1, 0], sizes = [8, 8, 64], strides = [1, 1, 1]} : vector<9x9x64xbf16> to vector<8x8x64xbf16>
    %76 = vector.shape_cast %75 : vector<8x8x64xbf16> to vector<64x64xbf16>
    %c8 = arith.constant 8 : index
    %c0_36 = arith.constant 0 : index
    %c0_37 = arith.constant 0 : index
    %77 = vector.load %arg4[%c8, %c0_36, %c0_37] : memref<9x64x128xbf16, #tpu.memory_space<vmem>>, vector<1x64x128xbf16>
    %78 = vector.shape_cast %77 : vector<1x64x128xbf16> to vector<64x128xbf16>
    %cst_38 = arith.constant dense<0.000000e+00> : vector<64x128xf32>
    %79 = tpu.matmul %76, %78, %cst_38 {dimension_numbers = #tpu.dot_dimension_numbers<[1], [0], [0], [1], [0, 0, 1, 1], [], []>} : vector<64x64xbf16>, vector<64x128xbf16>, vector<64x128xf32> -> vector<64x128xf32>
    %80 = arith.addf %74, %79 : vector<64x128xf32>
    %cst_39 = arith.constant 0.000000e+00 : f32
    %81 = vector.broadcast %cst_39 : f32 to vector<64x128xf32>
    %82 = arith.cmpf oge, %80, %81 : vector<64x128xf32>
    %c1_40 = arith.constant 1 : index
    %83 = memref.load %arg1[%c1_40] : memref<2xf32, #tpu.memory_space<smem>>
    %84 = vector.broadcast %83 : f32 to vector<64x128xf32>
    %85 = arith.mulf %84, %80 : vector<64x128xf32>
    %86 = arith.select %82, %80, %85 : vector<64x128xi1>, vector<64x128xf32>
    %87 = arith.truncf %86 : vector<64x128xf32> to vector<64x128xbf16>
    %88 = vector.shape_cast %87 : vector<64x128xbf16> to vector<8x8x128xbf16>
    %cst_41 = arith.constant 0.000000e+00 : bf16
    %89 = vector.broadcast %cst_41 : bf16 to vector<1x8x128xbf16>
    %90 = tpu.concatenate %89, %88, %89 in 0 : vector<1x8x128xbf16>, vector<8x8x128xbf16>, vector<1x8x128xbf16> -> vector<10x8x128xbf16>
    %cst_42 = arith.constant 0.000000e+00 : bf16
    %91 = vector.broadcast %cst_42 : bf16 to vector<10x1x128xbf16>
    %92 = tpu.concatenate %91, %90, %91 in 1 : vector<10x1x128xbf16>, vector<10x8x128xbf16>, vector<10x1x128xbf16> -> vector<10x10x128xbf16>
    %cst_43 = arith.constant 0.000000e+00 : f32
    %93 = vector.broadcast %cst_43 : f32 to vector<64x256xf32>
    %94 = vector.extract_strided_slice %92 {offsets = [0, 0, 0], sizes = [8, 8, 128], strides = [1, 1, 1]} : vector<10x10x128xbf16> to vector<8x8x128xbf16>
    %95 = vector.shape_cast %94 : vector<8x8x128xbf16> to vector<64x128xbf16>
    %c0_44 = arith.constant 0 : index
    %c0_45 = arith.constant 0 : index
    %c0_46 = arith.constant 0 : index
    %96 = vector.load %arg5[%c0_44, %c0_45, %c0_46] : memref<9x128x256xbf16, #tpu.memory_space<vmem>>, vector<1x128x256xbf16>
    %97 = vector.shape_cast %96 : vector<1x128x256xbf16> to vector<128x256xbf16>
    %cst_47 = arith.constant dense<0.000000e+00> : vector<64x256xf32>
    %98 = tpu.matmul %95, %97, %cst_47 {dimension_numbers = #tpu.dot_dimension_numbers<[1], [0], [0], [1], [0, 0, 1, 1], [], []>} : vector<64x128xbf16>, vector<128x256xbf16>, vector<64x256xf32> -> vector<64x256xf32>
    %99 = arith.addf %93, %98 : vector<64x256xf32>
    %100 = vector.extract_strided_slice %92 {offsets = [0, 1, 0], sizes = [8, 8, 128], strides = [1, 1, 1]} : vector<10x10x128xbf16> to vector<8x8x128xbf16>
    %101 = vector.shape_cast %100 : vector<8x8x128xbf16> to vector<64x128xbf16>
    %c1_48 = arith.constant 1 : index
    %c0_49 = arith.constant 0 : index
    %c0_50 = arith.constant 0 : index
    %102 = vector.load %arg5[%c1_48, %c0_49, %c0_50] : memref<9x128x256xbf16, #tpu.memory_space<vmem>>, vector<1x128x256xbf16>
    %103 = vector.shape_cast %102 : vector<1x128x256xbf16> to vector<128x256xbf16>
    %cst_51 = arith.constant dense<0.000000e+00> : vector<64x256xf32>
    %104 = tpu.matmul %101, %103, %cst_51 {dimension_numbers = #tpu.dot_dimension_numbers<[1], [0], [0], [1], [0, 0, 1, 1], [], []>} : vector<64x128xbf16>, vector<128x256xbf16>, vector<64x256xf32> -> vector<64x256xf32>
    %105 = arith.addf %99, %104 : vector<64x256xf32>
    %106 = vector.extract_strided_slice %92 {offsets = [0, 2, 0], sizes = [8, 8, 128], strides = [1, 1, 1]} : vector<10x10x128xbf16> to vector<8x8x128xbf16>
    %107 = vector.shape_cast %106 : vector<8x8x128xbf16> to vector<64x128xbf16>
    %c2_52 = arith.constant 2 : index
    %c0_53 = arith.constant 0 : index
    %c0_54 = arith.constant 0 : index
    %108 = vector.load %arg5[%c2_52, %c0_53, %c0_54] : memref<9x128x256xbf16, #tpu.memory_space<vmem>>, vector<1x128x256xbf16>
    %109 = vector.shape_cast %108 : vector<1x128x256xbf16> to vector<128x256xbf16>
    %cst_55 = arith.constant dense<0.000000e+00> : vector<64x256xf32>
    %110 = tpu.matmul %107, %109, %cst_55 {dimension_numbers = #tpu.dot_dimension_numbers<[1], [0], [0], [1], [0, 0, 1, 1], [], []>} : vector<64x128xbf16>, vector<128x256xbf16>, vector<64x256xf32> -> vector<64x256xf32>
    %111 = arith.addf %105, %110 : vector<64x256xf32>
    %112 = vector.extract_strided_slice %92 {offsets = [1, 0, 0], sizes = [8, 8, 128], strides = [1, 1, 1]} : vector<10x10x128xbf16> to vector<8x8x128xbf16>
    %113 = vector.shape_cast %112 : vector<8x8x128xbf16> to vector<64x128xbf16>
    %c3_56 = arith.constant 3 : index
    %c0_57 = arith.constant 0 : index
    %c0_58 = arith.constant 0 : index
    %114 = vector.load %arg5[%c3_56, %c0_57, %c0_58] : memref<9x128x256xbf16, #tpu.memory_space<vmem>>, vector<1x128x256xbf16>
    %115 = vector.shape_cast %114 : vector<1x128x256xbf16> to vector<128x256xbf16>
    %cst_59 = arith.constant dense<0.000000e+00> : vector<64x256xf32>
    %116 = tpu.matmul %113, %115, %cst_59 {dimension_numbers = #tpu.dot_dimension_numbers<[1], [0], [0], [1], [0, 0, 1, 1], [], []>} : vector<64x128xbf16>, vector<128x256xbf16>, vector<64x256xf32> -> vector<64x256xf32>
    %117 = arith.addf %111, %116 : vector<64x256xf32>
    %118 = vector.extract_strided_slice %92 {offsets = [1, 1, 0], sizes = [8, 8, 128], strides = [1, 1, 1]} : vector<10x10x128xbf16> to vector<8x8x128xbf16>
    %119 = vector.shape_cast %118 : vector<8x8x128xbf16> to vector<64x128xbf16>
    %c4_60 = arith.constant 4 : index
    %c0_61 = arith.constant 0 : index
    %c0_62 = arith.constant 0 : index
    %120 = vector.load %arg5[%c4_60, %c0_61, %c0_62] : memref<9x128x256xbf16, #tpu.memory_space<vmem>>, vector<1x128x256xbf16>
    %121 = vector.shape_cast %120 : vector<1x128x256xbf16> to vector<128x256xbf16>
    %cst_63 = arith.constant dense<0.000000e+00> : vector<64x256xf32>
    %122 = tpu.matmul %119, %121, %cst_63 {dimension_numbers = #tpu.dot_dimension_numbers<[1], [0], [0], [1], [0, 0, 1, 1], [], []>} : vector<64x128xbf16>, vector<128x256xbf16>, vector<64x256xf32> -> vector<64x256xf32>
    %123 = arith.addf %117, %122 : vector<64x256xf32>
    %124 = vector.extract_strided_slice %92 {offsets = [1, 2, 0], sizes = [8, 8, 128], strides = [1, 1, 1]} : vector<10x10x128xbf16> to vector<8x8x128xbf16>
    %125 = vector.shape_cast %124 : vector<8x8x128xbf16> to vector<64x128xbf16>
    %c5_64 = arith.constant 5 : index
    %c0_65 = arith.constant 0 : index
    %c0_66 = arith.constant 0 : index
    %126 = vector.load %arg5[%c5_64, %c0_65, %c0_66] : memref<9x128x256xbf16, #tpu.memory_space<vmem>>, vector<1x128x256xbf16>
    %127 = vector.shape_cast %126 : vector<1x128x256xbf16> to vector<128x256xbf16>
    %cst_67 = arith.constant dense<0.000000e+00> : vector<64x256xf32>
    %128 = tpu.matmul %125, %127, %cst_67 {dimension_numbers = #tpu.dot_dimension_numbers<[1], [0], [0], [1], [0, 0, 1, 1], [], []>} : vector<64x128xbf16>, vector<128x256xbf16>, vector<64x256xf32> -> vector<64x256xf32>
    %129 = arith.addf %123, %128 : vector<64x256xf32>
    %130 = vector.extract_strided_slice %92 {offsets = [2, 0, 0], sizes = [8, 8, 128], strides = [1, 1, 1]} : vector<10x10x128xbf16> to vector<8x8x128xbf16>
    %131 = vector.shape_cast %130 : vector<8x8x128xbf16> to vector<64x128xbf16>
    %c6_68 = arith.constant 6 : index
    %c0_69 = arith.constant 0 : index
    %c0_70 = arith.constant 0 : index
    %132 = vector.load %arg5[%c6_68, %c0_69, %c0_70] : memref<9x128x256xbf16, #tpu.memory_space<vmem>>, vector<1x128x256xbf16>
    %133 = vector.shape_cast %132 : vector<1x128x256xbf16> to vector<128x256xbf16>
    %cst_71 = arith.constant dense<0.000000e+00> : vector<64x256xf32>
    %134 = tpu.matmul %131, %133, %cst_71 {dimension_numbers = #tpu.dot_dimension_numbers<[1], [0], [0], [1], [0, 0, 1, 1], [], []>} : vector<64x128xbf16>, vector<128x256xbf16>, vector<64x256xf32> -> vector<64x256xf32>
    %135 = arith.addf %129, %134 : vector<64x256xf32>
    %136 = vector.extract_strided_slice %92 {offsets = [2, 1, 0], sizes = [8, 8, 128], strides = [1, 1, 1]} : vector<10x10x128xbf16> to vector<8x8x128xbf16>
    %137 = vector.shape_cast %136 : vector<8x8x128xbf16> to vector<64x128xbf16>
    %c7_72 = arith.constant 7 : index
    %c0_73 = arith.constant 0 : index
    %c0_74 = arith.constant 0 : index
    %138 = vector.load %arg5[%c7_72, %c0_73, %c0_74] : memref<9x128x256xbf16, #tpu.memory_space<vmem>>, vector<1x128x256xbf16>
    %139 = vector.shape_cast %138 : vector<1x128x256xbf16> to vector<128x256xbf16>
    %cst_75 = arith.constant dense<0.000000e+00> : vector<64x256xf32>
    %140 = tpu.matmul %137, %139, %cst_75 {dimension_numbers = #tpu.dot_dimension_numbers<[1], [0], [0], [1], [0, 0, 1, 1], [], []>} : vector<64x128xbf16>, vector<128x256xbf16>, vector<64x256xf32> -> vector<64x256xf32>
    %141 = arith.addf %135, %140 : vector<64x256xf32>
    %142 = vector.extract_strided_slice %92 {offsets = [2, 2, 0], sizes = [8, 8, 128], strides = [1, 1, 1]} : vector<10x10x128xbf16> to vector<8x8x128xbf16>
    %143 = vector.shape_cast %142 : vector<8x8x128xbf16> to vector<64x128xbf16>
    %c8_76 = arith.constant 8 : index
    %c0_77 = arith.constant 0 : index
    %c0_78 = arith.constant 0 : index
    %144 = vector.load %arg5[%c8_76, %c0_77, %c0_78] : memref<9x128x256xbf16, #tpu.memory_space<vmem>>, vector<1x128x256xbf16>
    %145 = vector.shape_cast %144 : vector<1x128x256xbf16> to vector<128x256xbf16>
    %cst_79 = arith.constant dense<0.000000e+00> : vector<64x256xf32>
    %146 = tpu.matmul %143, %145, %cst_79 {dimension_numbers = #tpu.dot_dimension_numbers<[1], [0], [0], [1], [0, 0, 1, 1], [], []>} : vector<64x128xbf16>, vector<128x256xbf16>, vector<64x256xf32> -> vector<64x256xf32>
    %147 = arith.addf %141, %146 : vector<64x256xf32>
    %cst_80 = arith.constant dense<0.000000e+00> : vector<256xf32>
    %148 = vector.multi_reduction <add>, %147, %cst_80 [0] : vector<64x256xf32> to vector<256xf32>
    %149 = vector.shape_cast %148 : vector<256xf32> to vector<1x256xf32>
    %cst_81 = arith.constant 6.400000e+01 : f32
    %150 = vector.broadcast %cst_81 : f32 to vector<1x256xf32>
    %151 = arith.divf %149, %150 : vector<1x256xf32>
    %cst_82 = arith.constant dense<0xFF800000> : vector<256xf32>
    %152 = vector.multi_reduction <maximumf>, %147, %cst_82 [0] : vector<64x256xf32> to vector<256xf32>
    %153 = vector.shape_cast %152 : vector<256xf32> to vector<1x256xf32>
    %154 = tpu.concatenate %151, %153 in 0 : vector<1x256xf32>, vector<1x256xf32> -> vector<2x256xf32>
    %c0_83 = arith.constant 0 : index
    %c0_84 = arith.constant 0 : index
    %155 = vector.load %arg6[%c0_83, %c0_84] : memref<256x16xf32, #tpu.memory_space<vmem>>, vector<256x16xf32>
    %cst_85 = arith.constant dense<0.000000e+00> : vector<2x16xf32>
    %156 = tpu.matmul %154, %155, %cst_85 {dimension_numbers = #tpu.dot_dimension_numbers<[1], [0], [0], [1], [0, 0, 1, 1], [], []>} : vector<2x256xf32>, vector<256x16xf32>, vector<2x16xf32> -> vector<2x16xf32>
    %c0_86 = arith.constant 0 : index
    %c0_87 = arith.constant 0 : index
    %157 = vector.load %arg7[%c0_86, %c0_87] : memref<1x16xf32, #tpu.memory_space<vmem>>, vector<1x16xf32>
    %158 = vector.broadcast %157 : vector<1x16xf32> to vector<2x16xf32>
    %159 = arith.addf %156, %158 : vector<2x16xf32>
    %cst_88 = arith.constant 0.000000e+00 : f32
    %160 = vector.broadcast %cst_88 : f32 to vector<2x16xf32>
    %161 = arith.maximumf %159, %160 : vector<2x16xf32>
    %c0_89 = arith.constant 0 : index
    %c0_90 = arith.constant 0 : index
    %162 = vector.load %arg8[%c0_89, %c0_90] : memref<16x256xf32, #tpu.memory_space<vmem>>, vector<16x256xf32>
    %cst_91 = arith.constant dense<0.000000e+00> : vector<2x256xf32>
    %163 = tpu.matmul %161, %162, %cst_91 {dimension_numbers = #tpu.dot_dimension_numbers<[1], [0], [0], [1], [0, 0, 1, 1], [], []>} : vector<2x16xf32>, vector<16x256xf32>, vector<2x256xf32> -> vector<2x256xf32>
    %c0_92 = arith.constant 0 : index
    %c0_93 = arith.constant 0 : index
    %164 = vector.load %arg9[%c0_92, %c0_93] : memref<1x256xf32, #tpu.memory_space<vmem>>, vector<1x256xf32>
    %165 = vector.broadcast %164 : vector<1x256xf32> to vector<2x256xf32>
    %166 = arith.addf %163, %165 : vector<2x256xf32>
    %167 = vector.extract_strided_slice %166 {offsets = [0, 0], sizes = [1, 256], strides = [1, 1]} : vector<2x256xf32> to vector<1x256xf32>
    %168 = vector.extract_strided_slice %166 {offsets = [1, 0], sizes = [1, 256], strides = [1, 1]} : vector<2x256xf32> to vector<1x256xf32>
    %169 = arith.addf %167, %168 : vector<1x256xf32>
    %170 = arith.negf %169 : vector<1x256xf32>
    %171 = math.exp %170 : vector<1x256xf32>
    %cst_94 = arith.constant 1.000000e+00 : f32
    %172 = vector.broadcast %cst_94 : f32 to vector<1x256xf32>
    %173 = arith.addf %172, %171 : vector<1x256xf32>
    %174 = arith.divf %172, %173 : vector<1x256xf32>
    %175 = vector.broadcast %174 : vector<1x256xf32> to vector<64x256xf32>
    %176 = arith.mulf %147, %175 : vector<64x256xf32>
    %177 = vector.shape_cast %176 : vector<64x256xf32> to vector<8x8x256xf32>
    %c0_95 = arith.constant 0 : index
    %c0_96 = arith.constant 0 : index
    %c0_97 = arith.constant 0 : index
    %c0_98 = arith.constant 0 : index
    %178 = vector.load %arg10[%c0_95, %c0_96, %c0_97, %c0_98] : memref<1x8x8x256xf32, #tpu.memory_space<vmem>>, vector<1x8x8x256xf32>
    %179 = vector.shape_cast %178 : vector<1x8x8x256xf32> to vector<8x8x256xf32>
    %180 = vector.shape_cast %177 : vector<8x8x256xf32> to vector<1x8x8x256xf32>
    tpu.vector_store %arg10[%c0_95, %c0_96, %c0_97, %c0_98], %180 {strides = array<i32>} : memref<1x8x8x256xf32, #tpu.memory_space<vmem>>, vector<1x8x8x256xf32>,
    return
  }
  func.func @transform_0(%arg0: i32) -> i32 {
    %c0_i32 = arith.constant 0 : i32
    %c0_i32_0 = arith.constant 0 : i32
    return %c0_i32 : i32
  }
  func.func @transform_1(%arg0: i32) -> (i32, i32, i32) {
    %c0_i32 = arith.constant 0 : i32
    %c0_i32_0 = arith.constant 0 : i32
    %c0_i32_1 = arith.constant 0 : i32
    return %arg0, %c0_i32, %c0_i32_0 : i32, i32, i32
  }
  func.func @transform_2(%arg0: i32) -> (i32, i32) {
    %c0_i32 = arith.constant 0 : i32
    %c0_i32_0 = arith.constant 0 : i32
    %c0_i32_1 = arith.constant 0 : i32
    return %c0_i32, %c0_i32_0 : i32, i32
  }
  func.func @transform_3(%arg0: i32) -> (i32, i32, i32) {
    %c0_i32 = arith.constant 0 : i32
    %c0_i32_0 = arith.constant 0 : i32
    %c0_i32_1 = arith.constant 0 : i32
    %c0_i32_2 = arith.constant 0 : i32
    return %c0_i32, %c0_i32_0, %c0_i32_1 : i32, i32, i32
  }
  func.func @transform_4(%arg0: i32) -> (i32, i32, i32) {
    %c0_i32 = arith.constant 0 : i32
    %c0_i32_0 = arith.constant 0 : i32
    %c0_i32_1 = arith.constant 0 : i32
    %c0_i32_2 = arith.constant 0 : i32
    return %c0_i32, %c0_i32_0, %c0_i32_1 : i32, i32, i32
  }
  func.func @transform_5(%arg0: i32) -> (i32, i32) {
    %c0_i32 = arith.constant 0 : i32
    %c0_i32_0 = arith.constant 0 : i32
    %c0_i32_1 = arith.constant 0 : i32
    return %c0_i32, %c0_i32_0 : i32, i32
  }
  func.func @transform_6(%arg0: i32) -> (i32, i32) {
    %c0_i32 = arith.constant 0 : i32
    %c0_i32_0 = arith.constant 0 : i32
    %c0_i32_1 = arith.constant 0 : i32
    return %c0_i32, %c0_i32_0 : i32, i32
  }
  func.func @transform_7(%arg0: i32) -> (i32, i32) {
    %c0_i32 = arith.constant 0 : i32
    %c0_i32_0 = arith.constant 0 : i32
    %c0_i32_1 = arith.constant 0 : i32
    return %c0_i32, %c0_i32_0 : i32, i32
  }
  func.func @transform_8(%arg0: i32) -> (i32, i32) {
    %c0_i32 = arith.constant 0 : i32
    %c0_i32_0 = arith.constant 0 : i32
    %c0_i32_1 = arith.constant 0 : i32
    return %c0_i32, %c0_i32_0 : i32, i32
  }
  func.func @transform_9(%arg0: i32) -> (i32, i32, i32, i32) {
    %c0_i32 = arith.constant 0 : i32
    %c0_i32_0 = arith.constant 0 : i32
    %c0_i32_1 = arith.constant 0 : i32
    %c0_i32_2 = arith.constant 0 : i32
    return %arg0, %c0_i32, %c0_i32_0, %c0_i32_1 : i32, i32, i32, i32
  }
}

</mosaic_0001>

<llo_original>
// kernel: grid_dense_channel_ext.1
$region0: #{grid_dense_channel_ext.1}
  #allocation0 [shape = 'u32[]', space=smem, size = 0x4, offset = 0x4, fixed_abs, tag = 'smem constant byte address 0x4 - core index']
  #allocation1 [shape = 'u32[144,128]{1,0:T(1,128)}', space=vmem, size = 0x12000, scoped, tag = 'internal scratch']
  %s0 = inlined_call_operand.vmem [shape: f32[2], index: 0, kind: input, shape index: {}]
  %s1 = inlined_call_operand.vmem [shape: bf16[2,256,36], index: 1, kind: input, shape index: {}]
  %s2 = inlined_call_operand.vmem [shape: bf16[36,64], index: 2, kind: input, shape index: {}]
  %s3 = inlined_call_operand.vmem [shape: bf16[9,64,128], index: 3, kind: input, shape index: {}]
  %s4 = inlined_call_operand.vmem [shape: bf16[9,128,256], index: 4, kind: input, shape index: {}]
  %s5 = inlined_call_operand.vmem [shape: f32[256,16], index: 5, kind: input, shape index: {}]
  %s6 = inlined_call_operand.vmem [shape: f32[1,16], index: 6, kind: input, shape index: {}]
  %s7 = inlined_call_operand.vmem [shape: f32[16,256], index: 7, kind: input, shape index: {}]
  %s8 = inlined_call_operand.vmem [shape: f32[1,256], index: 8, kind: input, shape index: {}]
  %s9 = inlined_call_operand.hbm [shape: f32[2,8,8,256], index: 9, kind: output, shape index: {}]
  %s10 = sld [smem:[#allocation0]]
  $region73: #{grid_dense_channel_ext.1} parent=0
    _
  %s12 = ssub.s32 1, %s10
  %s13 = scalar_select 0, %s12, %s10
  $region1: #{grid_dense_channel_ext.1} parent=0
    #allocation2 [shape = 'u8[512]{0}', space=smem, size = 0x200, scoped, tag = 'input window, operand 0, single buffered']
    #allocation3 [shape = 's32[2]{0}', space=sflag, size = 0x8, scoped, tag = 'scoped memory for grid_dense_channel_ext.1']
    #allocation4 [shape = 's32[2]{0}', space=sflag, size = 0x8, scoped, tag = 'scoped memory for grid_dense_channel_ext.1']
    #allocation5 [shape = 'u8[131072]{0}', space=vmem, size = 0x20000, scoped, tag = 'output window, operand 0']
    %14 = vsyncpa [#allocation4], 0
    %15 = vsyncpa [#allocation3], 0
    %s16 = scalar_lea.sflag [#allocation3], 1
    %17 = vsyncpa %s16, 0
    loop: start=0, step=1, limit=4
    $region2: #{grid_dense_channel_ext.1} parent=1 // loop_pre_header
      _
    $region3: #{grid_dense_channel_ext.1} parent=1 // loop_header
      %s19 = sphi 0, %s23
      %p20 = scmp.ge.s32.totalorder %s19, 4
      %s27 = sphi 0, %s27
      %s29 = sphi 0, %s27
      %s30 = sphi 0, %s29
      %s44 = sphi 0, %s30
      %s50 = sphi 0, %s52
      %s53 = sphi 0, %s50
      %s54 = sphi 0, %s53
      %s70 = sphi 0, %s54
      %s74 = sphi 0, %s74
      %s76 = sphi 0, %s74
      %s77 = sphi 0, %s76
      %s91 = sphi 0, %s77
      %s95 = sphi 0, %s95
      %s97 = sphi 0, %s95
      %s98 = sphi 0, %s97
      %s112 = sphi 0, %s98
      %s116 = sphi 0, %s116
      %s118 = sphi 0, %s116
      %s119 = sphi 0, %s118
      %s133 = sphi 0, %s119
      %s137 = sphi 0, %s137
      %s139 = sphi 0, %s137
      %s140 = sphi 0, %s139
      %s154 = sphi 0, %s140
      %s158 = sphi 0, %s158
      %s160 = sphi 0, %s158
      %s161 = sphi 0, %s160
      %s175 = sphi 0, %s161
      %s179 = sphi 0, %s179
      %s181 = sphi 0, %s179
      %s182 = sphi 0, %s181
      %s196 = sphi 0, %s182
      %s200 = sphi 0, %s200
      %s202 = sphi 0, %s200
      %s203 = sphi 0, %s202
      %s217 = sphi 0, %s203
      %s223 = sphi 0, %s225
      %s226 = sphi 0, %s223
      %s227 = sphi 0, %s226
      %s243 = sphi 0, %s227
    $region4: #{grid_dense_channel_ext.1} parent=1 // loop_header_branch
      %22 = sbr.rel (%p20) target = $region8
    $region5: #{grid_dense_channel_ext.1} parent=1 // loop_body
      %s24 = ssub.s32 %s19, 1
      %s25 = ssub.s32 %s19, 2
      %s26 = sadd.s32 %s19, 1
      %s28 = sadd.s32 %s27, 1
      %p31 = scmp.eq.s32.totalorder %s19, 1
      %p32 = scmp.ne.s32.totalorder %s27, %s29
      %p33 = scmp.eq.s32.totalorder %s19, 0
      %p34 = por %p32, %p33
      %p35 = scmp.ne.s32.totalorder %s27, %s29
      %p36 = scmp.eq.s32.totalorder %s24, 1
      %p37 = por %p35, %p36
      %p38 = scmp.ne.s32.totalorder %s29, %s30
      %p39 = scmp.eq.s32.totalorder %s24, 0
      %p40 = por %p38, %p39
      %p41 = scmp.ne.s32.totalorder %s29, %s30
      %p42 = scmp.eq.s32.totalorder %s25, 1
      %p43 = por %p41, %p42
      %p45 = scmp.ne.s32.totalorder %s30, %s44
      %p46 = scmp.eq.s32.totalorder %s25, 0
      %p47 = por %p45, %p46
      %s48 = ssub.s32 %s19, %s26
      %p49 = scmp.eq.s32.totalorder %s48, 0
      %s51 = sadd.s32 %s50, 1
      %s52 = scalar_select %p49, %s50, %s51
      %p55 = pneg %p49
      %p56 = scmp.eq.s32.totalorder %s19, 1
      %p57 = por %p55, %p56
      %p58 = scmp.ne.s32.totalorder %s50, %s53
      %p59 = scmp.eq.s32.totalorder %s19, 0
      %p60 = por %p58, %p59
      %p61 = scmp.ne.s32.totalorder %s50, %s53
      %p62 = scmp.eq.s32.totalorder %s24, 1
      %p63 = por %p61, %p62
      %p64 = scmp.ne.s32.totalorder %s53, %s54
      %p65 = scmp.eq.s32.totalorder %s24, 0
      %p66 = por %p64, %p65
      %p67 = scmp.ne.s32.totalorder %s53, %s54
      %p68 = scmp.eq.s32.totalorder %s25, 1
      %p69 = por %p67, %p68
      %p71 = scmp.ne.s32.totalorder %s54, %s70
      %p72 = scmp.eq.s32.totalorder %s25, 0
      %p73 = por %p71, %p72
      %s75 = sadd.s32 %s74, 1
      %p78 = scmp.eq.s32.totalorder %s19, 1
      %p79 = scmp.ne.s32.totalorder %s74, %s76
      %p80 = scmp.eq.s32.totalorder %s19, 0
      %p81 = por %p79, %p80
      %p82 = scmp.ne.s32.totalorder %s74, %s76
      %p83 = scmp.eq.s32.totalorder %s24, 1
      %p84 = por %p82, %p83
      %p85 = scmp.ne.s32.totalorder %s76, %s77
      %p86 = scmp.eq.s32.totalorder %s24, 0
      %p87 = por %p85, %p86
      %p88 = scmp.ne.s32.totalorder %s76, %s77
      %p89 = scmp.eq.s32.totalorder %s25, 1
      %p90 = por %p88, %p89
      %p92 = scmp.ne.s32.totalorder %s77, %s91
      %p93 = scmp.eq.s32.totalorder %s25, 0
      %p94 = por %p92, %p93
      %s96 = sadd.s32 %s95, 1
      %p99 = scmp.eq.s32.totalorder %s19, 1
      %p100 = scmp.ne.s32.totalorder %s95, %s97
      %p101 = scmp.eq.s32.totalorder %s19, 0
      %p102 = por %p100, %p101
      %p103 = scmp.ne.s32.totalorder %s95, %s97
      %p104 = scmp.eq.s32.totalorder %s24, 1
      %p105 = por %p103, %p104
      %p106 = scmp.ne.s32.totalorder %s97, %s98
      %p107 = scmp.eq.s32.totalorder %s24, 0
      %p108 = por %p106, %p107
      %p109 = scmp.ne.s32.totalorder %s97, %s98
      %p110 = scmp.eq.s32.totalorder %s25, 1
      %p111 = por %p109, %p110
      %p113 = scmp.ne.s32.totalorder %s98, %s112
      %p114 = scmp.eq.s32.totalorder %s25, 0
      %p115 = por %p113, %p114
      %s117 = sadd.s32 %s116, 1
      %p120 = scmp.eq.s32.totalorder %s19, 1
      %p121 = scmp.ne.s32.totalorder %s116, %s118
      %p122 = scmp.eq.s32.totalorder %s19, 0
      %p123 = por %p121, %p122
      %p124 = scmp.ne.s32.totalorder %s116, %s118
      %p125 = scmp.eq.s32.totalorder %s24, 1
      %p126 = por %p124, %p125
      %p127 = scmp.ne.s32.totalorder %s118, %s119
      %p128 = scmp.eq.s32.totalorder %s24, 0
      %p129 = por %p127, %p128
      %p130 = scmp.ne.s32.totalorder %s118, %s119
      %p131 = scmp.eq.s32.totalorder %s25, 1
      %p132 = por %p130, %p131
      %p134 = scmp.ne.s32.totalorder %s119, %s133
      %p135 = scmp.eq.s32.totalorder %s25, 0
      %p136 = por %p134, %p135
      %s138 = sadd.s32 %s137, 1
      %p141 = scmp.eq.s32.totalorder %s19, 1
      %p142 = scmp.ne.s32.totalorder %s137, %s139
      %p143 = scmp.eq.s32.totalorder %s19, 0
      %p144 = por %p142, %p143
      %p145 = scmp.ne.s32.totalorder %s137, %s139
      %p146 = scmp.eq.s32.totalorder %s24, 1
      %p147 = por %p145, %p146
      %p148 = scmp.ne.s32.totalorder %s139, %s140
      %p149 = scmp.eq.s32.totalorder %s24, 0
      %p150 = por %p148, %p149
      %p151 = scmp.ne.s32.totalorder %s139, %s140
      %p152 = scmp.eq.s32.totalorder %s25, 1
      %p153 = por %p151, %p152
      %p155 = scmp.ne.s32.totalorder %s140, %s154
      %p156 = scmp.eq.s32.totalorder %s25, 0
      %p157 = por %p155, %p156
      %s159 = sadd.s32 %s158, 1
      %p162 = scmp.eq.s32.totalorder %s19, 1
      %p163 = scmp.ne.s32.totalorder %s158, %s160
      %p164 = scmp.eq.s32.totalorder %s19, 0
      %p165 = por %p163, %p164
      %p166 = scmp.ne.s32.totalorder %s158, %s160
      %p167 = scmp.eq.s32.totalorder %s24, 1
      %p168 = por %p166, %p167
      %p169 = scmp.ne.s32.totalorder %s160, %s161
      %p170 = scmp.eq.s32.totalorder %s24, 0
      %p171 = por %p169, %p170
      %p172 = scmp.ne.s32.totalorder %s160, %s161
      %p173 = scmp.eq.s32.totalorder %s25, 1
      %p174 = por %p172, %p173
      %p176 = scmp.ne.s32.totalorder %s161, %s175
      %p177 = scmp.eq.s32.totalorder %s25, 0
      %p178 = por %p176, %p177
      %s180 = sadd.s32 %s179, 1
      %p183 = scmp.eq.s32.totalorder %s19, 1
      %p184 = scmp.ne.s32.totalorder %s179, %s181
      %p185 = scmp.eq.s32.totalorder %s19, 0
      %p186 = por %p184, %p185
      %p187 = scmp.ne.s32.totalorder %s179, %s181
      %p188 = scmp.eq.s32.totalorder %s24, 1
      %p189 = por %p187, %p188
      %p190 = scmp.ne.s32.totalorder %s181, %s182
      %p191 = scmp.eq.s32.totalorder %s24, 0
      %p192 = por %p190, %p191
      %p193 = scmp.ne.s32.totalorder %s181, %s182
      %p194 = scmp.eq.s32.totalorder %s25, 1
      %p195 = por %p193, %p194
      %p197 = scmp.ne.s32.totalorder %s182, %s196
      %p198 = scmp.eq.s32.totalorder %s25, 0
      %p199 = por %p197, %p198
      %s201 = sadd.s32 %s200, 1
      %p204 = scmp.eq.s32.totalorder %s19, 1
      %p205 = scmp.ne.s32.totalorder %s200, %s202
      %p206 = scmp.eq.s32.totalorder %s19, 0
      %p207 = por %p205, %p206
      %p208 = scmp.ne.s32.totalorder %s200, %s202
      %p209 = scmp.eq.s32.totalorder %s24, 1
      %p210 = por %p208, %p209
      %p211 = scmp.ne.s32.totalorder %s202, %s203
      %p212 = scmp.eq.s32.totalorder %s24, 0
      %p213 = por %p211, %p212
      %p214 = scmp.ne.s32.totalorder %s202, %s203
      %p215 = scmp.eq.s32.totalorder %s25, 1
      %p216 = por %p214, %p215
      %p218 = scmp.ne.s32.totalorder %s203, %s217
      %p219 = scmp.eq.s32.totalorder %s25, 0
      %p220 = por %p218, %p219
      %s221 = ssub.s32 %s19, %s26
      %p222 = scmp.eq.s32.totalorder %s221, 0
      %s224 = sadd.s32 %s223, 1
      %s225 = scalar_select %p222, %s223, %s224
      %p228 = pneg %p222
      %p229 = scmp.eq.s32.totalorder %s19, 1
      %p230 = por %p228, %p229
      %p231 = scmp.ne.s32.totalorder %s223, %s226
      %p232 = scmp.eq.s32.totalorder %s19, 0
      %p233 = por %p231, %p232
      %p234 = scmp.ne.s32.totalorder %s223, %s226
      %p235 = scmp.eq.s32.totalorder %s24, 1
      %p236 = por %p234, %p235
      %p237 = scmp.ne.s32.totalorder %s226, %s227
      %p238 = scmp.eq.s32.totalorder %s24, 0
      %p239 = por %p237, %p238
      %p240 = scmp.ne.s32.totalorder %s226, %s227
      %p241 = scmp.eq.s32.totalorder %s25, 1
      %p242 = por %p240, %p241
      %p244 = scmp.ne.s32.totalorder %s227, %s243
      %p245 = scmp.eq.s32.totalorder %s25, 0
      %p246 = por %p244, %p245
      %p247 = scmp.le.s32.totalorder 1, %s19
      %p248 = scmp.lt.s32.totalorder %s19, 3
      %p249 = pnand %p247, %p248
      %p250 = pneg %p249
      // Predicated region
      $region9: #{grid_dense_channel_ext.1} parent=5 // pred_check
        _
      $region10: #{grid_dense_channel_ext.1} parent=5 // pred_check_branch
        %252 = sbr.rel (%p249) target = $region12
      $region11: #{grid_dense_channel_ext.1} parent=5 // pred_region
        %s253 = ssub.s32 %s19, 1
        // Predicated region
        $region13: #{grid_dense_channel_ext.1} parent=11 // pred_check
          %p254 = pneg %p40
        $region14: #{grid_dense_channel_ext.1} parent=11 // pred_check_branch
          %256 = sbr.rel (%p254) target = $region16
        $region15: #{grid_dense_channel_ext.1} parent=11 // pred_region
          %s258 = ssub.s32 16, 16
          %259 = vsyncadd [#allocation4], %s258
          %s261 = sshll.u32 %s0, 4
          %s262 = int_to_ptr.vmem [resolvable:$true] %s261
          %264 = dma.vmem_to_smem %s262, 16, [#allocation2], [#allocation4]
        $region16: #{grid_dense_channel_ext.1} parent=11 // pred_fallthru
          _
        // Predicated region
        $region17: #{grid_dense_channel_ext.1} parent=11 // pred_check
          %p265 = pneg %p87
        $region18: #{grid_dense_channel_ext.1} parent=11 // pred_check_branch
          %267 = sbr.rel (%p265) target = $region20
        $region19: #{grid_dense_channel_ext.1} parent=11 // pred_region
          _
        $region20: #{grid_dense_channel_ext.1} parent=11 // pred_fallthru
          _
        // Predicated region
        $region21: #{grid_dense_channel_ext.1} parent=11 // pred_check
          %p268 = pneg %p108
        $region22: #{grid_dense_channel_ext.1} parent=11 // pred_check_branch
          %270 = sbr.rel (%p268) target = $region24
        $region23: #{grid_dense_channel_ext.1} parent=11 // pred_region
          _
        $region24: #{grid_dense_channel_ext.1} parent=11 // pred_fallthru
          _
        // Predicated region
        $region25: #{grid_dense_channel_ext.1} parent=11 // pred_check
          %p271 = pneg %p129
        $region26: #{grid_dense_channel_ext.1} parent=11 // pred_check_branch
          %273 = sbr.rel (%p271) target = $region28
        $region27: #{grid_dense_channel_ext.1} parent=11 // pred_region
          _
        $region28: #{grid_dense_channel_ext.1} parent=11 // pred_fallthru
          _
        // Predicated region
        $region29: #{grid_dense_channel_ext.1} parent=11 // pred_check
          %p274 = pneg %p150
        $region30: #{grid_dense_channel_ext.1} parent=11 // pred_check_branch
          %276 = sbr.rel (%p274) target = $region32
        $region31: #{grid_dense_channel_ext.1} parent=11 // pred_region
          _
        $region32: #{grid_dense_channel_ext.1} parent=11 // pred_fallthru
          _
        // Predicated region
        $region33: #{grid_dense_channel_ext.1} parent=11 // pred_check
          %p277 = pneg %p171
        $region34: #{grid_dense_channel_ext.1} parent=11 // pred_check_branch
          %279 = sbr.rel (%p277) target = $region36
        $region35: #{grid_dense_channel_ext.1} parent=11 // pred_region
          _
        $region36: #{grid_dense_channel_ext.1} parent=11 // pred_fallthru
          _
        // Predicated region
        $region37: #{grid_dense_channel_ext.1} parent=11 // pred_check
          %p280 = pneg %p192
        $region38: #{grid_dense_channel_ext.1} parent=11 // pred_check_branch
          %282 = sbr.rel (%p280) target = $region40
        $region39: #{grid_dense_channel_ext.1} parent=11 // pred_region
          _
        $region40: #{grid_dense_channel_ext.1} parent=11 // pred_fallthru
          _
        // Predicated region
        $region41: #{grid_dense_channel_ext.1} parent=11 // pred_check
          %p283 = pneg %p213
        $region42: #{grid_dense_channel_ext.1} parent=11 // pred_check_branch
          %285 = sbr.rel (%p283) target = $region44
        $region43: #{grid_dense_channel_ext.1} parent=11 // pred_region
          _
        $region44: #{grid_dense_channel_ext.1} parent=11 // pred_fallthru
          _
      $region12: #{grid_dense_channel_ext.1} parent=5 // pred_fallthru
        _
      %p286 = scmp.lt.s32.totalorder %s19, 2
      // Predicated region
      $region45: #{grid_dense_channel_ext.1} parent=5 // pred_check
        %p287 = pneg %p286
      $region46: #{grid_dense_channel_ext.1} parent=5 // pred_check_branch
        %289 = sbr.rel (%p287) target = $region48
      $region47: #{grid_dense_channel_ext.1} parent=5 // pred_region
        // Predicated region
        $region49: #{grid_dense_channel_ext.1} parent=47 // pred_check
          %p290 = pneg %p60
        $region50: #{grid_dense_channel_ext.1} parent=47 // pred_check_branch
          %292 = sbr.rel (%p290) target = $region52
        $region51: #{grid_dense_channel_ext.1} parent=47 // pred_region
          %p293 = scmp.lt.s32.totalorder %s19, 1
          %s294 = scalar_select %p293, %s19, 1
          %s295 = smul.addr %s294, 32
          %s296 = smul.addr %s295, 4
          %s297 = scalar_lea.vmem %s1, %s296
        $region52: #{grid_dense_channel_ext.1} parent=47 // pred_fallthru
          _
      $region48: #{grid_dense_channel_ext.1} parent=5 // pred_fallthru
        _
      %p298 = scmp.le.s32.totalorder 1, %s19
      %p299 = scmp.lt.s32.totalorder %s19, 3
      %p300 = pnand %p298, %p299
      %p301 = pneg %p300
      // Predicated region
      $region53: #{grid_dense_channel_ext.1} parent=5 // pred_check
        _
      $region54: #{grid_dense_channel_ext.1} parent=5 // pred_check_branch
        %303 = sbr.rel (%p300) target = $region56
      $region55: #{grid_dense_channel_ext.1} parent=5 // pred_region
        %s304 = ssub.s32 %s19, 1
        // Predicated region
        $region57: #{grid_dense_channel_ext.1} parent=55 // pred_check
          %p305 = pneg %p40
        $region58: #{grid_dense_channel_ext.1} parent=55 // pred_check_branch
          %307 = sbr.rel (%p305) target = $region60
        $region59: #{grid_dense_channel_ext.1} parent=55 // pred_region
          %308 = dma.done [#allocation4], 16
        $region60: #{grid_dense_channel_ext.1} parent=55 // pred_fallthru
          _
        %309 = sfence
        %p310 = pneg %p40
        %p311 = pneg %p37
        %p312 = scmp.lt.s32.totalorder %s24, 1
        %s313 = scalar_select %p312, %s24, 1
        %s314 = smul.addr %s313, 32
        %s315 = smul.addr %s314, 4
        %s316 = scalar_lea.vmem %s1, %s315
        %p317 = pneg %p66
        %p318 = pneg %p63
        %p319 = pneg %p87
        %p320 = pneg %p84
        %p321 = pneg %p108
        %p322 = pneg %p105
        %p323 = pneg %p129
        %p324 = pneg %p126
        %p325 = pneg %p150
        %p326 = pneg %p147
        %p327 = pneg %p171
        %p328 = pneg %p168
        %p329 = pneg %p192
        %p330 = pneg %p189
        %p331 = pneg %p213
        %p332 = pneg %p210
        %p333 = pneg %p239
        %p334 = pneg %p236
        %s335 = sand.u32 %s226, 1
        %s336 = scalar_lea.sflag [#allocation3], %s335
        %s337 = sand.u32 %s226, 1
        %s338 = smul.addr %s337, 128
        %s339 = scalar_lea.vmem [#allocation5], %s338
        %p340 = scmp.lt.s32.totalorder %s24, 1
        %s341 = scalar_select %p340, %s24, 1
        %s342 = smul.addr %s341, 32
        %s343 = smul.addr %s342, 4
        %s344 = scalar_lea.vmem %s1, %s343
        %v346 = vld [vmem:[%s344] sm:$0xf]
        %v347 = vld [vmem:[%s344 + $0x4] sm:$0xf]
        %v348 = vld [vmem:[%s344 + $0x8] sm:$0xf]
        %v349 = vld [vmem:[%s344 + $0xc] sm:$0xf]
        %v350 = vld [vmem:[%s344 + $0x10] sm:$0xf]
        %v351 = vld [vmem:[%s344 + $0x14] sm:$0xf]
        %v352 = vld [vmem:[%s344 + $0x18] sm:$0xf]
        %v353 = vld [vmem:[%s344 + $0x1c] sm:$0xf]
        %v354 = vld [vmem:[%s344 + $0x20] sm:$0xf]
        %v355 = vld [vmem:[%s344 + $0x24] sm:$0xf]
        %v356 = vld [vmem:[%s344 + $0x28] sm:$0xf]
        %v357 = vld [vmem:[%s344 + $0x2c] sm:$0xf]
        %v358 = vld [vmem:[%s344 + $0x30] sm:$0xf]
        %v359 = vld [vmem:[%s344 + $0x34] sm:$0xf]
        %v360 = vld [vmem:[%s344 + $0x38] sm:$0xf]
        %v361 = vld [vmem:[%s344 + $0x3c] sm:$0xf]
        %v362 = vld [vmem:[%s344 + $0x40] sm:$0xf]
        %v363 = vld [vmem:[%s344 + $0x44] sm:$0xf]
        %v364 = vld [vmem:[%s344 + $0x48] sm:$0xf]
        %v365 = vld [vmem:[%s344 + $0x4c] sm:$0xf]
        %v366 = vld [vmem:[%s344 + $0x50] sm:$0xf]
        %v367 = vld [vmem:[%s344 + $0x54] sm:$0xf]
        %v368 = vld [vmem:[%s344 + $0x58] sm:$0xf]
        %v369 = vld [vmem:[%s344 + $0x5c] sm:$0xf]
        %v370 = vld [vmem:[%s344 + $0x60] sm:$0xf]
        %v371 = vld [vmem:[%s344 + $0x64] sm:$0xf]
        %v372 = vld [vmem:[%s344 + $0x68] sm:$0xf]
        %v373 = vld [vmem:[%s344 + $0x6c] sm:$0xf]
        %v374 = vld [vmem:[%s344 + $0x70] sm:$0xf]
        %v375 = vld [vmem:[%s344 + $0x74] sm:$0xf]
        %v376 = vld [vmem:[%s344 + $0x78] sm:$0xf]
        %v377 = vld [vmem:[%s344 + $0x7c] sm:$0xf]
        %v378 = vld [vmem:[%s2] sm:$0xf]
        %v379 = vld [vmem:[%s2 + $0x4] sm:$0xf]
        %v380 = vld [vmem:[%s2 + $0x8] sm:$0xf]
        %v381 = vld [vmem:[%s2 + $0xc] sm:$0xf]
        %v382 = vld [vmem:[%s2 + $0x10] sm:$0x3]
        %v415 = vunpack.c.l.b16 %v346
        %v416 = vunpack.c.l.b16 %v347
        %v417 = vunpack.c.l.b16 %v348
        %v418 = vunpack.c.l.b16 %v349
        %v419 = vunpack.c.l.b16 %v350
        %v420 = vunpack.c.l.b16 %v351
        %v421 = vunpack.c.l.b16 %v352
        %v422 = vunpack.c.l.b16 %v353
        %v423 = vunpack.c.l.b16 %v354
        %v424 = vunpack.c.l.b16 %v355
        %v425 = vunpack.c.l.b16 %v356
        %v426 = vunpack.c.l.b16 %v357
        %v427 = vunpack.c.l.b16 %v358
        %v428 = vunpack.c.l.b16 %v359
        %v429 = vunpack.c.l.b16 %v360
        %v430 = vunpack.c.l.b16 %v361
        %v431 = vunpack.c.l.b16 %v362
        %v432 = vunpack.c.l.b16 %v363
        %v433 = vunpack.c.l.b16 %v364
        %v434 = vunpack.c.l.b16 %v365
        %v435 = vunpack.c.l.b16 %v366
        %v436 = vunpack.c.l.b16 %v367
        %v437 = vunpack.c.l.b16 %v368
        %v438 = vunpack.c.l.b16 %v369
        %v439 = vunpack.c.l.b16 %v370
        %v440 = vunpack.c.l.b16 %v371
        %v441 = vunpack.c.l.b16 %v372
        %v442 = vunpack.c.l.b16 %v373
        %v443 = vunpack.c.l.b16 %v374
        %v444 = vunpack.c.l.b16 %v375
        %v445 = vunpack.c.l.b16 %v376
        %v446 = vunpack.c.l.b16 %v377
        %v447 = vpack.c.b16 %v416, %v415
        %v448 = vpack.c.b16 %v418, %v417
        %v449 = vpack.c.b16 %v420, %v419
        %v450 = vpack.c.b16 %v422, %v421
        %v451 = vpack.c.b16 %v424, %v423
        %v452 = vpack.c.b16 %v426, %v425
        %v453 = vpack.c.b16 %v428, %v427
        %v454 = vpack.c.b16 %v430, %v429
        %v455 = vpack.c.b16 %v432, %v431
        %v456 = vpack.c.b16 %v434, %v433
        %v457 = vpack.c.b16 %v436, %v435
        %v458 = vpack.c.b16 %v438, %v437
        %v459 = vpack.c.b16 %v440, %v439
        %v460 = vpack.c.b16 %v442, %v441
        %v461 = vpack.c.b16 %v444, %v443
        %v462 = vpack.c.b16 %v446, %v445
        %v468 = vunpack.c.l.b16 %v378
        %v469 = vunpack.c.l.b16 %v379
        %v470 = vunpack.c.l.b16 %v380
        %v471 = vunpack.c.l.b16 %v381
        %v472 = vunpack.c.l.b16 %v382
        %v473 = vpack.c.b16 %v469, %v468
        %v474 = vpack.c.b16 %v471, %v470
        %v475 = vpack.c.b16 %v472, %v472
        %vm478 = vcmask 293888
        %v480 = vsel %vm478, %v447, 0
        %v483 = vsel %vm478, %v448, 0
        %v486 = vsel %vm478, %v449, 0
        %v489 = vsel %vm478, %v450, 0
        %v492 = vsel %vm478, %v451, 0
        %v495 = vsel %vm478, %v452, 0
        %v498 = vsel %vm478, %v453, 0
        %v501 = vsel %vm478, %v454, 0
        %v504 = vsel %vm478, %v455, 0
        %v507 = vsel %vm478, %v456, 0
        %v510 = vsel %vm478, %v457, 0
        %v513 = vsel %vm478, %v458, 0
        %v516 = vsel %vm478, %v459, 0
        %v519 = vsel %vm478, %v460, 0
        %v522 = vsel %vm478, %v461, 0
        %v525 = vsel %vm478, %v462, 0
        %vm527 = vcmask 1041408
        %v529 = vsel %vm527, %v475, 0
        %531 = vmatprep.subr.bf16.mxu0 0
        %532 = vmatpush1.bf16.msra.mxu0 %v473
        %533 = vmatprep.subr.bf16.mxu0 0
        %534 = vmatpush1.bf16.msra.mxu0 %v474
        %535 = vmatprep.subr.bf16.mxu0 0
        %536 = vmatpush1.bf16.msra.mxu0 %v529
        %537 = vmatprep.subr.bf16.mxu0 0
        %538 = vmatpush1.bf16.msra.mxu0 0
        %539 = vmatprep.subr.bf16.mxu0 0
        %540 = vmatpush1.bf16.msra.mxu0 0
        %541 = vmatprep.subr.bf16.mxu0 0
        %542 = vmatpush1.bf16.msra.mxu0 0
        %543 = vmatprep.subr.bf16.mxu0 0
        %544 = vmatpush1.bf16.msra.mxu0 0
        %545 = vmatprep.subr.bf16.mxu0 0
        %546 = vmatpush1.bf16.msra.mxu0 0
        %547 = vmatprep.subr.bf16.mxu0 0
        %548 = vmatpush1.bf16.msra.mxu0 0
        %549 = vmatprep.subr.bf16.mxu0 0
        %550 = vmatpush1.bf16.msra.mxu0 0
        %551 = vmatprep.subr.bf16.mxu0 0
        %552 = vmatpush1.bf16.msra.mxu0 0
        %553 = vmatprep.subr.bf16.mxu0 0
        %554 = vmatpush1.bf16.msra.mxu0 0
        %555 = vmatprep.subr.bf16.mxu0 0
        %556 = vmatpush1.bf16.msra.mxu0 0
        %557 = vmatprep.subr.bf16.mxu0 0
        %558 = vmatpush1.bf16.msra.mxu0 0
        %559 = vmatprep.subr.bf16.mxu0 0
        %560 = vmatpush1.bf16.msra.mxu0 0
        %561 = vmatprep.subr.bf16.mxu0 0
        %562 = vmatpush1.bf16.msra.mxu0 0
        %563 = vmatprep.mubr.bf16.mxu0 0
        %564 = vmatmul.mubr.bf16.gmra.mrb[0].mxu0 %v480
        %v565 = vpop.f32.mrb[0].mxu0
        %v566 = vadd.f32 0.0, %v565
        %v567 = vpop.f32.mrb[0].mxu0
        %v568 = vpop.f32.mrb[0].mxu0
        %v569 = vadd.f32 0.0, %v568
        %v570 = vpop.f32.mrb[0].mxu0
        %571 = vmatprep.mubr.bf16.mxu0 0
        %572 = vmatmul.mubr.bf16.gmra.mrb[0].mxu0 %v483
        %v573 = vpop.f32.mrb[0].mxu0
        %v574 = vadd.f32 0.0, %v573
        %v575 = vpop.f32.mrb[0].mxu0
        %v576 = vpop.f32.mrb[0].mxu0
        %v577 = vadd.f32 0.0, %v576
        %v578 = vpop.f32.mrb[0].mxu0
        %579 = vmatprep.mubr.bf16.mxu0 0
        %580 = vmatmul.mubr.bf16.gmra.mrb[0].mxu0 %v486
        %v581 = vpop.f32.mrb[0].mxu0
        %v582 = vadd.f32 0.0, %v581
        %v583 = vpop.f32.mrb[0].mxu0
        %v584 = vpop.f32.mrb[0].mxu0
        %v585 = vadd.f32 0.0, %v584
        %v586 = vpop.f32.mrb[0].mxu0
        %587 = vmatprep.mubr.bf16.mxu0 0
        %588 = vmatmul.mubr.bf16.gmra.mrb[0].mxu0 %v489
        %v589 = vpop.f32.mrb[0].mxu0
        %v590 = vadd.f32 0.0, %v589
        %v591 = vpop.f32.mrb[0].mxu0
        %v592 = vpop.f32.mrb[0].mxu0
        %v593 = vadd.f32 0.0, %v592
        %v594 = vpop.f32.mrb[0].mxu0
        %595 = vmatprep.mubr.bf16.mxu0 0
        %596 = vmatmul.mubr.bf16.gmra.mrb[0].mxu0 %v492
        %v597 = vpop.f32.mrb[0].mxu0
        %v598 = vadd.f32 0.0, %v597
        %v599 = vpop.f32.mrb[0].mxu0
        %v600 = vpop.f32.mrb[0].mxu0
        %v601 = vadd.f32 0.0, %v600
        %v602 = vpop.f32.mrb[0].mxu0
        %603 = vmatprep.mubr.bf16.mxu0 0
        %604 = vmatmul.mubr.bf16.gmra.mrb[0].mxu0 %v495
        %v605 = vpop.f32.mrb[0].mxu0
        %v606 = vadd.f32 0.0, %v605
        %v607 = vpop.f32.mrb[0].mxu0
        %v608 = vpop.f32.mrb[0].mxu0
        %v609 = vadd.f32 0.0, %v608
        %v610 = vpop.f32.mrb[0].mxu0
        %611 = vmatprep.mubr.bf16.mxu0 0
        %612 = vmatmul.mubr.bf16.gmra.mrb[0].mxu0 %v498
        %v613 = vpop.f32.mrb[0].mxu0
        %v614 = vadd.f32 0.0, %v613
        %v615 = vpop.f32.mrb[0].mxu0
        %v616 = vpop.f32.mrb[0].mxu0
        %v617 = vadd.f32 0.0, %v616
        %v618 = vpop.f32.mrb[0].mxu0
        %619 = vmatprep.mubr.bf16.mxu0 0
        %620 = vmatmul.mubr.bf16.gmra.mrb[0].mxu0 %v501
        %v621 = vpop.f32.mrb[0].mxu0
        %v622 = vadd.f32 0.0, %v621
        %v623 = vpop.f32.mrb[0].mxu0
        %v624 = vpop.f32.mrb[0].mxu0
        %v625 = vadd.f32 0.0, %v624
        %v626 = vpop.f32.mrb[0].mxu0
        %627 = vmatprep.mubr.bf16.mxu0 0
        %628 = vmatmul.mubr.bf16.gmra.mrb[0].mxu0 %v504
        %v629 = vpop.f32.mrb[0].mxu0
        %v630 = vadd.f32 0.0, %v629
        %v631 = vpop.f32.mrb[0].mxu0
        %v632 = vpop.f32.mrb[0].mxu0
        %v633 = vadd.f32 0.0, %v632
        %v634 = vpop.f32.mrb[0].mxu0
        %635 = vmatprep.mubr.bf16.mxu0 0
        %636 = vmatmul.mubr.bf16.gmra.mrb[0].mxu0 %v507
        %v637 = vpop.f32.mrb[0].mxu0
        %v638 = vadd.f32 0.0, %v637
        %v639 = vpop.f32.mrb[0].mxu0
        %v640 = vpop.f32.mrb[0].mxu0
        %v641 = vadd.f32 0.0, %v640
        %v642 = vpop.f32.mrb[0].mxu0
        %643 = vmatprep.mubr.bf16.mxu0 0
        %644 = vmatmul.mubr.bf16.gmra.mrb[0].mxu0 %v510
        %v645 = vpop.f32.mrb[0].mxu0
        %v646 = vadd.f32 0.0, %v645
        %v647 = vpop.f32.mrb[0].mxu0
        %v648 = vpop.f32.mrb[0].mxu0
        %v649 = vadd.f32 0.0, %v648
        %v650 = vpop.f32.mrb[0].mxu0
        %651 = vmatprep.mubr.bf16.mxu0 0
        %652 = vmatmul.mubr.bf16.gmra.mrb[0].mxu0 %v513
        %v653 = vpop.f32.mrb[0].mxu0
        %v654 = vadd.f32 0.0, %v653
        %v655 = vpop.f32.mrb[0].mxu0
        %v656 = vpop.f32.mrb[0].mxu0
        %v657 = vadd.f32 0.0, %v656
        %v658 = vpop.f32.mrb[0].mxu0
        %659 = vmatprep.mubr.bf16.mxu0 0
        %660 = vmatmul.mubr.bf16.gmra.mrb[0].mxu0 %v516
        %v661 = vpop.f32.mrb[0].mxu0
        %v662 = vadd.f32 0.0, %v661
        %v663 = vpop.f32.mrb[0].mxu0
        %v664 = vpop.f32.mrb[0].mxu0
        %v665 = vadd.f32 0.0, %v664
        %v666 = vpop.f32.mrb[0].mxu0
        %667 = vmatprep.mubr.bf16.mxu0 0
        %668 = vmatmul.mubr.bf16.gmra.mrb[0].mxu0 %v519
        %v669 = vpop.f32.mrb[0].mxu0
        %v670 = vadd.f32 0.0, %v669
        %v671 = vpop.f32.mrb[0].mxu0
        %v672 = vpop.f32.mrb[0].mxu0
        %v673 = vadd.f32 0.0, %v672
        %v674 = vpop.f32.mrb[0].mxu0
        %675 = vmatprep.mubr.bf16.mxu0 0
        %676 = vmatmul.mubr.bf16.gmra.mrb[0].mxu0 %v522
        %v677 = vpop.f32.mrb[0].mxu0
        %v678 = vadd.f32 0.0, %v677
        %v679 = vpop.f32.mrb[0].mxu0
        %v680 = vpop.f32.mrb[0].mxu0
        %v681 = vadd.f32 0.0, %v680
        %v682 = vpop.f32.mrb[0].mxu0
        %683 = vmatprep.mubr.bf16.mxu0 0
        %684 = vmatmul.mubr.bf16.gmra.mrb[0].mxu0 %v525
        %v685 = vpop.f32.mrb[0].mxu0
        %v686 = vadd.f32 0.0, %v685
        %v687 = vpop.f32.mrb[0].mxu0
        %v688 = vpop.f32.mrb[0].mxu0
        %v689 = vadd.f32 0.0, %v688
        %v690 = vpop.f32.mrb[0].mxu0
        %691 = vdwg.mxu0
        %vm692 = vcmp.ge.f32.partialorder %v566, 0.0
        %vm693 = vcmp.ge.f32.partialorder %v569, 0.0
        %vm694 = vcmp.ge.f32.partialorder %v574, 0.0
        %vm695 = vcmp.ge.f32.partialorder %v577, 0.0
        %vm696 = vcmp.ge.f32.partialorder %v582, 0.0
        %vm697 = vcmp.ge.f32.partialorder %v585, 0.0
        %vm698 = vcmp.ge.f32.partialorder %v590, 0.0
        %vm699 = vcmp.ge.f32.partialorder %v593, 0.0
        %vm700 = vcmp.ge.f32.partialorder %v598, 0.0
        %vm701 = vcmp.ge.f32.partialorder %v601, 0.0
        %vm702 = vcmp.ge.f32.partialorder %v606, 0.0
        %vm703 = vcmp.ge.f32.partialorder %v609, 0.0
        %vm704 = vcmp.ge.f32.partialorder %v614, 0.0
        %vm705 = vcmp.ge.f32.partialorder %v617, 0.0
        %vm706 = vcmp.ge.f32.partialorder %v622, 0.0
        %vm707 = vcmp.ge.f32.partialorder %v625, 0.0
        %vm708 = vcmp.ge.f32.partialorder %v630, 0.0
        %vm709 = vcmp.ge.f32.partialorder %v633, 0.0
        %vm710 = vcmp.ge.f32.partialorder %v638, 0.0
        %vm711 = vcmp.ge.f32.partialorder %v641, 0.0
        %vm712 = vcmp.ge.f32.partialorder %v646, 0.0
        %vm713 = vcmp.ge.f32.partialorder %v649, 0.0
        %vm714 = vcmp.ge.f32.partialorder %v654, 0.0
        %vm715 = vcmp.ge.f32.partialorder %v657, 0.0
        %vm716 = vcmp.ge.f32.partialorder %v662, 0.0
        %vm717 = vcmp.ge.f32.partialorder %v665, 0.0
        %vm718 = vcmp.ge.f32.partialorder %v670, 0.0
        %vm719 = vcmp.ge.f32.partialorder %v673, 0.0
        %vm720 = vcmp.ge.f32.partialorder %v678, 0.0
        %vm721 = vcmp.ge.f32.partialorder %v681, 0.0
        %vm722 = vcmp.ge.f32.partialorder %v686, 0.0
        %vm723 = vcmp.ge.f32.partialorder %v689, 0.0
        %s724 = sld [smem:[#allocation2]]
        %v725 = vstv %s724
        %v726 = vmul.f32 %v725, %v566
        %v727 = vmul.f32 %v725, %v569
        %v728 = vmul.f32 %v725, %v574
        %v729 = vmul.f32 %v725, %v577
        %v730 = vmul.f32 %v725, %v582
        %v731 = vmul.f32 %v725, %v585
        %v732 = vmul.f32 %v725, %v590
        %v733 = vmul.f32 %v725, %v593
        %v734 = vmul.f32 %v725, %v598
        %v735 = vmul.f32 %v725, %v601
        %v736 = vmul.f32 %v725, %v606
        %v737 = vmul.f32 %v725, %v609
        %v738 = vmul.f32 %v725, %v614
        %v739 = vmul.f32 %v725, %v617
        %v740 = vmul.f32 %v725, %v622
        %v741 = vmul.f32 %v725, %v625
        %v742 = vmul.f32 %v725, %v630
        %v743 = vmul.f32 %v725, %v633
        %v744 = vmul.f32 %v725, %v638
        %v745 = vmul.f32 %v725, %v641
        %v746 = vmul.f32 %v725, %v646
        %v747 = vmul.f32 %v725, %v649
        %v748 = vmul.f32 %v725, %v654
        %v749 = vmul.f32 %v725, %v657
        %v750 = vmul.f32 %v725, %v662
        %v751 = vmul.f32 %v725, %v665
        %v752 = vmul.f32 %v725, %v670
        %v753 = vmul.f32 %v725, %v673
        %v754 = vmul.f32 %v725, %v678
        %v755 = vmul.f32 %v725, %v681
        %v756 = vmul.f32 %v725, %v686
        %v757 = vmul.f32 %v725, %v689
        %v758 = vsel %vm692, %v566, %v726
        %v759 = vsel %vm693, %v569, %v727
        %v760 = vsel %vm694, %v574, %v728
        %v761 = vsel %vm695, %v577, %v729
        %v762 = vsel %vm696, %v582, %v730
        %v763 = vsel %vm697, %v585, %v731
        %v764 = vsel %vm698, %v590, %v732
        %v765 = vsel %vm699, %v593, %v733
        %v766 = vsel %vm700, %v598, %v734
        %v767 = vsel %vm701, %v601, %v735
        %v768 = vsel %vm702, %v606, %v736
        %v769 = vsel %vm703, %v609, %v737
        %v770 = vsel %vm704, %v614, %v738
        %v771 = vsel %vm705, %v617, %v739
        %v772 = vsel %vm706, %v622, %v740
        %v773 = vsel %vm707, %v625, %v741
        %v774 = vsel %vm708, %v630, %v742
        %v775 = vsel %vm709, %v633, %v743
        %v776 = vsel %vm710, %v638, %v744
        %v777 = vsel %vm711, %v641, %v745
        %v778 = vsel %vm712, %v646, %v746
        %v779 = vsel %vm713, %v649, %v747
        %v780 = vsel %vm714, %v654, %v748
        %v781 = vsel %vm715, %v657, %v749
        %v782 = vsel %vm716, %v662, %v750
        %v783 = vsel %vm717, %v665, %v751
        %v784 = vsel %vm718, %v670, %v752
        %v785 = vsel %vm719, %v673, %v753
        %v786 = vsel %vm720, %v678, %v754
        %v787 = vsel %vm721, %v681, %v755
        %v788 = vsel %vm722, %v686, %v756
        %v789 = vsel %vm723, %v689, %v757
        %v790 = vpack.c.bf16 %v759, %v758
        %v791 = vpack.c.bf16 %v761, %v760
        %v792 = vpack.c.bf16 %v763, %v762
        %v793 = vpack.c.bf16 %v765, %v764
        %v794 = vpack.c.bf16 %v767, %v766
        %v795 = vpack.c.bf16 %v769, %v768
        %v796 = vpack.c.bf16 %v771, %v770
        %v797 = vpack.c.bf16 %v773, %v772
        %v798 = vpack.c.bf16 %v775, %v774
        %v799 = vpack.c.bf16 %v777, %v776
        %v800 = vpack.c.bf16 %v779, %v778
        %v801 = vpack.c.bf16 %v781, %v780
        %v802 = vpack.c.bf16 %v783, %v782
        %v803 = vpack.c.bf16 %v785, %v784
        %v804 = vpack.c.bf16 %v787, %v786
        %v805 = vpack.c.bf16 %v789, %v788
        %v810 = vunpack.c.l.b16 %v794
        %v811 = vunpack.c.h.b16 %v794
        %v812 = vunpack.c.l.b16 %v795
        %v813 = vunpack.c.h.b16 %v795
        %v814 = vunpack.c.l.b16 %v796
        %v815 = vunpack.c.h.b16 %v796
        %v816 = vunpack.c.l.b16 %v797
        %v817 = vunpack.c.h.b16 %v797
        %v822 = vunpack.c.l.b16 %v798
        %v823 = vunpack.c.h.b16 %v798
        %v824 = vunpack.c.l.b16 %v799
        %v825 = vunpack.c.h.b16 %v799
        %v826 = vunpack.c.l.b16 %v800
        %v827 = vunpack.c.h.b16 %v800
        %v828 = vunpack.c.l.b16 %v801
        %v829 = vunpack.c.h.b16 %v801
        %v834 = vunpack.c.l.b16 %v802
        %v835 = vunpack.c.h.b16 %v802
        %v836 = vunpack.c.l.b16 %v803
        %v837 = vunpack.c.h.b16 %v803
        %v838 = vunpack.c.l.b16 %v804
        %v839 = vunpack.c.h.b16 %v804
        %v840 = vunpack.c.l.b16 %v805
        %v841 = vunpack.c.h.b16 %v805
        %v842 = vpack.c.b16 %v834, %v834
        %v843 = vpack.c.b16 %v835, %v835
        %v844 = vpack.c.b16 %v836, %v836
        %v845 = vpack.c.b16 %v837, %v837
        %v846 = vpack.c.b16 %v838, %v838
        %v847 = vpack.c.b16 %v839, %v839
        %v848 = vpack.c.b16 %v840, %v840
        %v849 = vpack.c.b16 %v841, %v841
        %v850 = vpack.c.b16 %v810, %v810
        %v851 = vpack.c.b16 %v811, %v811
        %v852 = vpack.c.b16 %v812, %v812
        %v853 = vpack.c.b16 %v813, %v813
        %v854 = vpack.c.b16 %v814, %v814
        %v855 = vpack.c.b16 %v815, %v815
        %v856 = vpack.c.b16 %v816, %v816
        %v857 = vpack.c.b16 %v817, %v817
        %v859 = vshrl.u32 %v850, 16
        %v861 = vrot.slane %v859, 7
        %v862 = vshll.u32 %v850, 16
        %v864 = vor.u32 %v861, %v862
        %v866 = vshrl.u32 %v851, 16
        %v868 = vrot.slane %v866, 7
        %v869 = vshll.u32 %v851, 16
        %v871 = vor.u32 %v868, %v869
        %v873 = vshrl.u32 %v852, 16
        %v875 = vrot.slane %v873, 7
        %v876 = vshll.u32 %v852, 16
        %v878 = vor.u32 %v875, %v876
        %v880 = vshrl.u32 %v853, 16
        %v882 = vrot.slane %v880, 7
        %v883 = vshll.u32 %v853, 16
        %v885 = vor.u32 %v882, %v883
        %v887 = vshrl.u32 %v854, 16
        %v889 = vrot.slane %v887, 7
        %v890 = vshll.u32 %v854, 16
        %v892 = vor.u32 %v889, %v890
        %v894 = vshrl.u32 %v855, 16
        %v896 = vrot.slane %v894, 7
        %v897 = vshll.u32 %v855, 16
        %v899 = vor.u32 %v896, %v897
        %v901 = vshrl.u32 %v856, 16
        %v903 = vrot.slane %v901, 7
        %v904 = vshll.u32 %v856, 16
        %v906 = vor.u32 %v903, %v904
        %v908 = vshrl.u32 %v857, 16
        %v910 = vrot.slane %v908, 7
        %v911 = vshll.u32 %v857, 16
        %v913 = vor.u32 %v910, %v911
        %vm922 = vcmask 1040384
        %vm923 = vsmask.f32 256
        %vm924 = vmand %vm922, %vm923
        %v925 = vsel %vm924, 0, %v864
        %v926 = vsel %vm924, 0, %v871
        %v927 = vsel %vm924, 0, %v878
        %v928 = vsel %vm924, 0, %v885
        %v929 = vsel %vm924, 0, %v892
        %v930 = vsel %vm924, 0, %v899
        %v931 = vsel %vm924, 0, %v906
        %v932 = vsel %vm924, 0, %v913
        %v934 = vshrl.u32 0, 16
        %v936 = vrot.slane %v934, 7
        %v937 = vshll.u32 0, 16
        %v939 = vor.u32 %v936, %v937
        %v941 = vshrl.u32 %v842, 16
        %v943 = vrot.slane %v941, 7
        %v944 = vshll.u32 %v842, 16
        %v946 = vor.u32 %v943, %v944
        %v948 = vshrl.u32 %v843, 16
        %v950 = vrot.slane %v948, 7
        %v951 = vshll.u32 %v843, 16
        %v953 = vor.u32 %v950, %v951
        %v955 = vshrl.u32 %v844, 16
        %v957 = vrot.slane %v955, 7
        %v958 = vshll.u32 %v844, 16
        %v960 = vor.u32 %v957, %v958
        %v962 = vshrl.u32 %v845, 16
        %v964 = vrot.slane %v962, 7
        %v965 = vshll.u32 %v845, 16
        %v967 = vor.u32 %v964, %v965
        %v969 = vshrl.u32 %v846, 16
        %v971 = vrot.slane %v969, 7
        %v972 = vshll.u32 %v846, 16
        %v974 = vor.u32 %v971, %v972
        %v976 = vshrl.u32 %v847, 16
        %v978 = vrot.slane %v976, 7
        %v979 = vshll.u32 %v847, 16
        %v981 = vor.u32 %v978, %v979
        %v983 = vshrl.u32 %v848, 16
        %v985 = vrot.slane %v983, 7
        %v986 = vshll.u32 %v848, 16
        %v988 = vor.u32 %v985, %v986
        %v990 = vshrl.u32 %v849, 16
        %v992 = vrot.slane %v990, 7
        %v993 = vshll.u32 %v849, 16
        %v995 = vor.u32 %v992, %v993
        %v1005 = vsel %vm924, 0, %v939
        %v1006 = vsel %vm924, 0, %v946
        %v1007 = vsel %vm924, 0, %v953
        %v1008 = vsel %vm924, 0, %v960
        %v1009 = vsel %vm924, 0, %v967
        %v1010 = vsel %vm924, 0, %v974
        %v1011 = vsel %vm924, 0, %v981
        %v1012 = vsel %vm924, 0, %v988
        %v1013 = vsel %vm924, 0, %v995
        %v1014 = vld [vmem:[%s3] sm:$0xf]
        %v1015 = vld [vmem:[%s3 + $0x4] sm:$0xf]
        %v1016 = vld [vmem:[%s3 + $0x8] sm:$0xf]
        %v1017 = vld [vmem:[%s3 + $0xc] sm:$0xf]
        %v1018 = vld [vmem:[%s3 + $0x10] sm:$0xf]
        %v1019 = vld [vmem:[%s3 + $0x14] sm:$0xf]
        %v1020 = vld [vmem:[%s3 + $0x18] sm:$0xf]
        %v1021 = vld [vmem:[%s3 + $0x1c] sm:$0xf]
        %s1022 = scalar_lea.vmem %s3, 32
        %v1023 = vld [vmem:[%s1022] sm:$0xf]
        %v1024 = vld [vmem:[%s1022 + $0x4] sm:$0xf]
        %v1025 = vld [vmem:[%s1022 + $0x8] sm:$0xf]
        %v1026 = vld [vmem:[%s1022 + $0xc] sm:$0xf]
        %v1027 = vld [vmem:[%s1022 + $0x10] sm:$0xf]
        %v1028 = vld [vmem:[%s1022 + $0x14] sm:$0xf]
        %v1029 = vld [vmem:[%s1022 + $0x18] sm:$0xf]
        %v1030 = vld [vmem:[%s1022 + $0x1c] sm:$0xf]
        %v1032 = vunpack.c.l.b16 0
        %v1033 = vpack.c.b16 %v822, %v1032
        %v1034 = vpack.c.b16 %v824, %v823
        %v1035 = vpack.c.b16 %v826, %v825
        %v1036 = vpack.c.b16 %v828, %v827
        %v1045 = vunpack.c.l.b16 %v1023
        %v1046 = vunpack.c.l.b16 %v1024
        %v1047 = vunpack.c.l.b16 %v1025
        %v1048 = vunpack.c.l.b16 %v1026
        %v1049 = vunpack.c.l.b16 %v1027
        %v1050 = vunpack.c.l.b16 %v1028
        %v1051 = vunpack.c.l.b16 %v1029
        %v1052 = vunpack.c.l.b16 %v1030
        %v1053 = vpack.c.b16 %v1046, %v1045
        %v1054 = vpack.c.b16 %v1048, %v1047
        %v1055 = vpack.c.b16 %v1050, %v1049
        %v1056 = vpack.c.b16 %v1052, %v1051
        %vm1061 = vcmask 523264
        %v1063 = vsel %vm1061, %v1033, 0
        %v1066 = vsel %vm1061, %v1034, 0
        %v1069 = vsel %vm1061, %v1035, 0
        %v1072 = vsel %vm1061, %v1036, 0
        %1074 = vmatprep.subr.bf16.mxu0 0
        %1075 = vmatpush1.bf16.msra.mxu0 %v1053
        %1076 = vmatprep.subr.bf16.mxu0 0
        %1077 = vmatpush1.bf16.msra.mxu0 %v1054
        %1078 = vmatprep.subr.bf16.mxu0 0
        %1079 = vmatpush1.bf16.msra.mxu0 %v1055
        %1080 = vmatprep.subr.bf16.mxu0 0
        %1081 = vmatpush1.bf16.msra.mxu0 %v1056
        %1082 = vmatprep.subr.bf16.mxu0 0
        %1083 = vmatpush1.bf16.msra.mxu0 0
        %1084 = vmatprep.subr.bf16.mxu0 0
        %1085 = vmatpush1.bf16.msra.mxu0 0
        %1086 = vmatprep.subr.bf16.mxu0 0
        %1087 = vmatpush1.bf16.msra.mxu0 0
        %1088 = vmatprep.subr.bf16.mxu0 0
        %1089 = vmatpush1.bf16.msra.mxu0 0
        %1090 = vmatprep.subr.bf16.mxu0 0
        %1091 = vmatpush1.bf16.msra.mxu0 0
        %1092 = vmatprep.subr.bf16.mxu0 0
        %1093 = vmatpush1.bf16.msra.mxu0 0
        %1094 = vmatprep.subr.bf16.mxu0 0
        %1095 = vmatpush1.bf16.msra.mxu0 0
        %1096 = vmatprep.subr.bf16.mxu0 0
        %1097 = vmatpush1.bf16.msra.mxu0 0
        %1098 = vmatprep.subr.bf16.mxu0 0
        %1099 = vmatpush1.bf16.msra.mxu0 0
        %1100 = vmatprep.subr.bf16.mxu0 0
        %1101 = vmatpush1.bf16.msra.mxu0 0
        %1102 = vmatprep.subr.bf16.mxu0 0
        %1103 = vmatpush1.bf16.msra.mxu0 0
        %1104 = vmatprep.subr.bf16.mxu0 0
        %1105 = vmatpush1.bf16.msra.mxu0 0
        %1106 = vmatprep.mubr.bf16.mxu0 0
        %1107 = vmatmul.mubr.bf16.gmra.mrb[0].mxu0 %v1063
        %v1108 = vpop.f32.mrb[0].mxu0
        %v1109 = vadd.f32 0.0, %v1108
        %v1110 = vpop.f32.mrb[0].mxu0
        %v1111 = vpop.f32.mrb[0].mxu0
        %v1112 = vadd.f32 0.0, %v1111
        %v1113 = vpop.f32.mrb[0].mxu0
        %1114 = vmatprep.mubr.bf16.mxu0 0
        %1115 = vmatmul.mubr.bf16.gmra.mrb[0].mxu0 %v1066
        %v1116 = vpop.f32.mrb[0].mxu0
        %v1117 = vadd.f32 0.0, %v1116
        %v1118 = vpop.f32.mrb[0].mxu0
        %v1119 = vpop.f32.mrb[0].mxu0
        %v1120 = vadd.f32 0.0, %v1119
        %v1121 = vpop.f32.mrb[0].mxu0
        %1122 = vmatprep.mubr.bf16.mxu0 0
        %1123 = vmatmul.mubr.bf16.gmra.mrb[0].mxu0 %v1069
        %v1124 = vpop.f32.mrb[0].mxu0
        %v1125 = vadd.f32 0.0, %v1124
        %v1126 = vpop.f32.mrb[0].mxu0
        %v1127 = vpop.f32.mrb[0].mxu0
        %v1128 = vadd.f32 0.0, %v1127
        %v1129 = vpop.f32.mrb[0].mxu0
        %1130 = vmatprep.mubr.bf16.mxu0 0
        %1131 = vmatmul.mubr.bf16.gmra.mrb[0].mxu0 %v1072
        %v1132 = vpop.f32.mrb[0].mxu0
        %v1133 = vadd.f32 0.0, %v1132
        %v1134 = vpop.f32.mrb[0].mxu0
        %v1135 = vpop.f32.mrb[0].mxu0
        %v1136 = vadd.f32 0.0, %v1135
        %v1137 = vpop.f32.mrb[0].mxu0
        %1138 = vdwg.mxu0
        %v1147 = vunpack.c.l.b16 %v1005
        %v1148 = vunpack.c.l.b16 %v1006
        %v1149 = vunpack.c.l.b16 %v1007
        %v1150 = vunpack.c.l.b16 %v1008
        %v1151 = vunpack.c.l.b16 %v1009
        %v1152 = vunpack.c.l.b16 %v1010
        %v1153 = vunpack.c.l.b16 %v1011
        %v1154 = vunpack.c.l.b16 %v1012
        %v1155 = vpack.c.b16 %v1148, %v1147
        %v1156 = vpack.c.b16 %v1150, %v1149
        %v1157 = vpack.c.b16 %v1152, %v1151
        %v1158 = vpack.c.b16 %v1154, %v1153
        %v1167 = vunpack.c.l.b16 %v1014
        %v1168 = vunpack.c.l.b16 %v1015
        %v1169 = vunpack.c.l.b16 %v1016
        %v1170 = vunpack.c.l.b16 %v1017
        %v1171 = vunpack.c.l.b16 %v1018
        %v1172 = vunpack.c.l.b16 %v1019
        %v1173 = vunpack.c.l.b16 %v1020
        %v1174 = vunpack.c.l.b16 %v1021
        %v1175 = vpack.c.b16 %v1168, %v1167
        %v1176 = vpack.c.b16 %v1170, %v1169
        %v1177 = vpack.c.b16 %v1172, %v1171
        %v1178 = vpack.c.b16 %v1174, %v1173
        %v1184 = vsel %vm1061, %v1155, 0
        %v1187 = vsel %vm1061, %v1156, 0
        %v1190 = vsel %vm1061, %v1157, 0
        %v1193 = vsel %vm1061, %v1158, 0
        %1195 = vmatprep.subr.bf16.mxu0 0
        %1196 = vmatpush1.bf16.msra.mxu0 %v1175
        %1197 = vmatprep.subr.bf16.mxu0 0
        %1198 = vmatpush1.bf16.msra.mxu0 %v1176
        %1199 = vmatprep.subr.bf16.mxu0 0
        %1200 = vmatpush1.bf16.msra.mxu0 %v1177
        %1201 = vmatprep.subr.bf16.mxu0 0
        %1202 = vmatpush1.bf16.msra.mxu0 %v1178
        %1203 = vmatprep.subr.bf16.mxu0 0
        %1204 = vmatpush1.bf16.msra.mxu0 0
        %1205 = vmatprep.subr.bf16.mxu0 0
        %1206 = vmatpush1.bf16.msra.mxu0 0
        %1207 = vmatprep.subr.bf16.mxu0 0
        %1208 = vmatpush1.bf16.msra.mxu0 0
        %1209 = vmatprep.subr.bf16.mxu0 0
        %1210 = vmatpush1.bf16.msra.mxu0 0
        %1211 = vmatprep.subr.bf16.mxu0 0
        %1212 = vmatpush1.bf16.msra.mxu0 0
        %1213 = vmatprep.subr.bf16.mxu0 0
        %1214 = vmatpush1.bf16.msra.mxu0 0
        %1215 = vmatprep.subr.bf16.mxu0 0
        %1216 = vmatpush1.bf16.msra.mxu0 0
        %1217 = vmatprep.subr.bf16.mxu0 0
        %1218 = vmatpush1.bf16.msra.mxu0 0
        %1219 = vmatprep.subr.bf16.mxu0 0
        %1220 = vmatpush1.bf16.msra.mxu0 0
        %1221 = vmatprep.subr.bf16.mxu0 0
        %1222 = vmatpush1.bf16.msra.mxu0 0
        %1223 = vmatprep.subr.bf16.mxu0 0
        %1224 = vmatpush1.bf16.msra.mxu0 0
        %1225 = vmatprep.subr.bf16.mxu0 0
        %1226 = vmatpush1.bf16.msra.mxu0 0
        %1227 = vmatprep.mubr.bf16.mxu0 0
        %1228 = vmatmul.mubr.bf16.gmra.mrb[0].mxu0 %v1184
        %v1229 = vpop.f32.mrb[0].mxu0
        %v1230 = vadd.f32 %v1109, %v1229
        %v1231 = vpop.f32.mrb[0].mxu0
        %v1232 = vpop.f32.mrb[0].mxu0
        %v1233 = vadd.f32 %v1112, %v1232
        %v1234 = vpop.f32.mrb[0].mxu0
        %1235 = vmatprep.mubr.bf16.mxu0 0
        %1236 = vmatmul.mubr.bf16.gmra.mrb[0].mxu0 %v1187
        %v1237 = vpop.f32.mrb[0].mxu0
        %v1238 = vadd.f32 %v1117, %v1237
        %v1239 = vpop.f32.mrb[0].mxu0
        %v1240 = vpop.f32.mrb[0].mxu0
        %v1241 = vadd.f32 %v1120, %v1240
        %v1242 = vpop.f32.mrb[0].mxu0
        %1243 = vmatprep.mubr.bf16.mxu0 0
        %1244 = vmatmul.mubr.bf16.gmra.mrb[0].mxu0 %v1190
        %v1245 = vpop.f32.mrb[0].mxu0
        %v1246 = vadd.f32 %v1125, %v1245
        %v1247 = vpop.f32.mrb[0].mxu0
        %v1248 = vpop.f32.mrb[0].mxu0
        %v1249 = vadd.f32 %v1128, %v1248
        %v1250 = vpop.f32.mrb[0].mxu0
        %1251 = vmatprep.mubr.bf16.mxu0 0
        %1252 = vmatmul.mubr.bf16.gmra.mrb[0].mxu0 %v1193
        %v1253 = vpop.f32.mrb[0].mxu0
        %v1254 = vadd.f32 %v1133, %v1253
        %v1255 = vpop.f32.mrb[0].mxu0
        %v1256 = vpop.f32.mrb[0].mxu0
        %v1257 = vadd.f32 %v1136, %v1256
        %v1258 = vpop.f32.mrb[0].mxu0
        %1259 = vdwg.mxu0
        %v1260 = vunpack.c.h.b16 %v1005
        %v1261 = vunpack.c.h.b16 %v1006
        %v1262 = vunpack.c.h.b16 %v1007
        %v1263 = vunpack.c.h.b16 %v1008
        %v1264 = vunpack.c.h.b16 %v1009
        %v1265 = vunpack.c.h.b16 %v1010
        %v1266 = vunpack.c.h.b16 %v1011
        %v1267 = vunpack.c.h.b16 %v1012
        %v1268 = vpack.c.b16 %v1147, %v1147
        %v1269 = vpack.c.b16 %v1260, %v1260
        %v1270 = vpack.c.b16 %v1148, %v1148
        %v1271 = vpack.c.b16 %v1261, %v1261
        %v1272 = vpack.c.b16 %v1149, %v1149
        %v1273 = vpack.c.b16 %v1262, %v1262
        %v1274 = vpack.c.b16 %v1150, %v1150
        %v1275 = vpack.c.b16 %v1263, %v1263
        %v1276 = vpack.c.b16 %v1151, %v1151
        %v1277 = vpack.c.b16 %v1264, %v1264
        %v1278 = vpack.c.b16 %v1152, %v1152
        %v1279 = vpack.c.b16 %v1265, %v1265
        %v1280 = vpack.c.b16 %v1153, %v1153
        %v1281 = vpack.c.b16 %v1266, %v1266
        %v1282 = vpack.c.b16 %v1154, %v1154
        %v1283 = vpack.c.b16 %v1267, %v1267
        %vm1284 = vsmask.f32 3328
        %vm1285 = vsmask.f32 7440
        %vm1286 = vmor %vm1284, %vm1285
        %v1288 = vshrl.u32 %v1268, 16
        %v1290 = vrot.slane %v1288, 4
        %v1291 = vshll.u32 %v1268, 16
        %v1293 = vrot.slane %v1291, 5
        %v1294 = vor.u32 %v1290, %v1293
        %v1295 = vrot.slane %v1294, 4
        %v1297 = vshll.u32 %v1269, 16
        %v1299 = vrot.slane %v1297, 5
        %v1300 = vsel %vm1286, %v1295, %v1299
        %v1302 = vshrl.u32 %v1270, 16
        %v1304 = vrot.slane %v1302, 4
        %v1305 = vshll.u32 %v1270, 16
        %v1307 = vrot.slane %v1305, 5
        %v1308 = vor.u32 %v1304, %v1307
        %v1309 = vrot.slane %v1308, 4
        %v1311 = vshll.u32 %v1271, 16
        %v1313 = vrot.slane %v1311, 5
        %v1314 = vsel %vm1286, %v1309, %v1313
        %v1316 = vshrl.u32 %v1272, 16
        %v1318 = vrot.slane %v1316, 4
        %v1319 = vshll.u32 %v1272, 16
        %v1321 = vrot.slane %v1319, 5
        %v1322 = vor.u32 %v1318, %v1321
        %v1323 = vrot.slane %v1322, 4
        %v1325 = vshll.u32 %v1273, 16
        %v1327 = vrot.slane %v1325, 5
        %v1328 = vsel %vm1286, %v1323, %v1327
        %v1330 = vshrl.u32 %v1274, 16
        %v1332 = vrot.slane %v1330, 4
        %v1333 = vshll.u32 %v1274, 16
        %v1335 = vrot.slane %v1333, 5
        %v1336 = vor.u32 %v1332, %v1335
        %v1337 = vrot.slane %v1336, 4
        %v1339 = vshll.u32 %v1275, 16
        %v1341 = vrot.slane %v1339, 5
        %v1342 = vsel %vm1286, %v1337, %v1341
        %v1344 = vshrl.u32 %v1276, 16
        %v1346 = vrot.slane %v1344, 4
        %v1347 = vshll.u32 %v1276, 16
        %v1349 = vrot.slane %v1347, 5
        %v1350 = vor.u32 %v1346, %v1349
        %v1351 = vrot.slane %v1350, 4
        %v1353 = vshll.u32 %v1277, 16
        %v1355 = vrot.slane %v1353, 5
        %v1356 = vsel %vm1286, %v1351, %v1355
        %v1358 = vshrl.u32 %v1278, 16
        %v1360 = vrot.slane %v1358, 4
        %v1361 = vshll.u32 %v1278, 16
        %v1363 = vrot.slane %v1361, 5
        %v1364 = vor.u32 %v1360, %v1363
        %v1365 = vrot.slane %v1364, 4
        %v1367 = vshll.u32 %v1279, 16
        %v1369 = vrot.slane %v1367, 5
        %v1370 = vsel %vm1286, %v1365, %v1369
        %v1372 = vshrl.u32 %v1280, 16
        %v1374 = vrot.slane %v1372, 4
        %v1375 = vshll.u32 %v1280, 16
        %v1377 = vrot.slane %v1375, 5
        %v1378 = vor.u32 %v1374, %v1377
        %v1379 = vrot.slane %v1378, 4
        %v1381 = vshll.u32 %v1281, 16
        %v1383 = vrot.slane %v1381, 5
        %v1384 = vsel %vm1286, %v1379, %v1383
        %v1386 = vshrl.u32 %v1282, 16
        %v1388 = vrot.slane %v1386, 4
        %v1389 = vshll.u32 %v1282, 16
        %v1391 = vrot.slane %v1389, 5
        %v1392 = vor.u32 %v1388, %v1391
        %v1393 = vrot.slane %v1392, 4
        %v1395 = vshll.u32 %v1283, 16
        %v1397 = vrot.slane %v1395, 5
        %v1398 = vsel %vm1286, %v1393, %v1397
        %s1399 = scalar_lea.vmem %s3, 64
        %v1400 = vld [vmem:[%s1399] sm:$0xf]
        %v1401 = vld [vmem:[%s1399 + $0x4] sm:$0xf]
        %v1402 = vld [vmem:[%s1399 + $0x8] sm:$0xf]
        %v1403 = vld [vmem:[%s1399 + $0xc] sm:$0xf]
        %v1404 = vld [vmem:[%s1399 + $0x10] sm:$0xf]
        %v1405 = vld [vmem:[%s1399 + $0x14] sm:$0xf]
        %v1406 = vld [vmem:[%s1399 + $0x18] sm:$0xf]
        %v1407 = vld [vmem:[%s1399 + $0x1c] sm:$0xf]
        %v1408 = vunpack.c.l.b16 %v1300
        %v1409 = vunpack.c.l.b16 %v1314
        %v1410 = vunpack.c.l.b16 %v1328
        %v1411 = vunpack.c.l.b16 %v1342
        %v1412 = vunpack.c.l.b16 %v1356
        %v1413 = vunpack.c.l.b16 %v1370
        %v1414 = vunpack.c.l.b16 %v1384
        %v1415 = vunpack.c.l.b16 %v1398
        %v1416 = vpack.c.b16 %v1409, %v1408
        %v1417 = vpack.c.b16 %v1411, %v1410
        %v1418 = vpack.c.b16 %v1413, %v1412
        %v1419 = vpack.c.b16 %v1415, %v1414
        %v1428 = vunpack.c.l.b16 %v1400
        %v1429 = vunpack.c.l.b16 %v1401
        %v1430 = vunpack.c.l.b16 %v1402
        %v1431 = vunpack.c.l.b16 %v1403
        %v1432 = vunpack.c.l.b16 %v1404
        %v1433 = vunpack.c.l.b16 %v1405
        %v1434 = vunpack.c.l.b16 %v1406
        %v1435 = vunpack.c.l.b16 %v1407
        %v1436 = vpack.c.b16 %v1429, %v1428
        %v1437 = vpack.c.b16 %v1431, %v1430
        %v1438 = vpack.c.b16 %v1433, %v1432
        %v1439 = vpack.c.b16 %v1435, %v1434
        %v1445 = vsel %vm1061, %v1416, 0
        %v1448 = vsel %vm1061, %v1417, 0
        %v1451 = vsel %vm1061, %v1418, 0
        %v1454 = vsel %vm1061, %v1419, 0
        %1456 = vmatprep.subr.bf16.mxu0 0
        %1457 = vmatpush1.bf16.msra.mxu0 %v1436
        %1458 = vmatprep.subr.bf16.mxu0 0
        %1459 = vmatpush1.bf16.msra.mxu0 %v1437
        %1460 = vmatprep.subr.bf16.mxu0 0
        %1461 = vmatpush1.bf16.msra.mxu0 %v1438
        %1462 = vmatprep.subr.bf16.mxu0 0
        %1463 = vmatpush1.bf16.msra.mxu0 %v1439
        %1464 = vmatprep.subr.bf16.mxu0 0
        %1465 = vmatpush1.bf16.msra.mxu0 0
        %1466 = vmatprep.subr.bf16.mxu0 0
        %1467 = vmatpush1.bf16.msra.mxu0 0
        %1468 = vmatprep.subr.bf16.mxu0 0
        %1469 = vmatpush1.bf16.msra.mxu0 0
        %1470 = vmatprep.subr.bf16.mxu0 0
        %1471 = vmatpush1.bf16.msra.mxu0 0
        %1472 = vmatprep.subr.bf16.mxu0 0
        %1473 = vmatpush1.bf16.msra.mxu0 0
        %1474 = vmatprep.subr.bf16.mxu0 0
        %1475 = vmatpush1.bf16.msra.mxu0 0
        %1476 = vmatprep.subr.bf16.mxu0 0
        %1477 = vmatpush1.bf16.msra.mxu0 0
        %1478 = vmatprep.subr.bf16.mxu0 0
        %1479 = vmatpush1.bf16.msra.mxu0 0
        %1480 = vmatprep.subr.bf16.mxu0 0
        %1481 = vmatpush1.bf16.msra.mxu0 0
        %1482 = vmatprep.subr.bf16.mxu0 0
        %1483 = vmatpush1.bf16.msra.mxu0 0
        %1484 = vmatprep.subr.bf16.mxu0 0
        %1485 = vmatpush1.bf16.msra.mxu0 0
        %1486 = vmatprep.subr.bf16.mxu0 0
        %1487 = vmatpush1.bf16.msra.mxu0 0
        %1488 = vmatprep.mubr.bf16.mxu0 0
        %1489 = vmatmul.mubr.bf16.gmra.mrb[0].mxu0 %v1445
        %v1490 = vpop.f32.mrb[0].mxu0
        %v1491 = vadd.f32 0.0, %v1490
        %v1492 = vpop.f32.mrb[0].mxu0
        %v1493 = vpop.f32.mrb[0].mxu0
        %v1494 = vadd.f32 0.0, %v1493
        %v1495 = vpop.f32.mrb[0].mxu0
        %1496 = vmatprep.mubr.bf16.mxu0 0
        %1497 = vmatmul.mubr.bf16.gmra.mrb[0].mxu0 %v1448
        %v1498 = vpop.f32.mrb[0].mxu0
        %v1499 = vadd.f32 0.0, %v1498
        %v1500 = vpop.f32.mrb[0].mxu0
        %v1501 = vpop.f32.mrb[0].mxu0
        %v1502 = vadd.f32 0.0, %v1501
        %v1503 = vpop.f32.mrb[0].mxu0
        %1504 = vmatprep.mubr.bf16.mxu0 0
        %1505 = vmatmul.mubr.bf16.gmra.mrb[0].mxu0 %v1451
        %v1506 = vpop.f32.mrb[0].mxu0
        %v1507 = vadd.f32 0.0, %v1506
        %v1508 = vpop.f32.mrb[0].mxu0
        %v1509 = vpop.f32.mrb[0].mxu0
        %v1510 = vadd.f32 0.0, %v1509
        %v1511 = vpop.f32.mrb[0].mxu0
        %1512 = vmatprep.mubr.bf16.mxu0 0
        %1513 = vmatmul.mubr.bf16.gmra.mrb[0].mxu0 %v1454
        %v1514 = vpop.f32.mrb[0].mxu0
        %v1515 = vadd.f32 0.0, %v1514
        %v1516 = vpop.f32.mrb[0].mxu0
        %v1517 = vpop.f32.mrb[0].mxu0
        %v1518 = vadd.f32 0.0, %v1517
        %v1519 = vpop.f32.mrb[0].mxu0
        %1520 = vdwg.mxu0
        %v1521 = vadd.f32 %v1230, %v1491
        %v1522 = vadd.f32 %v1233, %v1494
        %v1523 = vadd.f32 %v1238, %v1499
        %v1524 = vadd.f32 %v1241, %v1502
        %v1525 = vadd.f32 %v1246, %v1507
        %v1526 = vadd.f32 %v1249, %v1510
        %v1527 = vadd.f32 %v1254, %v1515
        %v1528 = vadd.f32 %v1257, %v1518
        %s1529 = scalar_lea.vmem %s3, 96
        %v1530 = vld [vmem:[%s1529] sm:$0xf]
        %v1531 = vld [vmem:[%s1529 + $0x4] sm:$0xf]
        %v1532 = vld [vmem:[%s1529 + $0x8] sm:$0xf]
        %v1533 = vld [vmem:[%s1529 + $0xc] sm:$0xf]
        %v1534 = vld [vmem:[%s1529 + $0x10] sm:$0xf]
        %v1535 = vld [vmem:[%s1529 + $0x14] sm:$0xf]
        %v1536 = vld [vmem:[%s1529 + $0x18] sm:$0xf]
        %v1537 = vld [vmem:[%s1529 + $0x1c] sm:$0xf]
        %v1546 = vunpack.c.l.b16 %v925
        %v1547 = vunpack.c.l.b16 %v926
        %v1548 = vunpack.c.l.b16 %v927
        %v1549 = vunpack.c.l.b16 %v928
        %v1550 = vunpack.c.l.b16 %v929
        %v1551 = vunpack.c.l.b16 %v930
        %v1552 = vunpack.c.l.b16 %v931
        %v1553 = vunpack.c.l.b16 %v932
        %v1554 = vpack.c.b16 %v1547, %v1546
        %v1555 = vpack.c.b16 %v1549, %v1548
        %v1556 = vpack.c.b16 %v1551, %v1550
        %v1557 = vpack.c.b16 %v1553, %v1552
        %v1566 = vunpack.c.l.b16 %v1530
        %v1567 = vunpack.c.l.b16 %v1531
        %v1568 = vunpack.c.l.b16 %v1532
        %v1569 = vunpack.c.l.b16 %v1533
        %v1570 = vunpack.c.l.b16 %v1534
        %v1571 = vunpack.c.l.b16 %v1535
        %v1572 = vunpack.c.l.b16 %v1536
        %v1573 = vunpack.c.l.b16 %v1537
        %v1574 = vpack.c.b16 %v1567, %v1566
        %v1575 = vpack.c.b16 %v1569, %v1568
        %v1576 = vpack.c.b16 %v1571, %v1570
        %v1577 = vpack.c.b16 %v1573, %v1572
        %v1583 = vsel %vm1061, %v1554, 0
        %v1586 = vsel %vm1061, %v1555, 0
        %v1589 = vsel %vm1061, %v1556, 0
        %v1592 = vsel %vm1061, %v1557, 0
        %1594 = vmatprep.subr.bf16.mxu0 0
        %1595 = vmatpush1.bf16.msra.mxu0 %v1574
        %1596 = vmatprep.subr.bf16.mxu0 0
        %1597 = vmatpush1.bf16.msra.mxu0 %v1575
        %1598 = vmatprep.subr.bf16.mxu0 0
        %1599 = vmatpush1.bf16.msra.mxu0 %v1576
        %1600 = vmatprep.subr.bf16.mxu0 0
        %1601 = vmatpush1.bf16.msra.mxu0 %v1577
        %1602 = vmatprep.subr.bf16.mxu0 0
        %1603 = vmatpush1.bf16.msra.mxu0 0
        %1604 = vmatprep.subr.bf16.mxu0 0
        %1605 = vmatpush1.bf16.msra.mxu0 0
        %1606 = vmatprep.subr.bf16.mxu0 0
        %1607 = vmatpush1.bf16.msra.mxu0 0
        %1608 = vmatprep.subr.bf16.mxu0 0
        %1609 = vmatpush1.bf16.msra.mxu0 0
        %1610 = vmatprep.subr.bf16.mxu0 0
        %1611 = vmatpush1.bf16.msra.mxu0 0
        %1612 = vmatprep.subr.bf16.mxu0 0
        %1613 = vmatpush1.bf16.msra.mxu0 0
        %1614 = vmatprep.subr.bf16.mxu0 0
        %1615 = vmatpush1.bf16.msra.mxu0 0
        %1616 = vmatprep.subr.bf16.mxu0 0
        %1617 = vmatpush1.bf16.msra.mxu0 0
        %1618 = vmatprep.subr.bf16.mxu0 0
        %1619 = vmatpush1.bf16.msra.mxu0 0
        %1620 = vmatprep.subr.bf16.mxu0 0
        %1621 = vmatpush1.bf16.msra.mxu0 0
        %1622 = vmatprep.subr.bf16.mxu0 0
        %1623 = vmatpush1.bf16.msra.mxu0 0
        %1624 = vmatprep.subr.bf16.mxu0 0
        %1625 = vmatpush1.bf16.msra.mxu0 0
        %1626 = vmatprep.mubr.bf16.mxu0 0
        %1627 = vmatmul.mubr.bf16.gmra.mrb[0].mxu0 %v1583
        %v1628 = vpop.f32.mrb[0].mxu0
        %v1629 = vadd.f32 0.0, %v1628
        %v1630 = vpop.f32.mrb[0].mxu0
        %v1631 = vpop.f32.mrb[0].mxu0
        %v1632 = vadd.f32 0.0, %v1631
        %v1633 = vpop.f32.mrb[0].mxu0
        %1634 = vmatprep.mubr.bf16.mxu0 0
        %1635 = vmatmul.mubr.bf16.gmra.mrb[0].mxu0 %v1586
        %v1636 = vpop.f32.mrb[0].mxu0
        %v1637 = vadd.f32 0.0, %v1636
        %v1638 = vpop.f32.mrb[0].mxu0
        %v1639 = vpop.f32.mrb[0].mxu0
        %v1640 = vadd.f32 0.0, %v1639
        %v1641 = vpop.f32.mrb[0].mxu0
        %1642 = vmatprep.mubr.bf16.mxu0 0
        %1643 = vmatmul.mubr.bf16.gmra.mrb[0].mxu0 %v1589
        %v1644 = vpop.f32.mrb[0].mxu0
        %v1645 = vadd.f32 0.0, %v1644
        %v1646 = vpop.f32.mrb[0].mxu0
        %v1647 = vpop.f32.mrb[0].mxu0
        %v1648 = vadd.f32 0.0, %v1647
        %v1649 = vpop.f32.mrb[0].mxu0
        %1650 = vmatprep.mubr.bf16.mxu0 0
        %1651 = vmatmul.mubr.bf16.gmra.mrb[0].mxu0 %v1592
        %v1652 = vpop.f32.mrb[0].mxu0
        %v1653 = vadd.f32 0.0, %v1652
        %v1654 = vpop.f32.mrb[0].mxu0
        %v1655 = vpop.f32.mrb[0].mxu0
        %v1656 = vadd.f32 0.0, %v1655
        %v1657 = vpop.f32.mrb[0].mxu0
        %1658 = vdwg.mxu0
        %v1659 = vadd.f32 %v1521, %v1629
        %v1660 = vadd.f32 %v1522, %v1632
        %v1661 = vadd.f32 %v1523, %v1637
        %v1662 = vadd.f32 %v1524, %v1640
        %v1663 = vadd.f32 %v1525, %v1645
        %v1664 = vadd.f32 %v1526, %v1648
        %v1665 = vadd.f32 %v1527, %v1653
        %v1666 = vadd.f32 %v1528, %v1656
        %s1667 = scalar_lea.vmem %s3, 128
        %v1668 = vld [vmem:[%s1667] sm:$0xf]
        %v1669 = vld [vmem:[%s1667 + $0x4] sm:$0xf]
        %v1670 = vld [vmem:[%s1667 + $0x8] sm:$0xf]
        %v1671 = vld [vmem:[%s1667 + $0xc] sm:$0xf]
        %v1672 = vld [vmem:[%s1667 + $0x10] sm:$0xf]
        %v1673 = vld [vmem:[%s1667 + $0x14] sm:$0xf]
        %v1674 = vld [vmem:[%s1667 + $0x18] sm:$0xf]
        %v1675 = vld [vmem:[%s1667 + $0x1c] sm:$0xf]
        %v1684 = vunpack.c.l.b16 %v1668
        %v1685 = vunpack.c.l.b16 %v1669
        %v1686 = vunpack.c.l.b16 %v1670
        %v1687 = vunpack.c.l.b16 %v1671
        %v1688 = vunpack.c.l.b16 %v1672
        %v1689 = vunpack.c.l.b16 %v1673
        %v1690 = vunpack.c.l.b16 %v1674
        %v1691 = vunpack.c.l.b16 %v1675
        %v1692 = vpack.c.b16 %v1685, %v1684
        %v1693 = vpack.c.b16 %v1687, %v1686
        %v1694 = vpack.c.b16 %v1689, %v1688
        %v1695 = vpack.c.b16 %v1691, %v1690
        %v1701 = vsel %vm1061, %v790, 0
        %v1704 = vsel %vm1061, %v791, 0
        %v1707 = vsel %vm1061, %v792, 0
        %v1710 = vsel %vm1061, %v793, 0
        %1712 = vmatprep.subr.bf16.mxu0 0
        %1713 = vmatpush1.bf16.msra.mxu0 %v1692
        %1714 = vmatprep.subr.bf16.mxu0 0
        %1715 = vmatpush1.bf16.msra.mxu0 %v1693
        %1716 = vmatprep.subr.bf16.mxu0 0
        %1717 = vmatpush1.bf16.msra.mxu0 %v1694
        %1718 = vmatprep.subr.bf16.mxu0 0
        %1719 = vmatpush1.bf16.msra.mxu0 %v1695
        %1720 = vmatprep.subr.bf16.mxu0 0
        %1721 = vmatpush1.bf16.msra.mxu0 0
        %1722 = vmatprep.subr.bf16.mxu0 0
        %1723 = vmatpush1.bf16.msra.mxu0 0
        %1724 = vmatprep.subr.bf16.mxu0 0
        %1725 = vmatpush1.bf16.msra.mxu0 0
        %1726 = vmatprep.subr.bf16.mxu0 0
        %1727 = vmatpush1.bf16.msra.mxu0 0
        %1728 = vmatprep.subr.bf16.mxu0 0
        %1729 = vmatpush1.bf16.msra.mxu0 0
        %1730 = vmatprep.subr.bf16.mxu0 0
        %1731 = vmatpush1.bf16.msra.mxu0 0
        %1732 = vmatprep.subr.bf16.mxu0 0
        %1733 = vmatpush1.bf16.msra.mxu0 0
        %1734 = vmatprep.subr.bf16.mxu0 0
        %1735 = vmatpush1.bf16.msra.mxu0 0
        %1736 = vmatprep.subr.bf16.mxu0 0
        %1737 = vmatpush1.bf16.msra.mxu0 0
        %1738 = vmatprep.subr.bf16.mxu0 0
        %1739 = vmatpush1.bf16.msra.mxu0 0
        %1740 = vmatprep.subr.bf16.mxu0 0
        %1741 = vmatpush1.bf16.msra.mxu0 0
        %1742 = vmatprep.subr.bf16.mxu0 0
        %1743 = vmatpush1.bf16.msra.mxu0 0
        %1744 = vmatprep.mubr.bf16.mxu0 0
        %1745 = vmatmul.mubr.bf16.gmra.mrb[0].mxu0 %v1701
        %v1746 = vpop.f32.mrb[0].mxu0
        %v1747 = vadd.f32 0.0, %v1746
        %v1748 = vpop.f32.mrb[0].mxu0
        %v1749 = vpop.f32.mrb[0].mxu0
        %v1750 = vadd.f32 0.0, %v1749
        %v1751 = vpop.f32.mrb[0].mxu0
        %1752 = vmatprep.mubr.bf16.mxu0 0
        %1753 = vmatmul.mubr.bf16.gmra.mrb[0].mxu0 %v1704
        %v1754 = vpop.f32.mrb[0].mxu0
        %v1755 = vadd.f32 0.0, %v1754
        %v1756 = vpop.f32.mrb[0].mxu0
        %v1757 = vpop.f32.mrb[0].mxu0
        %v1758 = vadd.f32 0.0, %v1757
        %v1759 = vpop.f32.mrb[0].mxu0
        %1760 = vmatprep.mubr.bf16.mxu0 0
        %1761 = vmatmul.mubr.bf16.gmra.mrb[0].mxu0 %v1707
        %v1762 = vpop.f32.mrb[0].mxu0
        %v1763 = vadd.f32 0.0, %v1762
        %v1764 = vpop.f32.mrb[0].mxu0
        %v1765 = vpop.f32.mrb[0].mxu0
        %v1766 = vadd.f32 0.0, %v1765
        %v1767 = vpop.f32.mrb[0].mxu0
        %1768 = vmatprep.mubr.bf16.mxu0 0
        %1769 = vmatmul.mubr.bf16.gmra.mrb[0].mxu0 %v1710
        %v1770 = vpop.f32.mrb[0].mxu0
        %v1771 = vadd.f32 0.0, %v1770
        %v1772 = vpop.f32.mrb[0].mxu0
        %v1773 = vpop.f32.mrb[0].mxu0
        %v1774 = vadd.f32 0.0, %v1773
        %v1775 = vpop.f32.mrb[0].mxu0
        %1776 = vdwg.mxu0
        %v1777 = vadd.f32 %v1659, %v1747
        %v1778 = vadd.f32 %v1660, %v1750
        %v1779 = vadd.f32 %v1661, %v1755
        %v1780 = vadd.f32 %v1662, %v1758
        %v1781 = vadd.f32 %v1663, %v1763
        %v1782 = vadd.f32 %v1664, %v1766
        %v1783 = vadd.f32 %v1665, %v1771
        %v1784 = vadd.f32 %v1666, %v1774
        %v1785 = vunpack.c.h.b16 %v925
        %v1786 = vunpack.c.h.b16 %v926
        %v1787 = vunpack.c.h.b16 %v927
        %v1788 = vunpack.c.h.b16 %v928
        %v1789 = vunpack.c.h.b16 %v929
        %v1790 = vunpack.c.h.b16 %v930
        %v1791 = vunpack.c.h.b16 %v931
        %v1792 = vunpack.c.h.b16 %v932
        %v1793 = vpack.c.b16 %v1546, %v1546
        %v1794 = vpack.c.b16 %v1785, %v1785
        %v1795 = vpack.c.b16 %v1547, %v1547
        %v1796 = vpack.c.b16 %v1786, %v1786
        %v1797 = vpack.c.b16 %v1548, %v1548
        %v1798 = vpack.c.b16 %v1787, %v1787
        %v1799 = vpack.c.b16 %v1549, %v1549
        %v1800 = vpack.c.b16 %v1788, %v1788
        %v1801 = vpack.c.b16 %v1550, %v1550
        %v1802 = vpack.c.b16 %v1789, %v1789
        %v1803 = vpack.c.b16 %v1551, %v1551
        %v1804 = vpack.c.b16 %v1790, %v1790
        %v1805 = vpack.c.b16 %v1552, %v1552
        %v1806 = vpack.c.b16 %v1791, %v1791
        %v1807 = vpack.c.b16 %v1553, %v1553
        %v1808 = vpack.c.b16 %v1792, %v1792
        %v1810 = vshrl.u32 %v1793, 16
        %v1812 = vrot.slane %v1810, 4
        %v1813 = vshll.u32 %v1793, 16
        %v1815 = vrot.slane %v1813, 5
        %v1816 = vor.u32 %v1812, %v1815
        %v1817 = vrot.slane %v1816, 4
        %v1819 = vshll.u32 %v1794, 16
        %v1821 = vrot.slane %v1819, 5
        %v1822 = vsel %vm1286, %v1817, %v1821
        %v1824 = vshrl.u32 %v1795, 16
        %v1826 = vrot.slane %v1824, 4
        %v1827 = vshll.u32 %v1795, 16
        %v1829 = vrot.slane %v1827, 5
        %v1830 = vor.u32 %v1826, %v1829
        %v1831 = vrot.slane %v1830, 4
        %v1833 = vshll.u32 %v1796, 16
        %v1835 = vrot.slane %v1833, 5
        %v1836 = vsel %vm1286, %v1831, %v1835
        %v1838 = vshrl.u32 %v1797, 16
        %v1840 = vrot.slane %v1838, 4
        %v1841 = vshll.u32 %v1797, 16
        %v1843 = vrot.slane %v1841, 5
        %v1844 = vor.u32 %v1840, %v1843
        %v1845 = vrot.slane %v1844, 4
        %v1847 = vshll.u32 %v1798, 16
        %v1849 = vrot.slane %v1847, 5
        %v1850 = vsel %vm1286, %v1845, %v1849
        %v1852 = vshrl.u32 %v1799, 16
        %v1854 = vrot.slane %v1852, 4
        %v1855 = vshll.u32 %v1799, 16
        %v1857 = vrot.slane %v1855, 5
        %v1858 = vor.u32 %v1854, %v1857
        %v1859 = vrot.slane %v1858, 4
        %v1861 = vshll.u32 %v1800, 16
        %v1863 = vrot.slane %v1861, 5
        %v1864 = vsel %vm1286, %v1859, %v1863
        %v1866 = vshrl.u32 %v1801, 16
        %v1868 = vrot.slane %v1866, 4
        %v1869 = vshll.u32 %v1801, 16
        %v1871 = vrot.slane %v1869, 5
        %v1872 = vor.u32 %v1868, %v1871
        %v1873 = vrot.slane %v1872, 4
        %v1875 = vshll.u32 %v1802, 16
        %v1877 = vrot.slane %v1875, 5
        %v1878 = vsel %vm1286, %v1873, %v1877
        %v1880 = vshrl.u32 %v1803, 16
        %v1882 = vrot.slane %v1880, 4
        %v1883 = vshll.u32 %v1803, 16
        %v1885 = vrot.slane %v1883, 5
        %v1886 = vor.u32 %v1882, %v1885
        %v1887 = vrot.slane %v1886, 4
        %v1889 = vshll.u32 %v1804, 16
        %v1891 = vrot.slane %v1889, 5
        %v1892 = vsel %vm1286, %v1887, %v1891
        %v1894 = vshrl.u32 %v1805, 16
        %v1896 = vrot.slane %v1894, 4
        %v1897 = vshll.u32 %v1805, 16
        %v1899 = vrot.slane %v1897, 5
        %v1900 = vor.u32 %v1896, %v1899
        %v1901 = vrot.slane %v1900, 4
        %v1903 = vshll.u32 %v1806, 16
        %v1905 = vrot.slane %v1903, 5
        %v1906 = vsel %vm1286, %v1901, %v1905
        %v1908 = vshrl.u32 %v1807, 16
        %v1910 = vrot.slane %v1908, 4
        %v1911 = vshll.u32 %v1807, 16
        %v1913 = vrot.slane %v1911, 5
        %v1914 = vor.u32 %v1910, %v1913
        %v1915 = vrot.slane %v1914, 4
        %v1917 = vshll.u32 %v1808, 16
        %v1919 = vrot.slane %v1917, 5
        %v1920 = vsel %vm1286, %v1915, %v1919
        %s1921 = scalar_lea.vmem %s3, 160
        %v1922 = vld [vmem:[%s1921] sm:$0xf]
        %v1923 = vld [vmem:[%s1921 + $0x4] sm:$0xf]
        %v1924 = vld [vmem:[%s1921 + $0x8] sm:$0xf]
        %v1925 = vld [vmem:[%s1921 + $0xc] sm:$0xf]
        %v1926 = vld [vmem:[%s1921 + $0x10] sm:$0xf]
        %v1927 = vld [vmem:[%s1921 + $0x14] sm:$0xf]
        %v1928 = vld [vmem:[%s1921 + $0x18] sm:$0xf]
        %v1929 = vld [vmem:[%s1921 + $0x1c] sm:$0xf]
        %v1930 = vunpack.c.l.b16 %v1822
        %v1931 = vunpack.c.l.b16 %v1836
        %v1932 = vunpack.c.l.b16 %v1850
        %v1933 = vunpack.c.l.b16 %v1864
        %v1934 = vunpack.c.l.b16 %v1878
        %v1935 = vunpack.c.l.b16 %v1892
        %v1936 = vunpack.c.l.b16 %v1906
        %v1937 = vunpack.c.l.b16 %v1920
        %v1938 = vpack.c.b16 %v1931, %v1930
        %v1939 = vpack.c.b16 %v1933, %v1932
        %v1940 = vpack.c.b16 %v1935, %v1934
        %v1941 = vpack.c.b16 %v1937, %v1936
        %v1950 = vunpack.c.l.b16 %v1922
        %v1951 = vunpack.c.l.b16 %v1923
        %v1952 = vunpack.c.l.b16 %v1924
        %v1953 = vunpack.c.l.b16 %v1925
        %v1954 = vunpack.c.l.b16 %v1926
        %v1955 = vunpack.c.l.b16 %v1927
        %v1956 = vunpack.c.l.b16 %v1928
        %v1957 = vunpack.c.l.b16 %v1929
        %v1958 = vpack.c.b16 %v1951, %v1950
        %v1959 = vpack.c.b16 %v1953, %v1952
        %v1960 = vpack.c.b16 %v1955, %v1954
        %v1961 = vpack.c.b16 %v1957, %v1956
        %v1967 = vsel %vm1061, %v1938, 0
        %v1970 = vsel %vm1061, %v1939, 0
        %v1973 = vsel %vm1061, %v1940, 0
        %v1976 = vsel %vm1061, %v1941, 0
        %1978 = vmatprep.subr.bf16.mxu0 0
        %1979 = vmatpush1.bf16.msra.mxu0 %v1958
        %1980 = vmatprep.subr.bf16.mxu0 0
        %1981 = vmatpush1.bf16.msra.mxu0 %v1959
        %1982 = vmatprep.subr.bf16.mxu0 0
        %1983 = vmatpush1.bf16.msra.mxu0 %v1960
        %1984 = vmatprep.subr.bf16.mxu0 0
        %1985 = vmatpush1.bf16.msra.mxu0 %v1961
        %1986 = vmatprep.subr.bf16.mxu0 0
        %1987 = vmatpush1.bf16.msra.mxu0 0
        %1988 = vmatprep.subr.bf16.mxu0 0
        %1989 = vmatpush1.bf16.msra.mxu0 0
        %1990 = vmatprep.subr.bf16.mxu0 0
        %1991 = vmatpush1.bf16.msra.mxu0 0
        %1992 = vmatprep.subr.bf16.mxu0 0
        %1993 = vmatpush1.bf16.msra.mxu0 0
        %1994 = vmatprep.subr.bf16.mxu0 0
        %1995 = vmatpush1.bf16.msra.mxu0 0
        %1996 = vmatprep.subr.bf16.mxu0 0
        %1997 = vmatpush1.bf16.msra.mxu0 0
        %1998 = vmatprep.subr.bf16.mxu0 0
        %1999 = vmatpush1.bf16.msra.mxu0 0
        %2000 = vmatprep.subr.bf16.mxu0 0
        %2001 = vmatpush1.bf16.msra.mxu0 0
        %2002 = vmatprep.subr.bf16.mxu0 0
        %2003 = vmatpush1.bf16.msra.mxu0 0
        %2004 = vmatprep.subr.bf16.mxu0 0
        %2005 = vmatpush1.bf16.msra.mxu0 0
        %2006 = vmatprep.subr.bf16.mxu0 0
        %2007 = vmatpush1.bf16.msra.mxu0 0
        %2008 = vmatprep.subr.bf16.mxu0 0
        %2009 = vmatpush1.bf16.msra.mxu0 0
        %2010 = vmatprep.mubr.bf16.mxu0 0
        %2011 = vmatmul.mubr.bf16.gmra.mrb[0].mxu0 %v1967
        %v2012 = vpop.f32.mrb[0].mxu0
        %v2013 = vadd.f32 0.0, %v2012
        %v2014 = vpop.f32.mrb[0].mxu0
        %v2015 = vpop.f32.mrb[0].mxu0
        %v2016 = vadd.f32 0.0, %v2015
        %v2017 = vpop.f32.mrb[0].mxu0
        %2018 = vmatprep.mubr.bf16.mxu0 0
        %2019 = vmatmul.mubr.bf16.gmra.mrb[0].mxu0 %v1970
        %v2020 = vpop.f32.mrb[0].mxu0
        %v2021 = vadd.f32 0.0, %v2020
        %v2022 = vpop.f32.mrb[0].mxu0
        %v2023 = vpop.f32.mrb[0].mxu0
        %v2024 = vadd.f32 0.0, %v2023
        %v2025 = vpop.f32.mrb[0].mxu0
        %2026 = vmatprep.mubr.bf16.mxu0 0
        %2027 = vmatmul.mubr.bf16.gmra.mrb[0].mxu0 %v1973
        %v2028 = vpop.f32.mrb[0].mxu0
        %v2029 = vadd.f32 0.0, %v2028
        %v2030 = vpop.f32.mrb[0].mxu0
        %v2031 = vpop.f32.mrb[0].mxu0
        %v2032 = vadd.f32 0.0, %v2031
        %v2033 = vpop.f32.mrb[0].mxu0
        %2034 = vmatprep.mubr.bf16.mxu0 0
        %2035 = vmatmul.mubr.bf16.gmra.mrb[0].mxu0 %v1976
        %v2036 = vpop.f32.mrb[0].mxu0
        %v2037 = vadd.f32 0.0, %v2036
        %v2038 = vpop.f32.mrb[0].mxu0
        %v2039 = vpop.f32.mrb[0].mxu0
        %v2040 = vadd.f32 0.0, %v2039
        %v2041 = vpop.f32.mrb[0].mxu0
        %2042 = vdwg.mxu0
        %v2043 = vadd.f32 %v1777, %v2013
        %v2044 = vadd.f32 %v1778, %v2016
        %v2045 = vadd.f32 %v1779, %v2021
        %v2046 = vadd.f32 %v1780, %v2024
        %v2047 = vadd.f32 %v1781, %v2029
        %v2048 = vadd.f32 %v1782, %v2032
        %v2049 = vadd.f32 %v1783, %v2037
        %v2050 = vadd.f32 %v1784, %v2040
        %s2051 = scalar_lea.vmem %s3, 192
        %v2052 = vld [vmem:[%s2051] sm:$0xf]
        %v2053 = vld [vmem:[%s2051 + $0x4] sm:$0xf]
        %v2054 = vld [vmem:[%s2051 + $0x8] sm:$0xf]
        %v2055 = vld [vmem:[%s2051 + $0xc] sm:$0xf]
        %v2056 = vld [vmem:[%s2051 + $0x10] sm:$0xf]
        %v2057 = vld [vmem:[%s2051 + $0x14] sm:$0xf]
        %v2058 = vld [vmem:[%s2051 + $0x18] sm:$0xf]
        %v2059 = vld [vmem:[%s2051 + $0x1c] sm:$0xf]
        %v2061 = vunpack.c.l.b16 %v1013
        %v2062 = vpack.c.b16 %v1149, %v1148
        %v2063 = vpack.c.b16 %v1151, %v1150
        %v2064 = vpack.c.b16 %v1153, %v1152
        %v2065 = vpack.c.b16 %v2061, %v1154
        %v2074 = vunpack.c.l.b16 %v2052
        %v2075 = vunpack.c.l.b16 %v2053
        %v2076 = vunpack.c.l.b16 %v2054
        %v2077 = vunpack.c.l.b16 %v2055
        %v2078 = vunpack.c.l.b16 %v2056
        %v2079 = vunpack.c.l.b16 %v2057
        %v2080 = vunpack.c.l.b16 %v2058
        %v2081 = vunpack.c.l.b16 %v2059
        %v2082 = vpack.c.b16 %v2075, %v2074
        %v2083 = vpack.c.b16 %v2077, %v2076
        %v2084 = vpack.c.b16 %v2079, %v2078
        %v2085 = vpack.c.b16 %v2081, %v2080
        %v2091 = vsel %vm1061, %v2062, 0
        %v2094 = vsel %vm1061, %v2063, 0
        %v2097 = vsel %vm1061, %v2064, 0
        %v2100 = vsel %vm1061, %v2065, 0
        %2102 = vmatprep.subr.bf16.mxu0 0
        %2103 = vmatpush1.bf16.msra.mxu0 %v2082
        %2104 = vmatprep.subr.bf16.mxu0 0
        %2105 = vmatpush1.bf16.msra.mxu0 %v2083
        %2106 = vmatprep.subr.bf16.mxu0 0
        %2107 = vmatpush1.bf16.msra.mxu0 %v2084
        %2108 = vmatprep.subr.bf16.mxu0 0
        %2109 = vmatpush1.bf16.msra.mxu0 %v2085
        %2110 = vmatprep.subr.bf16.mxu0 0
        %2111 = vmatpush1.bf16.msra.mxu0 0
        %2112 = vmatprep.subr.bf16.mxu0 0
        %2113 = vmatpush1.bf16.msra.mxu0 0
        %2114 = vmatprep.subr.bf16.mxu0 0
        %2115 = vmatpush1.bf16.msra.mxu0 0
        %2116 = vmatprep.subr.bf16.mxu0 0
        %2117 = vmatpush1.bf16.msra.mxu0 0
        %2118 = vmatprep.subr.bf16.mxu0 0
        %2119 = vmatpush1.bf16.msra.mxu0 0
        %2120 = vmatprep.subr.bf16.mxu0 0
        %2121 = vmatpush1.bf16.msra.mxu0 0
        %2122 = vmatprep.subr.bf16.mxu0 0
        %2123 = vmatpush1.bf16.msra.mxu0 0
        %2124 = vmatprep.subr.bf16.mxu0 0
        %2125 = vmatpush1.bf16.msra.mxu0 0
        %2126 = vmatprep.subr.bf16.mxu0 0
        %2127 = vmatpush1.bf16.msra.mxu0 0
        %2128 = vmatprep.subr.bf16.mxu0 0
        %2129 = vmatpush1.bf16.msra.mxu0 0
        %2130 = vmatprep.subr.bf16.mxu0 0
        %2131 = vmatpush1.bf16.msra.mxu0 0
        %2132 = vmatprep.subr.bf16.mxu0 0
        %2133 = vmatpush1.bf16.msra.mxu0 0
        %2134 = vmatprep.mubr.bf16.mxu0 0
        %2135 = vmatmul.mubr.bf16.gmra.mrb[0].mxu0 %v2091
        %v2136 = vpop.f32.mrb[0].mxu0
        %v2137 = vadd.f32 0.0, %v2136
        %v2138 = vpop.f32.mrb[0].mxu0
        %v2139 = vpop.f32.mrb[0].mxu0
        %v2140 = vadd.f32 0.0, %v2139
        %v2141 = vpop.f32.mrb[0].mxu0
        %2142 = vmatprep.mubr.bf16.mxu0 0
        %2143 = vmatmul.mubr.bf16.gmra.mrb[0].mxu0 %v2094
        %v2144 = vpop.f32.mrb[0].mxu0
        %v2145 = vadd.f32 0.0, %v2144
        %v2146 = vpop.f32.mrb[0].mxu0
        %v2147 = vpop.f32.mrb[0].mxu0
        %v2148 = vadd.f32 0.0, %v2147
        %v2149 = vpop.f32.mrb[0].mxu0
        %2150 = vmatprep.mubr.bf16.mxu0 0
        %2151 = vmatmul.mubr.bf16.gmra.mrb[0].mxu0 %v2097
        %v2152 = vpop.f32.mrb[0].mxu0
        %v2153 = vadd.f32 0.0, %v2152
        %v2154 = vpop.f32.mrb[0].mxu0
        %v2155 = vpop.f32.mrb[0].mxu0
        %v2156 = vadd.f32 0.0, %v2155
        %v2157 = vpop.f32.mrb[0].mxu0
        %2158 = vmatprep.mubr.bf16.mxu0 0
        %2159 = vmatmul.mubr.bf16.gmra.mrb[0].mxu0 %v2100
        %v2160 = vpop.f32.mrb[0].mxu0
        %v2161 = vadd.f32 0.0, %v2160
        %v2162 = vpop.f32.mrb[0].mxu0
        %v2163 = vpop.f32.mrb[0].mxu0
        %v2164 = vadd.f32 0.0, %v2163
        %v2165 = vpop.f32.mrb[0].mxu0
        %2166 = vdwg.mxu0
        %v2167 = vadd.f32 %v2043, %v2137
        %v2168 = vadd.f32 %v2044, %v2140
        %v2169 = vadd.f32 %v2045, %v2145
        %v2170 = vadd.f32 %v2046, %v2148
        %v2171 = vadd.f32 %v2047, %v2153
        %v2172 = vadd.f32 %v2048, %v2156
        %v2173 = vadd.f32 %v2049, %v2161
        %v2174 = vadd.f32 %v2050, %v2164
        %s2175 = scalar_lea.vmem %s3, 224
        %v2176 = vld [vmem:[%s2175] sm:$0xf]
        %v2177 = vld [vmem:[%s2175 + $0x4] sm:$0xf]
        %v2178 = vld [vmem:[%s2175 + $0x8] sm:$0xf]
        %v2179 = vld [vmem:[%s2175 + $0xc] sm:$0xf]
        %v2180 = vld [vmem:[%s2175 + $0x10] sm:$0xf]
        %v2181 = vld [vmem:[%s2175 + $0x14] sm:$0xf]
        %v2182 = vld [vmem:[%s2175 + $0x18] sm:$0xf]
        %v2183 = vld [vmem:[%s2175 + $0x1c] sm:$0xf]
        %v2184 = vpack.c.b16 %v823, %v822
        %v2185 = vpack.c.b16 %v825, %v824
        %v2186 = vpack.c.b16 %v827, %v826
        %v2187 = vpack.c.b16 %v829, %v828
        %v2196 = vunpack.c.l.b16 %v2176
        %v2197 = vunpack.c.l.b16 %v2177
        %v2198 = vunpack.c.l.b16 %v2178
        %v2199 = vunpack.c.l.b16 %v2179
        %v2200 = vunpack.c.l.b16 %v2180
        %v2201 = vunpack.c.l.b16 %v2181
        %v2202 = vunpack.c.l.b16 %v2182
        %v2203 = vunpack.c.l.b16 %v2183
        %v2204 = vpack.c.b16 %v2197, %v2196
        %v2205 = vpack.c.b16 %v2199, %v2198
        %v2206 = vpack.c.b16 %v2201, %v2200
        %v2207 = vpack.c.b16 %v2203, %v2202
        %v2213 = vsel %vm1061, %v2184, 0
        %v2216 = vsel %vm1061, %v2185, 0
        %v2219 = vsel %vm1061, %v2186, 0
        %v2222 = vsel %vm1061, %v2187, 0
        %2224 = vmatprep.subr.bf16.mxu0 0
        %2225 = vmatpush1.bf16.msra.mxu0 %v2204
        %2226 = vmatprep.subr.bf16.mxu0 0
        %2227 = vmatpush1.bf16.msra.mxu0 %v2205
        %2228 = vmatprep.subr.bf16.mxu0 0
        %2229 = vmatpush1.bf16.msra.mxu0 %v2206
        %2230 = vmatprep.subr.bf16.mxu0 0
        %2231 = vmatpush1.bf16.msra.mxu0 %v2207
        %2232 = vmatprep.subr.bf16.mxu0 0
        %2233 = vmatpush1.bf16.msra.mxu0 0
        %2234 = vmatprep.subr.bf16.mxu0 0
        %2235 = vmatpush1.bf16.msra.mxu0 0
        %2236 = vmatprep.subr.bf16.mxu0 0
        %2237 = vmatpush1.bf16.msra.mxu0 0
        %2238 = vmatprep.subr.bf16.mxu0 0
        %2239 = vmatpush1.bf16.msra.mxu0 0
        %2240 = vmatprep.subr.bf16.mxu0 0
        %2241 = vmatpush1.bf16.msra.mxu0 0
        %2242 = vmatprep.subr.bf16.mxu0 0
        %2243 = vmatpush1.bf16.msra.mxu0 0
        %2244 = vmatprep.subr.bf16.mxu0 0
        %2245 = vmatpush1.bf16.msra.mxu0 0
        %2246 = vmatprep.subr.bf16.mxu0 0
        %2247 = vmatpush1.bf16.msra.mxu0 0
        %2248 = vmatprep.subr.bf16.mxu0 0
        %2249 = vmatpush1.bf16.msra.mxu0 0
        %2250 = vmatprep.subr.bf16.mxu0 0
        %2251 = vmatpush1.bf16.msra.mxu0 0
        %2252 = vmatprep.subr.bf16.mxu0 0
        %2253 = vmatpush1.bf16.msra.mxu0 0
        %2254 = vmatprep.subr.bf16.mxu0 0
        %2255 = vmatpush1.bf16.msra.mxu0 0
        %2256 = vmatprep.mubr.bf16.mxu0 0
        %2257 = vmatmul.mubr.bf16.gmra.mrb[0].mxu0 %v2213
        %v2258 = vpop.f32.mrb[0].mxu0
        %v2259 = vadd.f32 0.0, %v2258
        %v2260 = vpop.f32.mrb[0].mxu0
        %v2261 = vpop.f32.mrb[0].mxu0
        %v2262 = vadd.f32 0.0, %v2261
        %v2263 = vpop.f32.mrb[0].mxu0
        %2264 = vmatprep.mubr.bf16.mxu0 0
        %2265 = vmatmul.mubr.bf16.gmra.mrb[0].mxu0 %v2216
        %v2266 = vpop.f32.mrb[0].mxu0
        %v2267 = vadd.f32 0.0, %v2266
        %v2268 = vpop.f32.mrb[0].mxu0
        %v2269 = vpop.f32.mrb[0].mxu0
        %v2270 = vadd.f32 0.0, %v2269
        %v2271 = vpop.f32.mrb[0].mxu0
        %2272 = vmatprep.mubr.bf16.mxu0 0
        %2273 = vmatmul.mubr.bf16.gmra.mrb[0].mxu0 %v2219
        %v2274 = vpop.f32.mrb[0].mxu0
        %v2275 = vadd.f32 0.0, %v2274
        %v2276 = vpop.f32.mrb[0].mxu0
        %v2277 = vpop.f32.mrb[0].mxu0
        %v2278 = vadd.f32 0.0, %v2277
        %v2279 = vpop.f32.mrb[0].mxu0
        %2280 = vmatprep.mubr.bf16.mxu0 0
        %2281 = vmatmul.mubr.bf16.gmra.mrb[0].mxu0 %v2222
        %v2282 = vpop.f32.mrb[0].mxu0
        %v2283 = vadd.f32 0.0, %v2282
        %v2284 = vpop.f32.mrb[0].mxu0
        %v2285 = vpop.f32.mrb[0].mxu0
        %v2286 = vadd.f32 0.0, %v2285
        %v2287 = vpop.f32.mrb[0].mxu0
        %2288 = vdwg.mxu0
        %v2289 = vadd.f32 %v2167, %v2259
        %v2290 = vadd.f32 %v2168, %v2262
        %v2291 = vadd.f32 %v2169, %v2267
        %v2292 = vadd.f32 %v2170, %v2270
        %v2293 = vadd.f32 %v2171, %v2275
        %v2294 = vadd.f32 %v2172, %v2278
        %v2295 = vadd.f32 %v2173, %v2283
        %v2296 = vadd.f32 %v2174, %v2286
        %v2297 = vunpack.c.h.b16 %v1013
        %v2298 = vpack.c.b16 %v2061, %v2061
        %v2299 = vpack.c.b16 %v2297, %v2297
        %v2301 = vshrl.u32 %v2298, 16
        %v2303 = vrot.slane %v2301, 4
        %v2304 = vshll.u32 %v2298, 16
        %v2306 = vrot.slane %v2304, 5
        %v2307 = vor.u32 %v2303, %v2306
        %v2308 = vrot.slane %v2307, 4
        %v2310 = vshll.u32 %v2299, 16
        %v2312 = vrot.slane %v2310, 5
        %v2313 = vsel %vm1286, %v2308, %v2312
        %s2314 = scalar_lea.vmem %s3, 256
        %v2315 = vld [vmem:[%s2314] sm:$0xf]
        %v2316 = vld [vmem:[%s2314 + $0x4] sm:$0xf]
        %v2317 = vld [vmem:[%s2314 + $0x8] sm:$0xf]
        %v2318 = vld [vmem:[%s2314 + $0xc] sm:$0xf]
        %v2319 = vld [vmem:[%s2314 + $0x10] sm:$0xf]
        %v2320 = vld [vmem:[%s2314 + $0x14] sm:$0xf]
        %v2321 = vld [vmem:[%s2314 + $0x18] sm:$0xf]
        %v2322 = vld [vmem:[%s2314 + $0x1c] sm:$0xf]
        %v2323 = vunpack.c.l.b16 %v2313
        %v2324 = vpack.c.b16 %v1410, %v1409
        %v2325 = vpack.c.b16 %v1412, %v1411
        %v2326 = vpack.c.b16 %v1414, %v1413
        %v2327 = vpack.c.b16 %v2323, %v1415
        %v2336 = vunpack.c.l.b16 %v2315
        %v2337 = vunpack.c.l.b16 %v2316
        %v2338 = vunpack.c.l.b16 %v2317
        %v2339 = vunpack.c.l.b16 %v2318
        %v2340 = vunpack.c.l.b16 %v2319
        %v2341 = vunpack.c.l.b16 %v2320
        %v2342 = vunpack.c.l.b16 %v2321
        %v2343 = vunpack.c.l.b16 %v2322
        %v2344 = vpack.c.b16 %v2337, %v2336
        %v2345 = vpack.c.b16 %v2339, %v2338
        %v2346 = vpack.c.b16 %v2341, %v2340
        %v2347 = vpack.c.b16 %v2343, %v2342
        %v2353 = vsel %vm1061, %v2324, 0
        %v2356 = vsel %vm1061, %v2325, 0
        %v2359 = vsel %vm1061, %v2326, 0
        %v2362 = vsel %vm1061, %v2327, 0
        %2364 = vmatprep.subr.bf16.mxu0 0
        %2365 = vmatpush1.bf16.msra.mxu0 %v2344
        %2366 = vmatprep.subr.bf16.mxu0 0
        %2367 = vmatpush1.bf16.msra.mxu0 %v2345
        %2368 = vmatprep.subr.bf16.mxu0 0
        %2369 = vmatpush1.bf16.msra.mxu0 %v2346
        %2370 = vmatprep.subr.bf16.mxu0 0
        %2371 = vmatpush1.bf16.msra.mxu0 %v2347
        %2372 = vmatprep.subr.bf16.mxu0 0
        %2373 = vmatpush1.bf16.msra.mxu0 0
        %2374 = vmatprep.subr.bf16.mxu0 0
        %2375 = vmatpush1.bf16.msra.mxu0 0
        %2376 = vmatprep.subr.bf16.mxu0 0
        %2377 = vmatpush1.bf16.msra.mxu0 0
        %2378 = vmatprep.subr.bf16.mxu0 0
        %2379 = vmatpush1.bf16.msra.mxu0 0
        %2380 = vmatprep.subr.bf16.mxu0 0
        %2381 = vmatpush1.bf16.msra.mxu0 0
        %2382 = vmatprep.subr.bf16.mxu0 0
        %2383 = vmatpush1.bf16.msra.mxu0 0
        %2384 = vmatprep.subr.bf16.mxu0 0
        %2385 = vmatpush1.bf16.msra.mxu0 0
        %2386 = vmatprep.subr.bf16.mxu0 0
        %2387 = vmatpush1.bf16.msra.mxu0 0
        %2388 = vmatprep.subr.bf16.mxu0 0
        %2389 = vmatpush1.bf16.msra.mxu0 0
        %2390 = vmatprep.subr.bf16.mxu0 0
        %2391 = vmatpush1.bf16.msra.mxu0 0
        %2392 = vmatprep.subr.bf16.mxu0 0
        %2393 = vmatpush1.bf16.msra.mxu0 0
        %2394 = vmatprep.subr.bf16.mxu0 0
        %2395 = vmatpush1.bf16.msra.mxu0 0
        %2396 = vmatprep.mubr.bf16.mxu0 0
        %2397 = vmatmul.mubr.bf16.gmra.mrb[0].mxu0 %v2353
        %v2398 = vpop.f32.mrb[0].mxu0
        %v2399 = vadd.f32 0.0, %v2398
        %v2400 = vpop.f32.mrb[0].mxu0
        %v2401 = vpop.f32.mrb[0].mxu0
        %v2402 = vadd.f32 0.0, %v2401
        %v2403 = vpop.f32.mrb[0].mxu0
        %2404 = vmatprep.mubr.bf16.mxu0 0
        %2405 = vmatmul.mubr.bf16.gmra.mrb[0].mxu0 %v2356
        %v2406 = vpop.f32.mrb[0].mxu0
        %v2407 = vadd.f32 0.0, %v2406
        %v2408 = vpop.f32.mrb[0].mxu0
        %v2409 = vpop.f32.mrb[0].mxu0
        %v2410 = vadd.f32 0.0, %v2409
        %v2411 = vpop.f32.mrb[0].mxu0
        %2412 = vmatprep.mubr.bf16.mxu0 0
        %2413 = vmatmul.mubr.bf16.gmra.mrb[0].mxu0 %v2359
        %v2414 = vpop.f32.mrb[0].mxu0
        %v2415 = vadd.f32 0.0, %v2414
        %v2416 = vpop.f32.mrb[0].mxu0
        %v2417 = vpop.f32.mrb[0].mxu0
        %v2418 = vadd.f32 0.0, %v2417
        %v2419 = vpop.f32.mrb[0].mxu0
        %2420 = vmatprep.mubr.bf16.mxu0 0
        %2421 = vmatmul.mubr.bf16.gmra.mrb[0].mxu0 %v2362
        %v2422 = vpop.f32.mrb[0].mxu0
        %v2423 = vadd.f32 0.0, %v2422
        %v2424 = vpop.f32.mrb[0].mxu0
        %v2425 = vpop.f32.mrb[0].mxu0
        %v2426 = vadd.f32 0.0, %v2425
        %v2427 = vpop.f32.mrb[0].mxu0
        %2428 = vdwg.mxu0
        %v2429 = vadd.f32 %v2289, %v2399
        %v2430 = vadd.f32 %v2290, %v2402
        %v2431 = vadd.f32 %v2291, %v2407
        %v2432 = vadd.f32 %v2292, %v2410
        %v2433 = vadd.f32 %v2293, %v2415
        %v2434 = vadd.f32 %v2294, %v2418
        %v2435 = vadd.f32 %v2295, %v2423
        %v2436 = vadd.f32 %v2296, %v2426
        %vm2437 = vcmp.ge.f32.partialorder %v2429, 0.0
        %vm2438 = vcmp.ge.f32.partialorder %v2430, 0.0
        %vm2439 = vcmp.ge.f32.partialorder %v2431, 0.0
        %vm2440 = vcmp.ge.f32.partialorder %v2432, 0.0
        %vm2441 = vcmp.ge.f32.partialorder %v2433, 0.0
        %vm2442 = vcmp.ge.f32.partialorder %v2434, 0.0
        %vm2443 = vcmp.ge.f32.partialorder %v2435, 0.0
        %vm2444 = vcmp.ge.f32.partialorder %v2436, 0.0
        %s2445 = sld [smem:[#allocation2 + $0x1]]
        %v2446 = vstv %s2445
        %v2447 = vmul.f32 %v2446, %v2429
        %v2448 = vmul.f32 %v2446, %v2430
        %v2449 = vmul.f32 %v2446, %v2431
        %v2450 = vmul.f32 %v2446, %v2432
        %v2451 = vmul.f32 %v2446, %v2433
        %v2452 = vmul.f32 %v2446, %v2434
        %v2453 = vmul.f32 %v2446, %v2435
        %v2454 = vmul.f32 %v2446, %v2436
        %v2455 = vsel %vm2437, %v2429, %v2447
        %v2456 = vsel %vm2438, %v2430, %v2448
        %v2457 = vsel %vm2439, %v2431, %v2449
        %v2458 = vsel %vm2440, %v2432, %v2450
        %v2459 = vsel %vm2441, %v2433, %v2451
        %v2460 = vsel %vm2442, %v2434, %v2452
        %v2461 = vsel %vm2443, %v2435, %v2453
        %v2462 = vsel %vm2444, %v2436, %v2454
        %v2463 = vpack.c.bf16 %v2456, %v2455
        %v2464 = vpack.c.bf16 %v2458, %v2457
        %v2465 = vpack.c.bf16 %v2460, %v2459
        %v2466 = vpack.c.bf16 %v2462, %v2461
        %v2471 = vunpack.c.l.b16 %v2463
        %v2472 = vunpack.c.h.b16 %v2463
        %v2473 = vunpack.c.l.b16 %v2464
        %v2474 = vunpack.c.h.b16 %v2464
        %v2475 = vunpack.c.l.b16 %v2465
        %v2476 = vunpack.c.h.b16 %v2465
        %v2477 = vunpack.c.l.b16 %v2466
        %v2478 = vunpack.c.h.b16 %v2466
        %v2479 = vpack.c.b16 %v2471, %v2471
        %v2480 = vpack.c.b16 %v2472, %v2472
        %v2481 = vpack.c.b16 %v2473, %v2473
        %v2482 = vpack.c.b16 %v2474, %v2474
        %v2483 = vpack.c.b16 %v2475, %v2475
        %v2484 = vpack.c.b16 %v2476, %v2476
        %v2485 = vpack.c.b16 %v2477, %v2477
        %v2486 = vpack.c.b16 %v2478, %v2478
        %v2488 = vshrl.u32 %v2479, 16
        %v2490 = vrot.slane %v2488, 7
        %v2491 = vshll.u32 %v2479, 16
        %v2493 = vor.u32 %v2490, %v2491
        %v2495 = vshrl.u32 %v2480, 16
        %v2497 = vrot.slane %v2495, 7
        %v2498 = vshll.u32 %v2480, 16
        %v2500 = vor.u32 %v2497, %v2498
        %v2502 = vshrl.u32 %v2481, 16
        %v2504 = vrot.slane %v2502, 7
        %v2505 = vshll.u32 %v2481, 16
        %v2507 = vor.u32 %v2504, %v2505
        %v2509 = vshrl.u32 %v2482, 16
        %v2511 = vrot.slane %v2509, 7
        %v2512 = vshll.u32 %v2482, 16
        %v2514 = vor.u32 %v2511, %v2512
        %v2516 = vshrl.u32 %v2483, 16
        %v2518 = vrot.slane %v2516, 7
        %v2519 = vshll.u32 %v2483, 16
        %v2521 = vor.u32 %v2518, %v2519
        %v2523 = vshrl.u32 %v2484, 16
        %v2525 = vrot.slane %v2523, 7
        %v2526 = vshll.u32 %v2484, 16
        %v2528 = vor.u32 %v2525, %v2526
        %v2530 = vshrl.u32 %v2485, 16
        %v2532 = vrot.slane %v2530, 7
        %v2533 = vshll.u32 %v2485, 16
        %v2535 = vor.u32 %v2532, %v2533
        %v2537 = vshrl.u32 %v2486, 16
        %v2539 = vrot.slane %v2537, 7
        %v2540 = vshll.u32 %v2486, 16
        %v2542 = vor.u32 %v2539, %v2540
        %v2551 = vsel %vm924, 0, %v2493
        %v2552 = vsel %vm924, 0, %v2500
        %v2553 = vsel %vm924, 0, %v2507
        %v2554 = vsel %vm924, 0, %v2514
        %v2555 = vsel %vm924, 0, %v2521
        %v2556 = vsel %vm924, 0, %v2528
        %v2557 = vsel %vm924, 0, %v2535
        %v2558 = vsel %vm924, 0, %v2542
        %vm2559 = vcmask 1044480
        %vm2560 = vsmask.f32 4352
        %vm2561 = vmand %vm2559, %vm2560
        %v2562 = vsel %vm2561, %v1005, 0
        %v2563 = vsel %vm2561, %v2551, 0
        %v2564 = vsel %vm2561, %v2552, 0
        %v2565 = vsel %vm2561, %v2553, 0
        %v2566 = vsel %vm2561, %v2554, 0
        %v2567 = vsel %vm2561, %v2555, 0
        %v2568 = vsel %vm2561, %v2556, 0
        %v2569 = vsel %vm2561, %v2557, 0
        %v2570 = vsel %vm2561, %v2558, 0
        %v2571 = vld [vmem:[%s4] sm:$0xff]
        %v2572 = vld [vmem:[%s4 + $0x8] sm:$0xff]
        %v2573 = vld [vmem:[%s4 + $0x10] sm:$0xff]
        %v2574 = vld [vmem:[%s4 + $0x18] sm:$0xff]
        %v2575 = vld [vmem:[%s4 + $0x20] sm:$0xff]
        %v2576 = vld [vmem:[%s4 + $0x28] sm:$0xff]
        %v2577 = vld [vmem:[%s4 + $0x30] sm:$0xff]
        %v2578 = vld [vmem:[%s4 + $0x38] sm:$0xff]
        %v2579 = vld [vmem:[%s4 + $0x40] sm:$0xff]
        %v2580 = vld [vmem:[%s4 + $0x48] sm:$0xff]
        %v2581 = vld [vmem:[%s4 + $0x50] sm:$0xff]
        %v2582 = vld [vmem:[%s4 + $0x58] sm:$0xff]
        %v2583 = vld [vmem:[%s4 + $0x60] sm:$0xff]
        %v2584 = vld [vmem:[%s4 + $0x68] sm:$0xff]
        %v2585 = vld [vmem:[%s4 + $0x70] sm:$0xff]
        %v2586 = vld [vmem:[%s4 + $0x78] sm:$0xff]
        %v2595 = vunpack.c.l.b16 %v2562
        %v2596 = vunpack.c.h.b16 %v2562
        %v2597 = vunpack.c.l.b16 %v2563
        %v2598 = vunpack.c.h.b16 %v2563
        %v2599 = vunpack.c.l.b16 %v2564
        %v2600 = vunpack.c.h.b16 %v2564
        %v2601 = vunpack.c.l.b16 %v2565
        %v2602 = vunpack.c.h.b16 %v2565
        %v2603 = vunpack.c.l.b16 %v2566
        %v2604 = vunpack.c.h.b16 %v2566
        %v2605 = vunpack.c.l.b16 %v2567
        %v2606 = vunpack.c.h.b16 %v2567
        %v2607 = vunpack.c.l.b16 %v2568
        %v2608 = vunpack.c.h.b16 %v2568
        %v2609 = vunpack.c.l.b16 %v2569
        %v2610 = vunpack.c.h.b16 %v2569
        %v2611 = vpack.c.b16 %v2595, %v2595
        %v2612 = vpack.c.b16 %v2596, %v2596
        %v2613 = vpack.c.b16 %v2597, %v2597
        %v2614 = vpack.c.b16 %v2598, %v2598
        %v2615 = vpack.c.b16 %v2599, %v2599
        %v2616 = vpack.c.b16 %v2600, %v2600
        %v2617 = vpack.c.b16 %v2601, %v2601
        %v2618 = vpack.c.b16 %v2602, %v2602
        %v2619 = vpack.c.b16 %v2603, %v2603
        %v2620 = vpack.c.b16 %v2604, %v2604
        %v2621 = vpack.c.b16 %v2605, %v2605
        %v2622 = vpack.c.b16 %v2606, %v2606
        %v2623 = vpack.c.b16 %v2607, %v2607
        %v2624 = vpack.c.b16 %v2608, %v2608
        %v2625 = vpack.c.b16 %v2609, %v2609
        %v2626 = vpack.c.b16 %v2610, %v2610
        %v2628 = vshrl.u32 %v2611, 16
        %v2630 = vrot.slane %v2628, 4
        %v2631 = vshll.u32 %v2611, 16
        %v2633 = vrot.slane %v2631, 5
        %v2634 = vor.u32 %v2630, %v2633
        %v2635 = vrot.slane %v2634, 4
        %v2637 = vshll.u32 %v2612, 16
        %v2639 = vrot.slane %v2637, 5
        %v2640 = vsel %vm1286, %v2635, %v2639
        %v2642 = vshrl.u32 %v2613, 16
        %v2644 = vrot.slane %v2642, 4
        %v2645 = vshll.u32 %v2613, 16
        %v2647 = vrot.slane %v2645, 5
        %v2648 = vor.u32 %v2644, %v2647
        %v2649 = vrot.slane %v2648, 4
        %v2651 = vshll.u32 %v2614, 16
        %v2653 = vrot.slane %v2651, 5
        %v2654 = vsel %vm1286, %v2649, %v2653
        %v2656 = vshrl.u32 %v2615, 16
        %v2658 = vrot.slane %v2656, 4
        %v2659 = vshll.u32 %v2615, 16
        %v2661 = vrot.slane %v2659, 5
        %v2662 = vor.u32 %v2658, %v2661
        %v2663 = vrot.slane %v2662, 4
        %v2665 = vshll.u32 %v2616, 16
        %v2667 = vrot.slane %v2665, 5
        %v2668 = vsel %vm1286, %v2663, %v2667
        %v2670 = vshrl.u32 %v2617, 16
        %v2672 = vrot.slane %v2670, 4
        %v2673 = vshll.u32 %v2617, 16
        %v2675 = vrot.slane %v2673, 5
        %v2676 = vor.u32 %v2672, %v2675
        %v2677 = vrot.slane %v2676, 4
        %v2679 = vshll.u32 %v2618, 16
        %v2681 = vrot.slane %v2679, 5
        %v2682 = vsel %vm1286, %v2677, %v2681
        %v2684 = vshrl.u32 %v2619, 16
        %v2686 = vrot.slane %v2684, 4
        %v2687 = vshll.u32 %v2619, 16
        %v2689 = vrot.slane %v2687, 5
        %v2690 = vor.u32 %v2686, %v2689
        %v2691 = vrot.slane %v2690, 4
        %v2693 = vshll.u32 %v2620, 16
        %v2695 = vrot.slane %v2693, 5
        %v2696 = vsel %vm1286, %v2691, %v2695
        %v2698 = vshrl.u32 %v2621, 16
        %v2700 = vrot.slane %v2698, 4
        %v2701 = vshll.u32 %v2621, 16
        %v2703 = vrot.slane %v2701, 5
        %v2704 = vor.u32 %v2700, %v2703
        %v2705 = vrot.slane %v2704, 4
        %v2707 = vshll.u32 %v2622, 16
        %v2709 = vrot.slane %v2707, 5
        %v2710 = vsel %vm1286, %v2705, %v2709
        %v2712 = vshrl.u32 %v2623, 16
        %v2714 = vrot.slane %v2712, 4
        %v2715 = vshll.u32 %v2623, 16
        %v2717 = vrot.slane %v2715, 5
        %v2718 = vor.u32 %v2714, %v2717
        %v2719 = vrot.slane %v2718, 4
        %v2721 = vshll.u32 %v2624, 16
        %v2723 = vrot.slane %v2721, 5
        %v2724 = vsel %vm1286, %v2719, %v2723
        %v2726 = vshrl.u32 %v2625, 16
        %v2728 = vrot.slane %v2726, 4
        %v2729 = vshll.u32 %v2625, 16
        %v2731 = vrot.slane %v2729, 5
        %v2732 = vor.u32 %v2728, %v2731
        %v2733 = vrot.slane %v2732, 4
        %v2735 = vshll.u32 %v2626, 16
        %v2737 = vrot.slane %v2735, 5
        %v2738 = vsel %vm1286, %v2733, %v2737
        %s2739 = scalar_lea.vmem %s4, 128
        %v2740 = vld [vmem:[%s2739] sm:$0xff]
        %v2741 = vld [vmem:[%s2739 + $0x8] sm:$0xff]
        %v2742 = vld [vmem:[%s2739 + $0x10] sm:$0xff]
        %v2743 = vld [vmem:[%s2739 + $0x18] sm:$0xff]
        %v2744 = vld [vmem:[%s2739 + $0x20] sm:$0xff]
        %v2745 = vld [vmem:[%s2739 + $0x28] sm:$0xff]
        %v2746 = vld [vmem:[%s2739 + $0x30] sm:$0xff]
        %v2747 = vld [vmem:[%s2739 + $0x38] sm:$0xff]
        %v2748 = vld [vmem:[%s2739 + $0x40] sm:$0xff]
        %v2749 = vld [vmem:[%s2739 + $0x48] sm:$0xff]
        %v2750 = vld [vmem:[%s2739 + $0x50] sm:$0xff]
        %v2751 = vld [vmem:[%s2739 + $0x58] sm:$0xff]
        %v2752 = vld [vmem:[%s2739 + $0x60] sm:$0xff]
        %v2753 = vld [vmem:[%s2739 + $0x68] sm:$0xff]
        %v2754 = vld [vmem:[%s2739 + $0x70] sm:$0xff]
        %v2755 = vld [vmem:[%s2739 + $0x78] sm:$0xff]
        %v2756 = vunpack.c.l.b16 %v2640
        %v2757 = vunpack.c.l.b16 %v2654
        %v2758 = vunpack.c.l.b16 %v2668
        %v2759 = vunpack.c.l.b16 %v2682
        %v2760 = vunpack.c.l.b16 %v2696
        %v2761 = vunpack.c.l.b16 %v2710
        %v2762 = vunpack.c.l.b16 %v2724
        %v2763 = vunpack.c.l.b16 %v2738
        %v2764 = vpack.c.b16 %v2757, %v2756
        %v2765 = vpack.c.b16 %v2759, %v2758
        %v2766 = vpack.c.b16 %v2761, %v2760
        %v2767 = vpack.c.b16 %v2763, %v2762
        %v2788 = vunpack.c.l.b16 %v2740
        %v2789 = vunpack.c.h.b16 %v2740
        %v2790 = vunpack.c.l.b16 %v2741
        %v2791 = vunpack.c.h.b16 %v2741
        %v2792 = vunpack.c.l.b16 %v2742
        %v2793 = vunpack.c.h.b16 %v2742
        %v2794 = vunpack.c.l.b16 %v2743
        %v2795 = vunpack.c.h.b16 %v2743
        %v2796 = vunpack.c.l.b16 %v2744
        %v2797 = vunpack.c.h.b16 %v2744
        %v2798 = vunpack.c.l.b16 %v2745
        %v2799 = vunpack.c.h.b16 %v2745
        %v2800 = vunpack.c.l.b16 %v2746
        %v2801 = vunpack.c.h.b16 %v2746
        %v2802 = vunpack.c.l.b16 %v2747
        %v2803 = vunpack.c.h.b16 %v2747
        %v2804 = vunpack.c.l.b16 %v2748
        %v2805 = vunpack.c.h.b16 %v2748
        %v2806 = vunpack.c.l.b16 %v2749
        %v2807 = vunpack.c.h.b16 %v2749
        %v2808 = vunpack.c.l.b16 %v2750
        %v2809 = vunpack.c.h.b16 %v2750
        %v2810 = vunpack.c.l.b16 %v2751
        %v2811 = vunpack.c.h.b16 %v2751
        %v2812 = vunpack.c.l.b16 %v2752
        %v2813 = vunpack.c.h.b16 %v2752
        %v2814 = vunpack.c.l.b16 %v2753
        %v2815 = vunpack.c.h.b16 %v2753
        %v2816 = vunpack.c.l.b16 %v2754
        %v2817 = vunpack.c.h.b16 %v2754
        %v2818 = vunpack.c.l.b16 %v2755
        %v2819 = vunpack.c.h.b16 %v2755
        %v2820 = vpack.c.b16 %v2790, %v2788
        %v2821 = vpack.c.b16 %v2791, %v2789
        %v2822 = vpack.c.b16 %v2794, %v2792
        %v2823 = vpack.c.b16 %v2795, %v2793
        %v2824 = vpack.c.b16 %v2798, %v2796
        %v2825 = vpack.c.b16 %v2799, %v2797
        %v2826 = vpack.c.b16 %v2802, %v2800
        %v2827 = vpack.c.b16 %v2803, %v2801
        %v2828 = vpack.c.b16 %v2806, %v2804
        %v2829 = vpack.c.b16 %v2807, %v2805
        %v2830 = vpack.c.b16 %v2810, %v2808
        %v2831 = vpack.c.b16 %v2811, %v2809
        %v2832 = vpack.c.b16 %v2814, %v2812
        %v2833 = vpack.c.b16 %v2815, %v2813
        %v2834 = vpack.c.b16 %v2818, %v2816
        %v2835 = vpack.c.b16 %v2819, %v2817
        %2852 = vmatprep.subr.bf16.mxu0 %v2821
        %2853 = vmatpush1.bf16.msra.mxu0 %v2820
        %2854 = vmatprep.subr.bf16.mxu0 %v2823
        %2855 = vmatpush1.bf16.msra.mxu0 %v2822
        %2856 = vmatprep.subr.bf16.mxu0 %v2825
        %2857 = vmatpush1.bf16.msra.mxu0 %v2824
        %2858 = vmatprep.subr.bf16.mxu0 %v2827
        %2859 = vmatpush1.bf16.msra.mxu0 %v2826
        %2860 = vmatprep.subr.bf16.mxu0 %v2829
        %2861 = vmatpush1.bf16.msra.mxu0 %v2828
        %2862 = vmatprep.subr.bf16.mxu0 %v2831
        %2863 = vmatpush1.bf16.msra.mxu0 %v2830
        %2864 = vmatprep.subr.bf16.mxu0 %v2833
        %2865 = vmatpush1.bf16.msra.mxu0 %v2832
        %2866 = vmatprep.subr.bf16.mxu0 %v2835
        %2867 = vmatpush1.bf16.msra.mxu0 %v2834
        %2868 = vmatprep.subr.bf16.mxu0 0
        %2869 = vmatpush1.bf16.msra.mxu0 0
        %2870 = vmatprep.subr.bf16.mxu0 0
        %2871 = vmatpush1.bf16.msra.mxu0 0
        %2872 = vmatprep.subr.bf16.mxu0 0
        %2873 = vmatpush1.bf16.msra.mxu0 0
        %2874 = vmatprep.subr.bf16.mxu0 0
        %2875 = vmatpush1.bf16.msra.mxu0 0
        %2876 = vmatprep.subr.bf16.mxu0 0
        %2877 = vmatpush1.bf16.msra.mxu0 0
        %2878 = vmatprep.subr.bf16.mxu0 0
        %2879 = vmatpush1.bf16.msra.mxu0 0
        %2880 = vmatprep.subr.bf16.mxu0 0
        %2881 = vmatpush1.bf16.msra.mxu0 0
        %2882 = vmatprep.subr.bf16.mxu0 0
        %2883 = vmatpush1.bf16.msra.mxu0 0
        %2884 = vmatprep.mubr.bf16.mxu0 0
        %2885 = vmatmul.mubr.bf16.gmra.mrb[0].mxu0 %v2764
        %v2886 = vpop.f32.mrb[0].mxu0
        %v2887 = vadd.f32 0.0, %v2886
        %v2888 = vpop.f32.mrb[0].mxu0
        %v2889 = vadd.f32 0.0, %v2888
        %v2890 = vpop.f32.mrb[0].mxu0
        %v2891 = vadd.f32 0.0, %v2890
        %v2892 = vpop.f32.mrb[0].mxu0
        %v2893 = vadd.f32 0.0, %v2892
        %2894 = vmatprep.mubr.bf16.mxu0 0
        %2895 = vmatmul.mubr.bf16.gmra.mrb[0].mxu0 %v2765
        %v2896 = vpop.f32.mrb[0].mxu0
        %v2897 = vadd.f32 0.0, %v2896
        %v2898 = vpop.f32.mrb[0].mxu0
        %v2899 = vadd.f32 0.0, %v2898
        %v2900 = vpop.f32.mrb[0].mxu0
        %v2901 = vadd.f32 0.0, %v2900
        %v2902 = vpop.f32.mrb[0].mxu0
        %v2903 = vadd.f32 0.0, %v2902
        %2904 = vmatprep.mubr.bf16.mxu0 0
        %2905 = vmatmul.mubr.bf16.gmra.mrb[0].mxu0 %v2766
        %v2906 = vpop.f32.mrb[0].mxu0
        %v2907 = vadd.f32 0.0, %v2906
        %v2908 = vpop.f32.mrb[0].mxu0
        %v2909 = vadd.f32 0.0, %v2908
        %v2910 = vpop.f32.mrb[0].mxu0
        %v2911 = vadd.f32 0.0, %v2910
        %v2912 = vpop.f32.mrb[0].mxu0
        %v2913 = vadd.f32 0.0, %v2912
        %2914 = vmatprep.mubr.bf16.mxu0 0
        %2915 = vmatmul.mubr.bf16.gmra.mrb[0].mxu0 %v2767
        %v2916 = vpop.f32.mrb[0].mxu0
        %v2917 = vadd.f32 0.0, %v2916
        %v2918 = vpop.f32.mrb[0].mxu0
        %v2919 = vadd.f32 0.0, %v2918
        %v2920 = vpop.f32.mrb[0].mxu0
        %v2921 = vadd.f32 0.0, %v2920
        %v2922 = vpop.f32.mrb[0].mxu0
        %v2923 = vadd.f32 0.0, %v2922
        %2924 = vdwg.mxu0
        %v2925 = vpack.c.b16 %v2597, %v2595
        %v2926 = vpack.c.b16 %v2601, %v2599
        %v2927 = vpack.c.b16 %v2605, %v2603
        %v2928 = vpack.c.b16 %v2609, %v2607
        %v2949 = vunpack.c.l.b16 %v2571
        %v2950 = vunpack.c.h.b16 %v2571
        %v2951 = vunpack.c.l.b16 %v2572
        %v2952 = vunpack.c.h.b16 %v2572
        %v2953 = vunpack.c.l.b16 %v2573
        %v2954 = vunpack.c.h.b16 %v2573
        %v2955 = vunpack.c.l.b16 %v2574
        %v2956 = vunpack.c.h.b16 %v2574
        %v2957 = vunpack.c.l.b16 %v2575
        %v2958 = vunpack.c.h.b16 %v2575
        %v2959 = vunpack.c.l.b16 %v2576
        %v2960 = vunpack.c.h.b16 %v2576
        %v2961 = vunpack.c.l.b16 %v2577
        %v2962 = vunpack.c.h.b16 %v2577
        %v2963 = vunpack.c.l.b16 %v2578
        %v2964 = vunpack.c.h.b16 %v2578
        %v2965 = vunpack.c.l.b16 %v2579
        %v2966 = vunpack.c.h.b16 %v2579
        %v2967 = vunpack.c.l.b16 %v2580
        %v2968 = vunpack.c.h.b16 %v2580
        %v2969 = vunpack.c.l.b16 %v2581
        %v2970 = vunpack.c.h.b16 %v2581
        %v2971 = vunpack.c.l.b16 %v2582
        %v2972 = vunpack.c.h.b16 %v2582
        %v2973 = vunpack.c.l.b16 %v2583
        %v2974 = vunpack.c.h.b16 %v2583
        %v2975 = vunpack.c.l.b16 %v2584
        %v2976 = vunpack.c.h.b16 %v2584
        %v2977 = vunpack.c.l.b16 %v2585
        %v2978 = vunpack.c.h.b16 %v2585
        %v2979 = vunpack.c.l.b16 %v2586
        %v2980 = vunpack.c.h.b16 %v2586
        %v2981 = vpack.c.b16 %v2951, %v2949
        %v2982 = vpack.c.b16 %v2952, %v2950
        %v2983 = vpack.c.b16 %v2955, %v2953
        %v2984 = vpack.c.b16 %v2956, %v2954
        %v2985 = vpack.c.b16 %v2959, %v2957
        %v2986 = vpack.c.b16 %v2960, %v2958
        %v2987 = vpack.c.b16 %v2963, %v2961
        %v2988 = vpack.c.b16 %v2964, %v2962
        %v2989 = vpack.c.b16 %v2967, %v2965
        %v2990 = vpack.c.b16 %v2968, %v2966
        %v2991 = vpack.c.b16 %v2971, %v2969
        %v2992 = vpack.c.b16 %v2972, %v2970
        %v2993 = vpack.c.b16 %v2975, %v2973
        %v2994 = vpack.c.b16 %v2976, %v2974
        %v2995 = vpack.c.b16 %v2979, %v2977
        %v2996 = vpack.c.b16 %v2980, %v2978
        %3013 = vmatprep.subr.bf16.mxu0 %v2982
        %3014 = vmatpush1.bf16.msra.mxu0 %v2981
        %3015 = vmatprep.subr.bf16.mxu0 %v2984
        %3016 = vmatpush1.bf16.msra.mxu0 %v2983
        %3017 = vmatprep.subr.bf16.mxu0 %v2986
        %3018 = vmatpush1.bf16.msra.mxu0 %v2985
        %3019 = vmatprep.subr.bf16.mxu0 %v2988
        %3020 = vmatpush1.bf16.msra.mxu0 %v2987
        %3021 = vmatprep.subr.bf16.mxu0 %v2990
        %3022 = vmatpush1.bf16.msra.mxu0 %v2989
        %3023 = vmatprep.subr.bf16.mxu0 %v2992
        %3024 = vmatpush1.bf16.msra.mxu0 %v2991
        %3025 = vmatprep.subr.bf16.mxu0 %v2994
        %3026 = vmatpush1.bf16.msra.mxu0 %v2993
        %3027 = vmatprep.subr.bf16.mxu0 %v2996
        %3028 = vmatpush1.bf16.msra.mxu0 %v2995
        %3029 = vmatprep.subr.bf16.mxu0 0
        %3030 = vmatpush1.bf16.msra.mxu0 0
        %3031 = vmatprep.subr.bf16.mxu0 0
        %3032 = vmatpush1.bf16.msra.mxu0 0
        %3033 = vmatprep.subr.bf16.mxu0 0
        %3034 = vmatpush1.bf16.msra.mxu0 0
        %3035 = vmatprep.subr.bf16.mxu0 0
        %3036 = vmatpush1.bf16.msra.mxu0 0
        %3037 = vmatprep.subr.bf16.mxu0 0
        %3038 = vmatpush1.bf16.msra.mxu0 0
        %3039 = vmatprep.subr.bf16.mxu0 0
        %3040 = vmatpush1.bf16.msra.mxu0 0
        %3041 = vmatprep.subr.bf16.mxu0 0
        %3042 = vmatpush1.bf16.msra.mxu0 0
        %3043 = vmatprep.subr.bf16.mxu0 0
        %3044 = vmatpush1.bf16.msra.mxu0 0
        %3045 = vmatprep.mubr.bf16.mxu0 0
        %3046 = vmatmul.mubr.bf16.gmra.mrb[0].mxu0 %v2925
        %v3047 = vpop.f32.mrb[0].mxu0
        %v3048 = vadd.f32 %v2887, %v3047
        %v3049 = vpop.f32.mrb[0].mxu0
        %v3050 = vadd.f32 %v2889, %v3049
        %v3051 = vpop.f32.mrb[0].mxu0
        %v3052 = vadd.f32 %v2891, %v3051
        %v3053 = vpop.f32.mrb[0].mxu0
        %v3054 = vadd.f32 %v2893, %v3053
        %3055 = vmatprep.mubr.bf16.mxu0 0
        %3056 = vmatmul.mubr.bf16.gmra.mrb[0].mxu0 %v2926
        %v3057 = vpop.f32.mrb[0].mxu0
        %v3058 = vadd.f32 %v2897, %v3057
        %v3059 = vpop.f32.mrb[0].mxu0
        %v3060 = vadd.f32 %v2899, %v3059
        %v3061 = vpop.f32.mrb[0].mxu0
        %v3062 = vadd.f32 %v2901, %v3061
        %v3063 = vpop.f32.mrb[0].mxu0
        %v3064 = vadd.f32 %v2903, %v3063
        %3065 = vmatprep.mubr.bf16.mxu0 0
        %3066 = vmatmul.mubr.bf16.gmra.mrb[0].mxu0 %v2927
        %v3067 = vpop.f32.mrb[0].mxu0
        %v3068 = vadd.f32 %v2907, %v3067
        %v3069 = vpop.f32.mrb[0].mxu0
        %v3070 = vadd.f32 %v2909, %v3069
        %v3071 = vpop.f32.mrb[0].mxu0
        %v3072 = vadd.f32 %v2911, %v3071
        %v3073 = vpop.f32.mrb[0].mxu0
        %v3074 = vadd.f32 %v2913, %v3073
        %3075 = vmatprep.mubr.bf16.mxu0 0
        %3076 = vmatmul.mubr.bf16.gmra.mrb[0].mxu0 %v2928
        %v3077 = vpop.f32.mrb[0].mxu0
        %v3078 = vadd.f32 %v2917, %v3077
        %v3079 = vpop.f32.mrb[0].mxu0
        %v3080 = vadd.f32 %v2919, %v3079
        %v3081 = vpop.f32.mrb[0].mxu0
        %v3082 = vadd.f32 %v2921, %v3081
        %v3083 = vpop.f32.mrb[0].mxu0
        %v3084 = vadd.f32 %v2923, %v3083
        %3085 = vdwg.mxu0
        %vm3086 = vcmask 1042432
        %vm3087 = vcmask 1046532
        %vm3088 = vmor %vm3086, %vm3087
        %v3089 = vrot.slane %v2611, 5
        %v3090 = vrot.slane %v3089, 4
        %v3091 = vrot.slane %v2612, 5
        %v3092 = vsel %vm3088, %v3090, %v3091
        %v3093 = vrot.slane %v2613, 5
        %v3094 = vrot.slane %v3093, 4
        %v3095 = vrot.slane %v2614, 5
        %v3096 = vsel %vm3088, %v3094, %v3095
        %v3097 = vrot.slane %v2615, 5
        %v3098 = vrot.slane %v3097, 4
        %v3099 = vrot.slane %v2616, 5
        %v3100 = vsel %vm3088, %v3098, %v3099
        %v3101 = vrot.slane %v2617, 5
        %v3102 = vrot.slane %v3101, 4
        %v3103 = vrot.slane %v2618, 5
        %v3104 = vsel %vm3088, %v3102, %v3103
        %v3105 = vrot.slane %v2619, 5
        %v3106 = vrot.slane %v3105, 4
        %v3107 = vrot.slane %v2620, 5
        %v3108 = vsel %vm3088, %v3106, %v3107
        %v3109 = vrot.slane %v2621, 5
        %v3110 = vrot.slane %v3109, 4
        %v3111 = vrot.slane %v2622, 5
        %v3112 = vsel %vm3088, %v3110, %v3111
        %v3113 = vrot.slane %v2623, 5
        %v3114 = vrot.slane %v3113, 4
        %v3115 = vrot.slane %v2624, 5
        %v3116 = vsel %vm3088, %v3114, %v3115
        %v3117 = vrot.slane %v2625, 5
        %v3118 = vrot.slane %v3117, 4
        %v3119 = vrot.slane %v2626, 5
        %v3120 = vsel %vm3088, %v3118, %v3119
        %s3121 = scalar_lea.vmem %s4, 256
        %v3122 = vld [vmem:[%s3121] sm:$0xff]
        %v3123 = vld [vmem:[%s3121 + $0x8] sm:$0xff]
        %v3124 = vld [vmem:[%s3121 + $0x10] sm:$0xff]
        %v3125 = vld [vmem:[%s3121 + $0x18] sm:$0xff]
        %v3126 = vld [vmem:[%s3121 + $0x20] sm:$0xff]
        %v3127 = vld [vmem:[%s3121 + $0x28] sm:$0xff]
        %v3128 = vld [vmem:[%s3121 + $0x30] sm:$0xff]
        %v3129 = vld [vmem:[%s3121 + $0x38] sm:$0xff]
        %v3130 = vld [vmem:[%s3121 + $0x40] sm:$0xff]
        %v3131 = vld [vmem:[%s3121 + $0x48] sm:$0xff]
        %v3132 = vld [vmem:[%s3121 + $0x50] sm:$0xff]
        %v3133 = vld [vmem:[%s3121 + $0x58] sm:$0xff]
        %v3134 = vld [vmem:[%s3121 + $0x60] sm:$0xff]
        %v3135 = vld [vmem:[%s3121 + $0x68] sm:$0xff]
        %v3136 = vld [vmem:[%s3121 + $0x70] sm:$0xff]
        %v3137 = vld [vmem:[%s3121 + $0x78] sm:$0xff]
        %v3138 = vunpack.c.l.b16 %v3092
        %v3139 = vunpack.c.l.b16 %v3096
        %v3140 = vunpack.c.l.b16 %v3100
        %v3141 = vunpack.c.l.b16 %v3104
        %v3142 = vunpack.c.l.b16 %v3108
        %v3143 = vunpack.c.l.b16 %v3112
        %v3144 = vunpack.c.l.b16 %v3116
        %v3145 = vunpack.c.l.b16 %v3120
        %v3146 = vpack.c.b16 %v3139, %v3138
        %v3147 = vpack.c.b16 %v3141, %v3140
        %v3148 = vpack.c.b16 %v3143, %v3142
        %v3149 = vpack.c.b16 %v3145, %v3144
        %v3170 = vunpack.c.l.b16 %v3122
        %v3171 = vunpack.c.h.b16 %v3122
        %v3172 = vunpack.c.l.b16 %v3123
        %v3173 = vunpack.c.h.b16 %v3123
        %v3174 = vunpack.c.l.b16 %v3124
        %v3175 = vunpack.c.h.b16 %v3124
        %v3176 = vunpack.c.l.b16 %v3125
        %v3177 = vunpack.c.h.b16 %v3125
        %v3178 = vunpack.c.l.b16 %v3126
        %v3179 = vunpack.c.h.b16 %v3126
        %v3180 = vunpack.c.l.b16 %v3127
        %v3181 = vunpack.c.h.b16 %v3127
        %v3182 = vunpack.c.l.b16 %v3128
        %v3183 = vunpack.c.h.b16 %v3128
        %v3184 = vunpack.c.l.b16 %v3129
        %v3185 = vunpack.c.h.b16 %v3129
        %v3186 = vunpack.c.l.b16 %v3130
        %v3187 = vunpack.c.h.b16 %v3130
        %v3188 = vunpack.c.l.b16 %v3131
        %v3189 = vunpack.c.h.b16 %v3131
        %v3190 = vunpack.c.l.b16 %v3132
        %v3191 = vunpack.c.h.b16 %v3132
        %v3192 = vunpack.c.l.b16 %v3133
        %v3193 = vunpack.c.h.b16 %v3133
        %v3194 = vunpack.c.l.b16 %v3134
        %v3195 = vunpack.c.h.b16 %v3134
        %v3196 = vunpack.c.l.b16 %v3135
        %v3197 = vunpack.c.h.b16 %v3135
        %v3198 = vunpack.c.l.b16 %v3136
        %v3199 = vunpack.c.h.b16 %v3136
        %v3200 = vunpack.c.l.b16 %v3137
        %v3201 = vunpack.c.h.b16 %v3137
        %v3202 = vpack.c.b16 %v3172, %v3170
        %v3203 = vpack.c.b16 %v3173, %v3171
        %v3204 = vpack.c.b16 %v3176, %v3174
        %v3205 = vpack.c.b16 %v3177, %v3175
        %v3206 = vpack.c.b16 %v3180, %v3178
        %v3207 = vpack.c.b16 %v3181, %v3179
        %v3208 = vpack.c.b16 %v3184, %v3182
        %v3209 = vpack.c.b16 %v3185, %v3183
        %v3210 = vpack.c.b16 %v3188, %v3186
        %v3211 = vpack.c.b16 %v3189, %v3187
        %v3212 = vpack.c.b16 %v3192, %v3190
        %v3213 = vpack.c.b16 %v3193, %v3191
        %v3214 = vpack.c.b16 %v3196, %v3194
        %v3215 = vpack.c.b16 %v3197, %v3195
        %v3216 = vpack.c.b16 %v3200, %v3198
        %v3217 = vpack.c.b16 %v3201, %v3199
        %3234 = vmatprep.subr.bf16.mxu0 %v3203
        %3235 = vmatpush1.bf16.msra.mxu0 %v3202
        %3236 = vmatprep.subr.bf16.mxu0 %v3205
        %3237 = vmatpush1.bf16.msra.mxu0 %v3204
        %3238 = vmatprep.subr.bf16.mxu0 %v3207
        %3239 = vmatpush1.bf16.msra.mxu0 %v3206
        %3240 = vmatprep.subr.bf16.mxu0 %v3209
        %3241 = vmatpush1.bf16.msra.mxu0 %v3208
        %3242 = vmatprep.subr.bf16.mxu0 %v3211
        %3243 = vmatpush1.bf16.msra.mxu0 %v3210
        %3244 = vmatprep.subr.bf16.mxu0 %v3213
        %3245 = vmatpush1.bf16.msra.mxu0 %v3212
        %3246 = vmatprep.subr.bf16.mxu0 %v3215
        %3247 = vmatpush1.bf16.msra.mxu0 %v3214
        %3248 = vmatprep.subr.bf16.mxu0 %v3217
        %3249 = vmatpush1.bf16.msra.mxu0 %v3216
        %3250 = vmatprep.subr.bf16.mxu0 0
        %3251 = vmatpush1.bf16.msra.mxu0 0
        %3252 = vmatprep.subr.bf16.mxu0 0
        %3253 = vmatpush1.bf16.msra.mxu0 0
        %3254 = vmatprep.subr.bf16.mxu0 0
        %3255 = vmatpush1.bf16.msra.mxu0 0
        %3256 = vmatprep.subr.bf16.mxu0 0
        %3257 = vmatpush1.bf16.msra.mxu0 0
        %3258 = vmatprep.subr.bf16.mxu0 0
        %3259 = vmatpush1.bf16.msra.mxu0 0
        %3260 = vmatprep.subr.bf16.mxu0 0
        %3261 = vmatpush1.bf16.msra.mxu0 0
        %3262 = vmatprep.subr.bf16.mxu0 0
        %3263 = vmatpush1.bf16.msra.mxu0 0
        %3264 = vmatprep.subr.bf16.mxu0 0
        %3265 = vmatpush1.bf16.msra.mxu0 0
        %3266 = vmatprep.mubr.bf16.mxu0 0
        %3267 = vmatmul.mubr.bf16.gmra.mrb[0].mxu0 %v3146
        %v3268 = vpop.f32.mrb[0].mxu0
        %v3269 = vadd.f32 0.0, %v3268
        %v3270 = vpop.f32.mrb[0].mxu0
        %v3271 = vadd.f32 0.0, %v3270
        %v3272 = vpop.f32.mrb[0].mxu0
        %v3273 = vadd.f32 0.0, %v3272
        %v3274 = vpop.f32.mrb[0].mxu0
        %v3275 = vadd.f32 0.0, %v3274
        %3276 = vmatprep.mubr.bf16.mxu0 0
        %3277 = vmatmul.mubr.bf16.gmra.mrb[0].mxu0 %v3147
        %v3278 = vpop.f32.mrb[0].mxu0
        %v3279 = vadd.f32 0.0, %v3278
        %v3280 = vpop.f32.mrb[0].mxu0
        %v3281 = vadd.f32 0.0, %v3280
        %v3282 = vpop.f32.mrb[0].mxu0
        %v3283 = vadd.f32 0.0, %v3282
        %v3284 = vpop.f32.mrb[0].mxu0
        %v3285 = vadd.f32 0.0, %v3284
        %3286 = vmatprep.mubr.bf16.mxu0 0
        %3287 = vmatmul.mubr.bf16.gmra.mrb[0].mxu0 %v3148
        %v3288 = vpop.f32.mrb[0].mxu0
        %v3289 = vadd.f32 0.0, %v3288
        %v3290 = vpop.f32.mrb[0].mxu0
        %v3291 = vadd.f32 0.0, %v3290
        %v3292 = vpop.f32.mrb[0].mxu0
        %v3293 = vadd.f32 0.0, %v3292
        %v3294 = vpop.f32.mrb[0].mxu0
        %v3295 = vadd.f32 0.0, %v3294
        %3296 = vmatprep.mubr.bf16.mxu0 0
        %3297 = vmatmul.mubr.bf16.gmra.mrb[0].mxu0 %v3149
        %v3298 = vpop.f32.mrb[0].mxu0
        %v3299 = vadd.f32 0.0, %v3298
        %v3300 = vpop.f32.mrb[0].mxu0
        %v3301 = vadd.f32 0.0, %v3300
        %v3302 = vpop.f32.mrb[0].mxu0
        %v3303 = vadd.f32 0.0, %v3302
        %v3304 = vpop.f32.mrb[0].mxu0
        %v3305 = vadd.f32 0.0, %v3304
        %3306 = vdwg.mxu0
        %v3307 = vadd.f32 %v3048, %v3269
        %v3308 = vadd.f32 %v3050, %v3271
        %v3309 = vadd.f32 %v3052, %v3273
        %v3310 = vadd.f32 %v3054, %v3275
        %v3311 = vadd.f32 %v3058, %v3279
        %v3312 = vadd.f32 %v3060, %v3281
        %v3313 = vadd.f32 %v3062, %v3283
        %v3314 = vadd.f32 %v3064, %v3285
        %v3315 = vadd.f32 %v3068, %v3289
        %v3316 = vadd.f32 %v3070, %v3291
        %v3317 = vadd.f32 %v3072, %v3293
        %v3318 = vadd.f32 %v3074, %v3295
        %v3319 = vadd.f32 %v3078, %v3299
        %v3320 = vadd.f32 %v3080, %v3301
        %v3321 = vadd.f32 %v3082, %v3303
        %v3322 = vadd.f32 %v3084, %v3305
        %s3323 = scalar_lea.vmem %s4, 384
        %v3324 = vld [vmem:[%s3323] sm:$0xff]
        %v3325 = vld [vmem:[%s3323 + $0x8] sm:$0xff]
        %v3326 = vld [vmem:[%s3323 + $0x10] sm:$0xff]
        %v3327 = vld [vmem:[%s3323 + $0x18] sm:$0xff]
        %v3328 = vld [vmem:[%s3323 + $0x20] sm:$0xff]
        %v3329 = vld [vmem:[%s3323 + $0x28] sm:$0xff]
        %v3330 = vld [vmem:[%s3323 + $0x30] sm:$0xff]
        %v3331 = vld [vmem:[%s3323 + $0x38] sm:$0xff]
        %v3332 = vld [vmem:[%s3323 + $0x40] sm:$0xff]
        %v3333 = vld [vmem:[%s3323 + $0x48] sm:$0xff]
        %v3334 = vld [vmem:[%s3323 + $0x50] sm:$0xff]
        %v3335 = vld [vmem:[%s3323 + $0x58] sm:$0xff]
        %v3336 = vld [vmem:[%s3323 + $0x60] sm:$0xff]
        %v3337 = vld [vmem:[%s3323 + $0x68] sm:$0xff]
        %v3338 = vld [vmem:[%s3323 + $0x70] sm:$0xff]
        %v3339 = vld [vmem:[%s3323 + $0x78] sm:$0xff]
        %v3341 = vunpack.c.l.b16 %v2570
        %v3342 = vpack.c.b16 %v2599, %v2597
        %v3343 = vpack.c.b16 %v2603, %v2601
        %v3344 = vpack.c.b16 %v2607, %v2605
        %v3345 = vpack.c.b16 %v3341, %v2609
        %v3366 = vunpack.c.l.b16 %v3324
        %v3367 = vunpack.c.h.b16 %v3324
        %v3368 = vunpack.c.l.b16 %v3325
        %v3369 = vunpack.c.h.b16 %v3325
        %v3370 = vunpack.c.l.b16 %v3326
        %v3371 = vunpack.c.h.b16 %v3326
        %v3372 = vunpack.c.l.b16 %v3327
        %v3373 = vunpack.c.h.b16 %v3327
        %v3374 = vunpack.c.l.b16 %v3328
        %v3375 = vunpack.c.h.b16 %v3328
        %v3376 = vunpack.c.l.b16 %v3329
        %v3377 = vunpack.c.h.b16 %v3329
        %v3378 = vunpack.c.l.b16 %v3330
        %v3379 = vunpack.c.h.b16 %v3330
        %v3380 = vunpack.c.l.b16 %v3331
        %v3381 = vunpack.c.h.b16 %v3331
        %v3382 = vunpack.c.l.b16 %v3332
        %v3383 = vunpack.c.h.b16 %v3332
        %v3384 = vunpack.c.l.b16 %v3333
        %v3385 = vunpack.c.h.b16 %v3333
        %v3386 = vunpack.c.l.b16 %v3334
        %v3387 = vunpack.c.h.b16 %v3334
        %v3388 = vunpack.c.l.b16 %v3335
        %v3389 = vunpack.c.h.b16 %v3335
        %v3390 = vunpack.c.l.b16 %v3336
        %v3391 = vunpack.c.h.b16 %v3336
        %v3392 = vunpack.c.l.b16 %v3337
        %v3393 = vunpack.c.h.b16 %v3337
        %v3394 = vunpack.c.l.b16 %v3338
        %v3395 = vunpack.c.h.b16 %v3338
        %v3396 = vunpack.c.l.b16 %v3339
        %v3397 = vunpack.c.h.b16 %v3339
        %v3398 = vpack.c.b16 %v3368, %v3366
        %v3399 = vpack.c.b16 %v3369, %v3367
        %v3400 = vpack.c.b16 %v3372, %v3370
        %v3401 = vpack.c.b16 %v3373, %v3371
        %v3402 = vpack.c.b16 %v3376, %v3374
        %v3403 = vpack.c.b16 %v3377, %v3375
        %v3404 = vpack.c.b16 %v3380, %v3378
        %v3405 = vpack.c.b16 %v3381, %v3379
        %v3406 = vpack.c.b16 %v3384, %v3382
        %v3407 = vpack.c.b16 %v3385, %v3383
        %v3408 = vpack.c.b16 %v3388, %v3386
        %v3409 = vpack.c.b16 %v3389, %v3387
        %v3410 = vpack.c.b16 %v3392, %v3390
        %v3411 = vpack.c.b16 %v3393, %v3391
        %v3412 = vpack.c.b16 %v3396, %v3394
        %v3413 = vpack.c.b16 %v3397, %v3395
        %3430 = vmatprep.subr.bf16.mxu0 %v3399
        %3431 = vmatpush1.bf16.msra.mxu0 %v3398
        %3432 = vmatprep.subr.bf16.mxu0 %v3401
        %3433 = vmatpush1.bf16.msra.mxu0 %v3400
        %3434 = vmatprep.subr.bf16.mxu0 %v3403
        %3435 = vmatpush1.bf16.msra.mxu0 %v3402
        %3436 = vmatprep.subr.bf16.mxu0 %v3405
        %3437 = vmatpush1.bf16.msra.mxu0 %v3404
        %3438 = vmatprep.subr.bf16.mxu0 %v3407
        %3439 = vmatpush1.bf16.msra.mxu0 %v3406
        %3440 = vmatprep.subr.bf16.mxu0 %v3409
        %3441 = vmatpush1.bf16.msra.mxu0 %v3408
        %3442 = vmatprep.subr.bf16.mxu0 %v3411
        %3443 = vmatpush1.bf16.msra.mxu0 %v3410
        %3444 = vmatprep.subr.bf16.mxu0 %v3413
        %3445 = vmatpush1.bf16.msra.mxu0 %v3412
        %3446 = vmatprep.subr.bf16.mxu0 0
        %3447 = vmatpush1.bf16.msra.mxu0 0
        %3448 = vmatprep.subr.bf16.mxu0 0
        %3449 = vmatpush1.bf16.msra.mxu0 0
        %3450 = vmatprep.subr.bf16.mxu0 0
        %3451 = vmatpush1.bf16.msra.mxu0 0
        %3452 = vmatprep.subr.bf16.mxu0 0
        %3453 = vmatpush1.bf16.msra.mxu0 0
        %3454 = vmatprep.subr.bf16.mxu0 0
        %3455 = vmatpush1.bf16.msra.mxu0 0
        %3456 = vmatprep.subr.bf16.mxu0 0
        %3457 = vmatpush1.bf16.msra.mxu0 0
        %3458 = vmatprep.subr.bf16.mxu0 0
        %3459 = vmatpush1.bf16.msra.mxu0 0
        %3460 = vmatprep.subr.bf16.mxu0 0
        %3461 = vmatpush1.bf16.msra.mxu0 0
        %3462 = vmatprep.mubr.bf16.mxu0 0
        %3463 = vmatmul.mubr.bf16.gmra.mrb[0].mxu0 %v3342
        %v3464 = vpop.f32.mrb[0].mxu0
        %v3465 = vadd.f32 0.0, %v3464
        %v3466 = vpop.f32.mrb[0].mxu0
        %v3467 = vadd.f32 0.0, %v3466
        %v3468 = vpop.f32.mrb[0].mxu0
        %v3469 = vadd.f32 0.0, %v3468
        %v3470 = vpop.f32.mrb[0].mxu0
        %v3471 = vadd.f32 0.0, %v3470
        %3472 = vmatprep.mubr.bf16.mxu0 0
        %3473 = vmatmul.mubr.bf16.gmra.mrb[0].mxu0 %v3343
        %v3474 = vpop.f32.mrb[0].mxu0
        %v3475 = vadd.f32 0.0, %v3474
        %v3476 = vpop.f32.mrb[0].mxu0
        %v3477 = vadd.f32 0.0, %v3476
        %v3478 = vpop.f32.mrb[0].mxu0
        %v3479 = vadd.f32 0.0, %v3478
        %v3480 = vpop.f32.mrb[0].mxu0
        %v3481 = vadd.f32 0.0, %v3480
        %3482 = vmatprep.mubr.bf16.mxu0 0
        %3483 = vmatmul.mubr.bf16.gmra.mrb[0].mxu0 %v3344
        %v3484 = vpop.f32.mrb[0].mxu0
        %v3485 = vadd.f32 0.0, %v3484
        %v3486 = vpop.f32.mrb[0].mxu0
        %v3487 = vadd.f32 0.0, %v3486
        %v3488 = vpop.f32.mrb[0].mxu0
        %v3489 = vadd.f32 0.0, %v3488
        %v3490 = vpop.f32.mrb[0].mxu0
        %v3491 = vadd.f32 0.0, %v3490
        %3492 = vmatprep.mubr.bf16.mxu0 0
        %3493 = vmatmul.mubr.bf16.gmra.mrb[0].mxu0 %v3345
        %v3494 = vpop.f32.mrb[0].mxu0
        %v3495 = vadd.f32 0.0, %v3494
        %v3496 = vpop.f32.mrb[0].mxu0
        %v3497 = vadd.f32 0.0, %v3496
        %v3498 = vpop.f32.mrb[0].mxu0
        %v3499 = vadd.f32 0.0, %v3498
        %v3500 = vpop.f32.mrb[0].mxu0
        %v3501 = vadd.f32 0.0, %v3500
        %3502 = vdwg.mxu0
        %v3503 = vadd.f32 %v3307, %v3465
        %v3504 = vadd.f32 %v3308, %v3467
        %v3505 = vadd.f32 %v3309, %v3469
        %v3506 = vadd.f32 %v3310, %v3471
        %v3507 = vadd.f32 %v3311, %v3475
        %v3508 = vadd.f32 %v3312, %v3477
        %v3509 = vadd.f32 %v3313, %v3479
        %v3510 = vadd.f32 %v3314, %v3481
        %v3511 = vadd.f32 %v3315, %v3485
        %v3512 = vadd.f32 %v3316, %v3487
        %v3513 = vadd.f32 %v3317, %v3489
        %v3514 = vadd.f32 %v3318, %v3491
        %v3515 = vadd.f32 %v3319, %v3495
        %v3516 = vadd.f32 %v3320, %v3497
        %v3517 = vadd.f32 %v3321, %v3499
        %v3518 = vadd.f32 %v3322, %v3501
        %v3519 = vunpack.c.h.b16 %v2570
        %v3520 = vpack.c.b16 %v3341, %v3341
        %v3521 = vpack.c.b16 %v3519, %v3519
        %v3523 = vshrl.u32 %v3520, 16
        %v3525 = vrot.slane %v3523, 4
        %v3526 = vshll.u32 %v3520, 16
        %v3528 = vrot.slane %v3526, 5
        %v3529 = vor.u32 %v3525, %v3528
        %v3530 = vrot.slane %v3529, 4
        %v3532 = vshll.u32 %v3521, 16
        %v3534 = vrot.slane %v3532, 5
        %v3535 = vsel %vm1286, %v3530, %v3534
        %s3536 = scalar_lea.vmem %s4, 512
        %v3537 = vld [vmem:[%s3536] sm:$0xff]
        %v3538 = vld [vmem:[%s3536 + $0x8] sm:$0xff]
        %v3539 = vld [vmem:[%s3536 + $0x10] sm:$0xff]
        %v3540 = vld [vmem:[%s3536 + $0x18] sm:$0xff]
        %v3541 = vld [vmem:[%s3536 + $0x20] sm:$0xff]
        %v3542 = vld [vmem:[%s3536 + $0x28] sm:$0xff]
        %v3543 = vld [vmem:[%s3536 + $0x30] sm:$0xff]
        %v3544 = vld [vmem:[%s3536 + $0x38] sm:$0xff]
        %v3545 = vld [vmem:[%s3536 + $0x40] sm:$0xff]
        %v3546 = vld [vmem:[%s3536 + $0x48] sm:$0xff]
        %v3547 = vld [vmem:[%s3536 + $0x50] sm:$0xff]
        %v3548 = vld [vmem:[%s3536 + $0x58] sm:$0xff]
        %v3549 = vld [vmem:[%s3536 + $0x60] sm:$0xff]
        %v3550 = vld [vmem:[%s3536 + $0x68] sm:$0xff]
        %v3551 = vld [vmem:[%s3536 + $0x70] sm:$0xff]
        %v3552 = vld [vmem:[%s3536 + $0x78] sm:$0xff]
        %v3553 = vunpack.c.l.b16 %v3535
        %v3554 = vpack.c.b16 %v2758, %v2757
        %v3555 = vpack.c.b16 %v2760, %v2759
        %v3556 = vpack.c.b16 %v2762, %v2761
        %v3557 = vpack.c.b16 %v3553, %v2763
        %v3578 = vunpack.c.l.b16 %v3537
        %v3579 = vunpack.c.h.b16 %v3537
        %v3580 = vunpack.c.l.b16 %v3538
        %v3581 = vunpack.c.h.b16 %v3538
        %v3582 = vunpack.c.l.b16 %v3539
        %v3583 = vunpack.c.h.b16 %v3539
        %v3584 = vunpack.c.l.b16 %v3540
        %v3585 = vunpack.c.h.b16 %v3540
        %v3586 = vunpack.c.l.b16 %v3541
        %v3587 = vunpack.c.h.b16 %v3541
        %v3588 = vunpack.c.l.b16 %v3542
        %v3589 = vunpack.c.h.b16 %v3542
        %v3590 = vunpack.c.l.b16 %v3543
        %v3591 = vunpack.c.h.b16 %v3543
        %v3592 = vunpack.c.l.b16 %v3544
        %v3593 = vunpack.c.h.b16 %v3544
        %v3594 = vunpack.c.l.b16 %v3545
        %v3595 = vunpack.c.h.b16 %v3545
        %v3596 = vunpack.c.l.b16 %v3546
        %v3597 = vunpack.c.h.b16 %v3546
        %v3598 = vunpack.c.l.b16 %v3547
        %v3599 = vunpack.c.h.b16 %v3547
        %v3600 = vunpack.c.l.b16 %v3548
        %v3601 = vunpack.c.h.b16 %v3548
        %v3602 = vunpack.c.l.b16 %v3549
        %v3603 = vunpack.c.h.b16 %v3549
        %v3604 = vunpack.c.l.b16 %v3550
        %v3605 = vunpack.c.h.b16 %v3550
        %v3606 = vunpack.c.l.b16 %v3551
        %v3607 = vunpack.c.h.b16 %v3551
        %v3608 = vunpack.c.l.b16 %v3552
        %v3609 = vunpack.c.h.b16 %v3552
        %v3610 = vpack.c.b16 %v3580, %v3578
        %v3611 = vpack.c.b16 %v3581, %v3579
        %v3612 = vpack.c.b16 %v3584, %v3582
        %v3613 = vpack.c.b16 %v3585, %v3583
        %v3614 = vpack.c.b16 %v3588, %v3586
        %v3615 = vpack.c.b16 %v3589, %v3587
        %v3616 = vpack.c.b16 %v3592, %v3590
        %v3617 = vpack.c.b16 %v3593, %v3591
        %v3618 = vpack.c.b16 %v3596, %v3594
        %v3619 = vpack.c.b16 %v3597, %v3595
        %v3620 = vpack.c.b16 %v3600, %v3598
        %v3621 = vpack.c.b16 %v3601, %v3599
        %v3622 = vpack.c.b16 %v3604, %v3602
        %v3623 = vpack.c.b16 %v3605, %v3603
        %v3624 = vpack.c.b16 %v3608, %v3606
        %v3625 = vpack.c.b16 %v3609, %v3607
        %3642 = vmatprep.subr.bf16.mxu0 %v3611
        %3643 = vmatpush1.bf16.msra.mxu0 %v3610
        %3644 = vmatprep.subr.bf16.mxu0 %v3613
        %3645 = vmatpush1.bf16.msra.mxu0 %v3612
        %3646 = vmatprep.subr.bf16.mxu0 %v3615
        %3647 = vmatpush1.bf16.msra.mxu0 %v3614
        %3648 = vmatprep.subr.bf16.mxu0 %v3617
        %3649 = vmatpush1.bf16.msra.mxu0 %v3616
        %3650 = vmatprep.subr.bf16.mxu0 %v3619
        %3651 = vmatpush1.bf16.msra.mxu0 %v3618
        %3652 = vmatprep.subr.bf16.mxu0 %v3621
        %3653 = vmatpush1.bf16.msra.mxu0 %v3620
        %3654 = vmatprep.subr.bf16.mxu0 %v3623
        %3655 = vmatpush1.bf16.msra.mxu0 %v3622
        %3656 = vmatprep.subr.bf16.mxu0 %v3625
        %3657 = vmatpush1.bf16.msra.mxu0 %v3624
        %3658 = vmatprep.subr.bf16.mxu0 0
        %3659 = vmatpush1.bf16.msra.mxu0 0
        %3660 = vmatprep.subr.bf16.mxu0 0
        %3661 = vmatpush1.bf16.msra.mxu0 0
        %3662 = vmatprep.subr.bf16.mxu0 0
        %3663 = vmatpush1.bf16.msra.mxu0 0
        %3664 = vmatprep.subr.bf16.mxu0 0
        %3665 = vmatpush1.bf16.msra.mxu0 0
        %3666 = vmatprep.subr.bf16.mxu0 0
        %3667 = vmatpush1.bf16.msra.mxu0 0
        %3668 = vmatprep.subr.bf16.mxu0 0
        %3669 = vmatpush1.bf16.msra.mxu0 0
        %3670 = vmatprep.subr.bf16.mxu0 0
        %3671 = vmatpush1.bf16.msra.mxu0 0
        %3672 = vmatprep.subr.bf16.mxu0 0
        %3673 = vmatpush1.bf16.msra.mxu0 0
        %3674 = vmatprep.mubr.bf16.mxu0 0
        %3675 = vmatmul.mubr.bf16.gmra.mrb[0].mxu0 %v3554
        %v3676 = vpop.f32.mrb[0].mxu0
        %v3677 = vadd.f32 0.0, %v3676
        %v3678 = vpop.f32.mrb[0].mxu0
        %v3679 = vadd.f32 0.0, %v3678
        %v3680 = vpop.f32.mrb[0].mxu0
        %v3681 = vadd.f32 0.0, %v3680
        %v3682 = vpop.f32.mrb[0].mxu0
        %v3683 = vadd.f32 0.0, %v3682
        %3684 = vmatprep.mubr.bf16.mxu0 0
        %3685 = vmatmul.mubr.bf16.gmra.mrb[0].mxu0 %v3555
        %v3686 = vpop.f32.mrb[0].mxu0
        %v3687 = vadd.f32 0.0, %v3686
        %v3688 = vpop.f32.mrb[0].mxu0
        %v3689 = vadd.f32 0.0, %v3688
        %v3690 = vpop.f32.mrb[0].mxu0
        %v3691 = vadd.f32 0.0, %v3690
        %v3692 = vpop.f32.mrb[0].mxu0
        %v3693 = vadd.f32 0.0, %v3692
        %3694 = vmatprep.mubr.bf16.mxu0 0
        %3695 = vmatmul.mubr.bf16.gmra.mrb[0].mxu0 %v3556
        %v3696 = vpop.f32.mrb[0].mxu0
        %v3697 = vadd.f32 0.0, %v3696
        %v3698 = vpop.f32.mrb[0].mxu0
        %v3699 = vadd.f32 0.0, %v3698
        %v3700 = vpop.f32.mrb[0].mxu0
        %v3701 = vadd.f32 0.0, %v3700
        %v3702 = vpop.f32.mrb[0].mxu0
        %v3703 = vadd.f32 0.0, %v3702
        %3704 = vmatprep.mubr.bf16.mxu0 0
        %3705 = vmatmul.mubr.bf16.gmra.mrb[0].mxu0 %v3557
        %v3706 = vpop.f32.mrb[0].mxu0
        %v3707 = vadd.f32 0.0, %v3706
        %v3708 = vpop.f32.mrb[0].mxu0
        %v3709 = vadd.f32 0.0, %v3708
        %v3710 = vpop.f32.mrb[0].mxu0
        %v3711 = vadd.f32 0.0, %v3710
        %v3712 = vpop.f32.mrb[0].mxu0
        %v3713 = vadd.f32 0.0, %v3712
        %3714 = vdwg.mxu0
        %v3715 = vadd.f32 %v3503, %v3677
        %v3716 = vadd.f32 %v3504, %v3679
        %v3717 = vadd.f32 %v3505, %v3681
        %v3718 = vadd.f32 %v3506, %v3683
        %v3719 = vadd.f32 %v3507, %v3687
        %v3720 = vadd.f32 %v3508, %v3689
        %v3721 = vadd.f32 %v3509, %v3691
        %v3722 = vadd.f32 %v3510, %v3693
        %v3723 = vadd.f32 %v3511, %v3697
        %v3724 = vadd.f32 %v3512, %v3699
        %v3725 = vadd.f32 %v3513, %v3701
        %v3726 = vadd.f32 %v3514, %v3703
        %v3727 = vadd.f32 %v3515, %v3707
        %v3728 = vadd.f32 %v3516, %v3709
        %v3729 = vadd.f32 %v3517, %v3711
        %v3730 = vadd.f32 %v3518, %v3713
        %v3731 = vrot.slane %v3520, 5
        %v3732 = vrot.slane %v3731, 4
        %v3733 = vrot.slane %v3521, 5
        %v3734 = vsel %vm3088, %v3732, %v3733
        %s3735 = scalar_lea.vmem %s4, 640
        %v3736 = vld [vmem:[%s3735] sm:$0xff]
        %v3737 = vld [vmem:[%s3735 + $0x8] sm:$0xff]
        %v3738 = vld [vmem:[%s3735 + $0x10] sm:$0xff]
        %v3739 = vld [vmem:[%s3735 + $0x18] sm:$0xff]
        %v3740 = vld [vmem:[%s3735 + $0x20] sm:$0xff]
        %v3741 = vld [vmem:[%s3735 + $0x28] sm:$0xff]
        %v3742 = vld [vmem:[%s3735 + $0x30] sm:$0xff]
        %v3743 = vld [vmem:[%s3735 + $0x38] sm:$0xff]
        %v3744 = vld [vmem:[%s3735 + $0x40] sm:$0xff]
        %v3745 = vld [vmem:[%s3735 + $0x48] sm:$0xff]
        %v3746 = vld [vmem:[%s3735 + $0x50] sm:$0xff]
        %v3747 = vld [vmem:[%s3735 + $0x58] sm:$0xff]
        %v3748 = vld [vmem:[%s3735 + $0x60] sm:$0xff]
        %v3749 = vld [vmem:[%s3735 + $0x68] sm:$0xff]
        %v3750 = vld [vmem:[%s3735 + $0x70] sm:$0xff]
        %v3751 = vld [vmem:[%s3735 + $0x78] sm:$0xff]
        %v3752 = vunpack.c.l.b16 %v3734
        %v3753 = vpack.c.b16 %v3140, %v3139
        %v3754 = vpack.c.b16 %v3142, %v3141
        %v3755 = vpack.c.b16 %v3144, %v3143
        %v3756 = vpack.c.b16 %v3752, %v3145
        %v3777 = vunpack.c.l.b16 %v3736
        %v3778 = vunpack.c.h.b16 %v3736
        %v3779 = vunpack.c.l.b16 %v3737
        %v3780 = vunpack.c.h.b16 %v3737
        %v3781 = vunpack.c.l.b16 %v3738
        %v3782 = vunpack.c.h.b16 %v3738
        %v3783 = vunpack.c.l.b16 %v3739
        %v3784 = vunpack.c.h.b16 %v3739
        %v3785 = vunpack.c.l.b16 %v3740
        %v3786 = vunpack.c.h.b16 %v3740
        %v3787 = vunpack.c.l.b16 %v3741
        %v3788 = vunpack.c.h.b16 %v3741
        %v3789 = vunpack.c.l.b16 %v3742
        %v3790 = vunpack.c.h.b16 %v3742
        %v3791 = vunpack.c.l.b16 %v3743
        %v3792 = vunpack.c.h.b16 %v3743
        %v3793 = vunpack.c.l.b16 %v3744
        %v3794 = vunpack.c.h.b16 %v3744
        %v3795 = vunpack.c.l.b16 %v3745
        %v3796 = vunpack.c.h.b16 %v3745
        %v3797 = vunpack.c.l.b16 %v3746
        %v3798 = vunpack.c.h.b16 %v3746
        %v3799 = vunpack.c.l.b16 %v3747
        %v3800 = vunpack.c.h.b16 %v3747
        %v3801 = vunpack.c.l.b16 %v3748
        %v3802 = vunpack.c.h.b16 %v3748
        %v3803 = vunpack.c.l.b16 %v3749
        %v3804 = vunpack.c.h.b16 %v3749
        %v3805 = vunpack.c.l.b16 %v3750
        %v3806 = vunpack.c.h.b16 %v3750
        %v3807 = vunpack.c.l.b16 %v3751
        %v3808 = vunpack.c.h.b16 %v3751
        %v3809 = vpack.c.b16 %v3779, %v3777
        %v3810 = vpack.c.b16 %v3780, %v3778
        %v3811 = vpack.c.b16 %v3783, %v3781
        %v3812 = vpack.c.b16 %v3784, %v3782
        %v3813 = vpack.c.b16 %v3787, %v3785
        %v3814 = vpack.c.b16 %v3788, %v3786
        %v3815 = vpack.c.b16 %v3791, %v3789
        %v3816 = vpack.c.b16 %v3792, %v3790
        %v3817 = vpack.c.b16 %v3795, %v3793
        %v3818 = vpack.c.b16 %v3796, %v3794
        %v3819 = vpack.c.b16 %v3799, %v3797
        %v3820 = vpack.c.b16 %v3800, %v3798
        %v3821 = vpack.c.b16 %v3803, %v3801
        %v3822 = vpack.c.b16 %v3804, %v3802
        %v3823 = vpack.c.b16 %v3807, %v3805
        %v3824 = vpack.c.b16 %v3808, %v3806
        %3841 = vmatprep.subr.bf16.mxu0 %v3810
        %3842 = vmatpush1.bf16.msra.mxu0 %v3809
        %3843 = vmatprep.subr.bf16.mxu0 %v3812
        %3844 = vmatpush1.bf16.msra.mxu0 %v3811
        %3845 = vmatprep.subr.bf16.mxu0 %v3814
        %3846 = vmatpush1.bf16.msra.mxu0 %v3813
        %3847 = vmatprep.subr.bf16.mxu0 %v3816
        %3848 = vmatpush1.bf16.msra.mxu0 %v3815
        %3849 = vmatprep.subr.bf16.mxu0 %v3818
        %3850 = vmatpush1.bf16.msra.mxu0 %v3817
        %3851 = vmatprep.subr.bf16.mxu0 %v3820
        %3852 = vmatpush1.bf16.msra.mxu0 %v3819
        %3853 = vmatprep.subr.bf16.mxu0 %v3822
        %3854 = vmatpush1.bf16.msra.mxu0 %v3821
        %3855 = vmatprep.subr.bf16.mxu0 %v3824
        %3856 = vmatpush1.bf16.msra.mxu0 %v3823
        %3857 = vmatprep.subr.bf16.mxu0 0
        %3858 = vmatpush1.bf16.msra.mxu0 0
        %3859 = vmatprep.subr.bf16.mxu0 0
        %3860 = vmatpush1.bf16.msra.mxu0 0
        %3861 = vmatprep.subr.bf16.mxu0 0
        %3862 = vmatpush1.bf16.msra.mxu0 0
        %3863 = vmatprep.subr.bf16.mxu0 0
        %3864 = vmatpush1.bf16.msra.mxu0 0
        %3865 = vmatprep.subr.bf16.mxu0 0
        %3866 = vmatpush1.bf16.msra.mxu0 0
        %3867 = vmatprep.subr.bf16.mxu0 0
        %3868 = vmatpush1.bf16.msra.mxu0 0
        %3869 = vmatprep.subr.bf16.mxu0 0
        %3870 = vmatpush1.bf16.msra.mxu0 0
        %3871 = vmatprep.subr.bf16.mxu0 0
        %3872 = vmatpush1.bf16.msra.mxu0 0
        %3873 = vmatprep.mubr.bf16.mxu0 0
        %3874 = vmatmul.mubr.bf16.gmra.mrb[0].mxu0 %v3753
        %v3875 = vpop.f32.mrb[0].mxu0
        %v3876 = vadd.f32 0.0, %v3875
        %v3877 = vpop.f32.mrb[0].mxu0
        %v3878 = vadd.f32 0.0, %v3877
        %v3879 = vpop.f32.mrb[0].mxu0
        %v3880 = vadd.f32 0.0, %v3879
        %v3881 = vpop.f32.mrb[0].mxu0
        %v3882 = vadd.f32 0.0, %v3881
        %3883 = vmatprep.mubr.bf16.mxu0 0
        %3884 = vmatmul.mubr.bf16.gmra.mrb[0].mxu0 %v3754
        %v3885 = vpop.f32.mrb[0].mxu0
        %v3886 = vadd.f32 0.0, %v3885
        %v3887 = vpop.f32.mrb[0].mxu0
        %v3888 = vadd.f32 0.0, %v3887
        %v3889 = vpop.f32.mrb[0].mxu0
        %v3890 = vadd.f32 0.0, %v3889
        %v3891 = vpop.f32.mrb[0].mxu0
        %v3892 = vadd.f32 0.0, %v3891
        %3893 = vmatprep.mubr.bf16.mxu0 0
        %3894 = vmatmul.mubr.bf16.gmra.mrb[0].mxu0 %v3755
        %v3895 = vpop.f32.mrb[0].mxu0
        %v3896 = vadd.f32 0.0, %v3895
        %v3897 = vpop.f32.mrb[0].mxu0
        %v3898 = vadd.f32 0.0, %v3897
        %v3899 = vpop.f32.mrb[0].mxu0
        %v3900 = vadd.f32 0.0, %v3899
        %v3901 = vpop.f32.mrb[0].mxu0
        %v3902 = vadd.f32 0.0, %v3901
        %3903 = vmatprep.mubr.bf16.mxu0 0
        %3904 = vmatmul.mubr.bf16.gmra.mrb[0].mxu0 %v3756
        %v3905 = vpop.f32.mrb[0].mxu0
        %v3906 = vadd.f32 0.0, %v3905
        %v3907 = vpop.f32.mrb[0].mxu0
        %v3908 = vadd.f32 0.0, %v3907
        %v3909 = vpop.f32.mrb[0].mxu0
        %v3910 = vadd.f32 0.0, %v3909
        %v3911 = vpop.f32.mrb[0].mxu0
        %v3912 = vadd.f32 0.0, %v3911
        %3913 = vdwg.mxu0
        %v3914 = vadd.f32 %v3715, %v3876
        %v3915 = vadd.f32 %v3716, %v3878
        %v3916 = vadd.f32 %v3717, %v3880
        %v3917 = vadd.f32 %v3718, %v3882
        %v3918 = vadd.f32 %v3719, %v3886
        %v3919 = vadd.f32 %v3720, %v3888
        %v3920 = vadd.f32 %v3721, %v3890
        %v3921 = vadd.f32 %v3722, %v3892
        %v3922 = vadd.f32 %v3723, %v3896
        %v3923 = vadd.f32 %v3724, %v3898
        %v3924 = vadd.f32 %v3725, %v3900
        %v3925 = vadd.f32 %v3726, %v3902
        %v3926 = vadd.f32 %v3727, %v3906
        %v3927 = vadd.f32 %v3728, %v3908
        %v3928 = vadd.f32 %v3729, %v3910
        %v3929 = vadd.f32 %v3730, %v3912
        %s3930 = scalar_lea.vmem %s4, 768
        %v3931 = vld [vmem:[%s3930] sm:$0xff]
        %v3932 = vld [vmem:[%s3930 + $0x8] sm:$0xff]
        %v3933 = vld [vmem:[%s3930 + $0x10] sm:$0xff]
        %v3934 = vld [vmem:[%s3930 + $0x18] sm:$0xff]
        %v3935 = vld [vmem:[%s3930 + $0x20] sm:$0xff]
        %v3936 = vld [vmem:[%s3930 + $0x28] sm:$0xff]
        %v3937 = vld [vmem:[%s3930 + $0x30] sm:$0xff]
        %v3938 = vld [vmem:[%s3930 + $0x38] sm:$0xff]
        %v3939 = vld [vmem:[%s3930 + $0x40] sm:$0xff]
        %v3940 = vld [vmem:[%s3930 + $0x48] sm:$0xff]
        %v3941 = vld [vmem:[%s3930 + $0x50] sm:$0xff]
        %v3942 = vld [vmem:[%s3930 + $0x58] sm:$0xff]
        %v3943 = vld [vmem:[%s3930 + $0x60] sm:$0xff]
        %v3944 = vld [vmem:[%s3930 + $0x68] sm:$0xff]
        %v3945 = vld [vmem:[%s3930 + $0x70] sm:$0xff]
        %v3946 = vld [vmem:[%s3930 + $0x78] sm:$0xff]
        %v3947 = vpack.c.b16 %v2595, %v3341
        %v3965 = vunpack.c.l.b16 %v3931
        %v3966 = vunpack.c.h.b16 %v3931
        %v3967 = vunpack.c.l.b16 %v3932
        %v3968 = vunpack.c.h.b16 %v3932
        %v3969 = vunpack.c.l.b16 %v3933
        %v3970 = vunpack.c.h.b16 %v3933
        %v3971 = vunpack.c.l.b16 %v3934
        %v3972 = vunpack.c.h.b16 %v3934
        %v3973 = vunpack.c.l.b16 %v3935
        %v3974 = vunpack.c.h.b16 %v3935
        %v3975 = vunpack.c.l.b16 %v3936
        %v3976 = vunpack.c.h.b16 %v3936
        %v3977 = vunpack.c.l.b16 %v3937
        %v3978 = vunpack.c.h.b16 %v3937
        %v3979 = vunpack.c.l.b16 %v3938
        %v3980 = vunpack.c.h.b16 %v3938
        %v3981 = vunpack.c.l.b16 %v3939
        %v3982 = vunpack.c.h.b16 %v3939
        %v3983 = vunpack.c.l.b16 %v3940
        %v3984 = vunpack.c.h.b16 %v3940
        %v3985 = vunpack.c.l.b16 %v3941
        %v3986 = vunpack.c.h.b16 %v3941
        %v3987 = vunpack.c.l.b16 %v3942
        %v3988 = vunpack.c.h.b16 %v3942
        %v3989 = vunpack.c.l.b16 %v3943
        %v3990 = vunpack.c.h.b16 %v3943
        %v3991 = vunpack.c.l.b16 %v3944
        %v3992 = vunpack.c.h.b16 %v3944
        %v3993 = vunpack.c.l.b16 %v3945
        %v3994 = vunpack.c.h.b16 %v3945
        %v3995 = vunpack.c.l.b16 %v3946
        %v3996 = vunpack.c.h.b16 %v3946
        %v3997 = vpack.c.b16 %v3967, %v3965
        %v3998 = vpack.c.b16 %v3968, %v3966
        %v3999 = vpack.c.b16 %v3971, %v3969
        %v4000 = vpack.c.b16 %v3972, %v3970
        %v4001 = vpack.c.b16 %v3975, %v3973
        %v4002 = vpack.c.b16 %v3976, %v3974
        %v4003 = vpack.c.b16 %v3979, %v3977
        %v4004 = vpack.c.b16 %v3980, %v3978
        %v4005 = vpack.c.b16 %v3983, %v3981
        %v4006 = vpack.c.b16 %v3984, %v3982
        %v4007 = vpack.c.b16 %v3987, %v3985
        %v4008 = vpack.c.b16 %v3988, %v3986
        %v4009 = vpack.c.b16 %v3991, %v3989
        %v4010 = vpack.c.b16 %v3992, %v3990
        %v4011 = vpack.c.b16 %v3995, %v3993
        %v4012 = vpack.c.b16 %v3996, %v3994
        %4029 = vmatprep.subr.bf16.mxu0 %v3998
        %4030 = vmatpush1.bf16.msra.mxu0 %v3997
        %4031 = vmatprep.subr.bf16.mxu0 %v4000
        %4032 = vmatpush1.bf16.msra.mxu0 %v3999
        %4033 = vmatprep.subr.bf16.mxu0 %v4002
        %4034 = vmatpush1.bf16.msra.mxu0 %v4001
        %4035 = vmatprep.subr.bf16.mxu0 %v4004
        %4036 = vmatpush1.bf16.msra.mxu0 %v4003
        %4037 = vmatprep.subr.bf16.mxu0 %v4006
        %4038 = vmatpush1.bf16.msra.mxu0 %v4005
        %4039 = vmatprep.subr.bf16.mxu0 %v4008
        %4040 = vmatpush1.bf16.msra.mxu0 %v4007
        %4041 = vmatprep.subr.bf16.mxu0 %v4010
        %4042 = vmatpush1.bf16.msra.mxu0 %v4009
        %4043 = vmatprep.subr.bf16.mxu0 %v4012
        %4044 = vmatpush1.bf16.msra.mxu0 %v4011
        %4045 = vmatprep.subr.bf16.mxu0 0
        %4046 = vmatpush1.bf16.msra.mxu0 0
        %4047 = vmatprep.subr.bf16.mxu0 0
        %4048 = vmatpush1.bf16.msra.mxu0 0
        %4049 = vmatprep.subr.bf16.mxu0 0
        %4050 = vmatpush1.bf16.msra.mxu0 0
        %4051 = vmatprep.subr.bf16.mxu0 0
        %4052 = vmatpush1.bf16.msra.mxu0 0
        %4053 = vmatprep.subr.bf16.mxu0 0
        %4054 = vmatpush1.bf16.msra.mxu0 0
        %4055 = vmatprep.subr.bf16.mxu0 0
        %4056 = vmatpush1.bf16.msra.mxu0 0
        %4057 = vmatprep.subr.bf16.mxu0 0
        %4058 = vmatpush1.bf16.msra.mxu0 0
        %4059 = vmatprep.subr.bf16.mxu0 0
        %4060 = vmatpush1.bf16.msra.mxu0 0
        %4061 = vmatprep.mubr.bf16.mxu0 0
        %4062 = vmatmul.mubr.bf16.gmra.mrb[0].mxu0 %v2926
        %v4063 = vpop.f32.mrb[0].mxu0
        %v4064 = vadd.f32 0.0, %v4063
        %v4065 = vpop.f32.mrb[0].mxu0
        %v4066 = vadd.f32 0.0, %v4065
        %v4067 = vpop.f32.mrb[0].mxu0
        %v4068 = vadd.f32 0.0, %v4067
        %v4069 = vpop.f32.mrb[0].mxu0
        %v4070 = vadd.f32 0.0, %v4069
        %4071 = vmatprep.mubr.bf16.mxu0 0
        %4072 = vmatmul.mubr.bf16.gmra.mrb[0].mxu0 %v2927
        %v4073 = vpop.f32.mrb[0].mxu0
        %v4074 = vadd.f32 0.0, %v4073
        %v4075 = vpop.f32.mrb[0].mxu0
        %v4076 = vadd.f32 0.0, %v4075
        %v4077 = vpop.f32.mrb[0].mxu0
        %v4078 = vadd.f32 0.0, %v4077
        %v4079 = vpop.f32.mrb[0].mxu0
        %v4080 = vadd.f32 0.0, %v4079
        %4081 = vmatprep.mubr.bf16.mxu0 0
        %4082 = vmatmul.mubr.bf16.gmra.mrb[0].mxu0 %v2928
        %v4083 = vpop.f32.mrb[0].mxu0
        %v4084 = vadd.f32 0.0, %v4083
        %v4085 = vpop.f32.mrb[0].mxu0
        %v4086 = vadd.f32 0.0, %v4085
        %v4087 = vpop.f32.mrb[0].mxu0
        %v4088 = vadd.f32 0.0, %v4087
        %v4089 = vpop.f32.mrb[0].mxu0
        %v4090 = vadd.f32 0.0, %v4089
        %4091 = vmatprep.mubr.bf16.mxu0 0
        %4092 = vmatmul.mubr.bf16.gmra.mrb[0].mxu0 %v3947
        %v4093 = vpop.f32.mrb[0].mxu0
        %v4094 = vadd.f32 0.0, %v4093
        %v4095 = vpop.f32.mrb[0].mxu0
        %v4096 = vadd.f32 0.0, %v4095
        %v4097 = vpop.f32.mrb[0].mxu0
        %v4098 = vadd.f32 0.0, %v4097
        %v4099 = vpop.f32.mrb[0].mxu0
        %v4100 = vadd.f32 0.0, %v4099
        %4101 = vdwg.mxu0
        %v4102 = vadd.f32 %v3914, %v4064
        %v4103 = vadd.f32 %v3915, %v4066
        %v4104 = vadd.f32 %v3916, %v4068
        %v4105 = vadd.f32 %v3917, %v4070
        %v4106 = vadd.f32 %v3918, %v4074
        %v4107 = vadd.f32 %v3919, %v4076
        %v4108 = vadd.f32 %v3920, %v4078
        %v4109 = vadd.f32 %v3921, %v4080
        %v4110 = vadd.f32 %v3922, %v4084
        %v4111 = vadd.f32 %v3923, %v4086
        %v4112 = vadd.f32 %v3924, %v4088
        %v4113 = vadd.f32 %v3925, %v4090
        %v4114 = vadd.f32 %v3926, %v4094
        %v4115 = vadd.f32 %v3927, %v4096
        %v4116 = vadd.f32 %v3928, %v4098
        %v4117 = vadd.f32 %v3929, %v4100
        %s4118 = scalar_lea.vmem %s4, 896
        %v4119 = vld [vmem:[%s4118] sm:$0xff]
        %v4120 = vld [vmem:[%s4118 + $0x8] sm:$0xff]
        %v4121 = vld [vmem:[%s4118 + $0x10] sm:$0xff]
        %v4122 = vld [vmem:[%s4118 + $0x18] sm:$0xff]
        %v4123 = vld [vmem:[%s4118 + $0x20] sm:$0xff]
        %v4124 = vld [vmem:[%s4118 + $0x28] sm:$0xff]
        %v4125 = vld [vmem:[%s4118 + $0x30] sm:$0xff]
        %v4126 = vld [vmem:[%s4118 + $0x38] sm:$0xff]
        %v4127 = vld [vmem:[%s4118 + $0x40] sm:$0xff]
        %v4128 = vld [vmem:[%s4118 + $0x48] sm:$0xff]
        %v4129 = vld [vmem:[%s4118 + $0x50] sm:$0xff]
        %v4130 = vld [vmem:[%s4118 + $0x58] sm:$0xff]
        %v4131 = vld [vmem:[%s4118 + $0x60] sm:$0xff]
        %v4132 = vld [vmem:[%s4118 + $0x68] sm:$0xff]
        %v4133 = vld [vmem:[%s4118 + $0x70] sm:$0xff]
        %v4134 = vld [vmem:[%s4118 + $0x78] sm:$0xff]
        %v4135 = vpack.c.b16 %v2756, %v3553
        %v4153 = vunpack.c.l.b16 %v4119
        %v4154 = vunpack.c.h.b16 %v4119
        %v4155 = vunpack.c.l.b16 %v4120
        %v4156 = vunpack.c.h.b16 %v4120
        %v4157 = vunpack.c.l.b16 %v4121
        %v4158 = vunpack.c.h.b16 %v4121
        %v4159 = vunpack.c.l.b16 %v4122
        %v4160 = vunpack.c.h.b16 %v4122
        %v4161 = vunpack.c.l.b16 %v4123
        %v4162 = vunpack.c.h.b16 %v4123
        %v4163 = vunpack.c.l.b16 %v4124
        %v4164 = vunpack.c.h.b16 %v4124
        %v4165 = vunpack.c.l.b16 %v4125
        %v4166 = vunpack.c.h.b16 %v4125
        %v4167 = vunpack.c.l.b16 %v4126
        %v4168 = vunpack.c.h.b16 %v4126
        %v4169 = vunpack.c.l.b16 %v4127
        %v4170 = vunpack.c.h.b16 %v4127
        %v4171 = vunpack.c.l.b16 %v4128
        %v4172 = vunpack.c.h.b16 %v4128
        %v4173 = vunpack.c.l.b16 %v4129
        %v4174 = vunpack.c.h.b16 %v4129
        %v4175 = vunpack.c.l.b16 %v4130
        %v4176 = vunpack.c.h.b16 %v4130
        %v4177 = vunpack.c.l.b16 %v4131
        %v4178 = vunpack.c.h.b16 %v4131
        %v4179 = vunpack.c.l.b16 %v4132
        %v4180 = vunpack.c.h.b16 %v4132
        %v4181 = vunpack.c.l.b16 %v4133
        %v4182 = vunpack.c.h.b16 %v4133
        %v4183 = vunpack.c.l.b16 %v4134
        %v4184 = vunpack.c.h.b16 %v4134
        %v4185 = vpack.c.b16 %v4155, %v4153
        %v4186 = vpack.c.b16 %v4156, %v4154
        %v4187 = vpack.c.b16 %v4159, %v4157
        %v4188 = vpack.c.b16 %v4160, %v4158
        %v4189 = vpack.c.b16 %v4163, %v4161
        %v4190 = vpack.c.b16 %v4164, %v4162
        %v4191 = vpack.c.b16 %v4167, %v4165
        %v4192 = vpack.c.b16 %v4168, %v4166
        %v4193 = vpack.c.b16 %v4171, %v4169
        %v4194 = vpack.c.b16 %v4172, %v4170
        %v4195 = vpack.c.b16 %v4175, %v4173
        %v4196 = vpack.c.b16 %v4176, %v4174
        %v4197 = vpack.c.b16 %v4179, %v4177
        %v4198 = vpack.c.b16 %v4180, %v4178
        %v4199 = vpack.c.b16 %v4183, %v4181
        %v4200 = vpack.c.b16 %v4184, %v4182
        %4217 = vmatprep.subr.bf16.mxu0 %v4186
        %4218 = vmatpush1.bf16.msra.mxu0 %v4185
        %4219 = vmatprep.subr.bf16.mxu0 %v4188
        %4220 = vmatpush1.bf16.msra.mxu0 %v4187
        %4221 = vmatprep.subr.bf16.mxu0 %v4190
        %4222 = vmatpush1.bf16.msra.mxu0 %v4189
        %4223 = vmatprep.subr.bf16.mxu0 %v4192
        %4224 = vmatpush1.bf16.msra.mxu0 %v4191
        %4225 = vmatprep.subr.bf16.mxu0 %v4194
        %4226 = vmatpush1.bf16.msra.mxu0 %v4193
        %4227 = vmatprep.subr.bf16.mxu0 %v4196
        %4228 = vmatpush1.bf16.msra.mxu0 %v4195
        %4229 = vmatprep.subr.bf16.mxu0 %v4198
        %4230 = vmatpush1.bf16.msra.mxu0 %v4197
        %4231 = vmatprep.subr.bf16.mxu0 %v4200
        %4232 = vmatpush1.bf16.msra.mxu0 %v4199
        %4233 = vmatprep.subr.bf16.mxu0 0
        %4234 = vmatpush1.bf16.msra.mxu0 0
        %4235 = vmatprep.subr.bf16.mxu0 0
        %4236 = vmatpush1.bf16.msra.mxu0 0
        %4237 = vmatprep.subr.bf16.mxu0 0
        %4238 = vmatpush1.bf16.msra.mxu0 0
        %4239 = vmatprep.subr.bf16.mxu0 0
        %4240 = vmatpush1.bf16.msra.mxu0 0
        %4241 = vmatprep.subr.bf16.mxu0 0
        %4242 = vmatpush1.bf16.msra.mxu0 0
        %4243 = vmatprep.subr.bf16.mxu0 0
        %4244 = vmatpush1.bf16.msra.mxu0 0
        %4245 = vmatprep.subr.bf16.mxu0 0
        %4246 = vmatpush1.bf16.msra.mxu0 0
        %4247 = vmatprep.subr.bf16.mxu0 0
        %4248 = vmatpush1.bf16.msra.mxu0 0
        %4249 = vmatprep.mubr.bf16.mxu0 0
        %4250 = vmatmul.mubr.bf16.gmra.mrb[0].mxu0 %v2765
        %v4251 = vpop.f32.mrb[0].mxu0
        %v4252 = vadd.f32 0.0, %v4251
        %v4253 = vpop.f32.mrb[0].mxu0
        %v4254 = vadd.f32 0.0, %v4253
        %v4255 = vpop.f32.mrb[0].mxu0
        %v4256 = vadd.f32 0.0, %v4255
        %v4257 = vpop.f32.mrb[0].mxu0
        %v4258 = vadd.f32 0.0, %v4257
        %4259 = vmatprep.mubr.bf16.mxu0 0
        %4260 = vmatmul.mubr.bf16.gmra.mrb[0].mxu0 %v2766
        %v4261 = vpop.f32.mrb[0].mxu0
        %v4262 = vadd.f32 0.0, %v4261
        %v4263 = vpop.f32.mrb[0].mxu0
        %v4264 = vadd.f32 0.0, %v4263
        %v4265 = vpop.f32.mrb[0].mxu0
        %v4266 = vadd.f32 0.0, %v4265
        %v4267 = vpop.f32.mrb[0].mxu0
        %v4268 = vadd.f32 0.0, %v4267
        %4269 = vmatprep.mubr.bf16.mxu0 0
        %4270 = vmatmul.mubr.bf16.gmra.mrb[0].mxu0 %v2767
        %v4271 = vpop.f32.mrb[0].mxu0
        %v4272 = vadd.f32 0.0, %v4271
        %v4273 = vpop.f32.mrb[0].mxu0
        %v4274 = vadd.f32 0.0, %v4273
        %v4275 = vpop.f32.mrb[0].mxu0
        %v4276 = vadd.f32 0.0, %v4275
        %v4277 = vpop.f32.mrb[0].mxu0
        %v4278 = vadd.f32 0.0, %v4277
        %4279 = vmatprep.mubr.bf16.mxu0 0
        %4280 = vmatmul.mubr.bf16.gmra.mrb[0].mxu0 %v4135
        %v4281 = vpop.f32.mrb[0].mxu0
        %v4282 = vadd.f32 0.0, %v4281
        %v4283 = vpop.f32.mrb[0].mxu0
        %v4284 = vadd.f32 0.0, %v4283
        %v4285 = vpop.f32.mrb[0].mxu0
        %v4286 = vadd.f32 0.0, %v4285
        %v4287 = vpop.f32.mrb[0].mxu0
        %v4288 = vadd.f32 0.0, %v4287
        %4289 = vdwg.mxu0
        %v4290 = vadd.f32 %v4102, %v4252
        %v4291 = vadd.f32 %v4103, %v4254
        %v4292 = vadd.f32 %v4104, %v4256
        %v4293 = vadd.f32 %v4105, %v4258
        %v4294 = vadd.f32 %v4106, %v4262
        %v4295 = vadd.f32 %v4107, %v4264
        %v4296 = vadd.f32 %v4108, %v4266
        %v4297 = vadd.f32 %v4109, %v4268
        %v4298 = vadd.f32 %v4110, %v4272
        %v4299 = vadd.f32 %v4111, %v4274
        %v4300 = vadd.f32 %v4112, %v4276
        %v4301 = vadd.f32 %v4113, %v4278
        %v4302 = vadd.f32 %v4114, %v4282
        %v4303 = vadd.f32 %v4115, %v4284
        %v4304 = vadd.f32 %v4116, %v4286
        %v4305 = vadd.f32 %v4117, %v4288
        %s4306 = scalar_lea.vmem %s4, 1024
        %v4307 = vld [vmem:[%s4306] sm:$0xff]
        %v4308 = vld [vmem:[%s4306 + $0x8] sm:$0xff]
        %v4309 = vld [vmem:[%s4306 + $0x10] sm:$0xff]
        %v4310 = vld [vmem:[%s4306 + $0x18] sm:$0xff]
        %v4311 = vld [vmem:[%s4306 + $0x20] sm:$0xff]
        %v4312 = vld [vmem:[%s4306 + $0x28] sm:$0xff]
        %v4313 = vld [vmem:[%s4306 + $0x30] sm:$0xff]
        %v4314 = vld [vmem:[%s4306 + $0x38] sm:$0xff]
        %v4315 = vld [vmem:[%s4306 + $0x40] sm:$0xff]
        %v4316 = vld [vmem:[%s4306 + $0x48] sm:$0xff]
        %v4317 = vld [vmem:[%s4306 + $0x50] sm:$0xff]
        %v4318 = vld [vmem:[%s4306 + $0x58] sm:$0xff]
        %v4319 = vld [vmem:[%s4306 + $0x60] sm:$0xff]
        %v4320 = vld [vmem:[%s4306 + $0x68] sm:$0xff]
        %v4321 = vld [vmem:[%s4306 + $0x70] sm:$0xff]
        %v4322 = vld [vmem:[%s4306 + $0x78] sm:$0xff]
        %v4323 = vpack.c.b16 %v3138, %v3752
        %v4341 = vunpack.c.l.b16 %v4307
        %v4342 = vunpack.c.h.b16 %v4307
        %v4343 = vunpack.c.l.b16 %v4308
        %v4344 = vunpack.c.h.b16 %v4308
        %v4345 = vunpack.c.l.b16 %v4309
        %v4346 = vunpack.c.h.b16 %v4309
        %v4347 = vunpack.c.l.b16 %v4310
        %v4348 = vunpack.c.h.b16 %v4310
        %v4349 = vunpack.c.l.b16 %v4311
        %v4350 = vunpack.c.h.b16 %v4311
        %v4351 = vunpack.c.l.b16 %v4312
        %v4352 = vunpack.c.h.b16 %v4312
        %v4353 = vunpack.c.l.b16 %v4313
        %v4354 = vunpack.c.h.b16 %v4313
        %v4355 = vunpack.c.l.b16 %v4314
        %v4356 = vunpack.c.h.b16 %v4314
        %v4357 = vunpack.c.l.b16 %v4315
        %v4358 = vunpack.c.h.b16 %v4315
        %v4359 = vunpack.c.l.b16 %v4316
        %v4360 = vunpack.c.h.b16 %v4316
        %v4361 = vunpack.c.l.b16 %v4317
        %v4362 = vunpack.c.h.b16 %v4317
        %v4363 = vunpack.c.l.b16 %v4318
        %v4364 = vunpack.c.h.b16 %v4318
        %v4365 = vunpack.c.l.b16 %v4319
        %v4366 = vunpack.c.h.b16 %v4319
        %v4367 = vunpack.c.l.b16 %v4320
        %v4368 = vunpack.c.h.b16 %v4320
        %v4369 = vunpack.c.l.b16 %v4321
        %v4370 = vunpack.c.h.b16 %v4321
        %v4371 = vunpack.c.l.b16 %v4322
        %v4372 = vunpack.c.h.b16 %v4322
        %v4373 = vpack.c.b16 %v4343, %v4341
        %v4374 = vpack.c.b16 %v4344, %v4342
        %v4375 = vpack.c.b16 %v4347, %v4345
        %v4376 = vpack.c.b16 %v4348, %v4346
        %v4377 = vpack.c.b16 %v4351, %v4349
        %v4378 = vpack.c.b16 %v4352, %v4350
        %v4379 = vpack.c.b16 %v4355, %v4353
        %v4380 = vpack.c.b16 %v4356, %v4354
        %v4381 = vpack.c.b16 %v4359, %v4357
        %v4382 = vpack.c.b16 %v4360, %v4358
        %v4383 = vpack.c.b16 %v4363, %v4361
        %v4384 = vpack.c.b16 %v4364, %v4362
        %v4385 = vpack.c.b16 %v4367, %v4365
        %v4386 = vpack.c.b16 %v4368, %v4366
        %v4387 = vpack.c.b16 %v4371, %v4369
        %v4388 = vpack.c.b16 %v4372, %v4370
        %4405 = vmatprep.subr.bf16.mxu0 %v4374
        %4406 = vmatpush1.bf16.msra.mxu0 %v4373
        %4407 = vmatprep.subr.bf16.mxu0 %v4376
        %4408 = vmatpush1.bf16.msra.mxu0 %v4375
        %4409 = vmatprep.subr.bf16.mxu0 %v4378
        %4410 = vmatpush1.bf16.msra.mxu0 %v4377
        %4411 = vmatprep.subr.bf16.mxu0 %v4380
        %4412 = vmatpush1.bf16.msra.mxu0 %v4379
        %4413 = vmatprep.subr.bf16.mxu0 %v4382
        %4414 = vmatpush1.bf16.msra.mxu0 %v4381
        %4415 = vmatprep.subr.bf16.mxu0 %v4384
        %4416 = vmatpush1.bf16.msra.mxu0 %v4383
        %4417 = vmatprep.subr.bf16.mxu0 %v4386
        %4418 = vmatpush1.bf16.msra.mxu0 %v4385
        %4419 = vmatprep.subr.bf16.mxu0 %v4388
        %4420 = vmatpush1.bf16.msra.mxu0 %v4387
        %4421 = vmatprep.subr.bf16.mxu0 0
        %4422 = vmatpush1.bf16.msra.mxu0 0
        %4423 = vmatprep.subr.bf16.mxu0 0
        %4424 = vmatpush1.bf16.msra.mxu0 0
        %4425 = vmatprep.subr.bf16.mxu0 0
        %4426 = vmatpush1.bf16.msra.mxu0 0
        %4427 = vmatprep.subr.bf16.mxu0 0
        %4428 = vmatpush1.bf16.msra.mxu0 0
        %4429 = vmatprep.subr.bf16.mxu0 0
        %4430 = vmatpush1.bf16.msra.mxu0 0
        %4431 = vmatprep.subr.bf16.mxu0 0
        %4432 = vmatpush1.bf16.msra.mxu0 0
        %4433 = vmatprep.subr.bf16.mxu0 0
        %4434 = vmatpush1.bf16.msra.mxu0 0
        %4435 = vmatprep.subr.bf16.mxu0 0
        %4436 = vmatpush1.bf16.msra.mxu0 0
        %4437 = vmatprep.mubr.bf16.mxu0 0
        %4438 = vmatmul.mubr.bf16.gmra.mrb[0].mxu0 %v3147
        %v4439 = vpop.f32.mrb[0].mxu0
        %v4440 = vadd.f32 0.0, %v4439
        %v4441 = vpop.f32.mrb[0].mxu0
        %v4442 = vadd.f32 0.0, %v4441
        %v4443 = vpop.f32.mrb[0].mxu0
        %v4444 = vadd.f32 0.0, %v4443
        %v4445 = vpop.f32.mrb[0].mxu0
        %v4446 = vadd.f32 0.0, %v4445
        %4447 = vmatprep.mubr.bf16.mxu0 0
        %4448 = vmatmul.mubr.bf16.gmra.mrb[0].mxu0 %v3148
        %v4449 = vpop.f32.mrb[0].mxu0
        %v4450 = vadd.f32 0.0, %v4449
        %v4451 = vpop.f32.mrb[0].mxu0
        %v4452 = vadd.f32 0.0, %v4451
        %v4453 = vpop.f32.mrb[0].mxu0
        %v4454 = vadd.f32 0.0, %v4453
        %v4455 = vpop.f32.mrb[0].mxu0
        %v4456 = vadd.f32 0.0, %v4455
        %4457 = vmatprep.mubr.bf16.mxu0 0
        %4458 = vmatmul.mubr.bf16.gmra.mrb[0].mxu0 %v3149
        %v4459 = vpop.f32.mrb[0].mxu0
        %v4460 = vadd.f32 0.0, %v4459
        %v4461 = vpop.f32.mrb[0].mxu0
        %v4462 = vadd.f32 0.0, %v4461
        %v4463 = vpop.f32.mrb[0].mxu0
        %v4464 = vadd.f32 0.0, %v4463
        %v4465 = vpop.f32.mrb[0].mxu0
        %v4466 = vadd.f32 0.0, %v4465
        %4467 = vmatprep.mubr.bf16.mxu0 0
        %4468 = vmatmul.mubr.bf16.gmra.mrb[0].mxu0 %v4323
        %v4469 = vpop.f32.mrb[0].mxu0
        %v4470 = vadd.f32 0.0, %v4469
        %v4471 = vpop.f32.mrb[0].mxu0
        %v4472 = vadd.f32 0.0, %v4471
        %v4473 = vpop.f32.mrb[0].mxu0
        %v4474 = vadd.f32 0.0, %v4473
        %v4475 = vpop.f32.mrb[0].mxu0
        %v4476 = vadd.f32 0.0, %v4475
        %4477 = vdwg.mxu0
        %v4478 = vadd.f32 %v4290, %v4440
        %v4479 = vadd.f32 %v4291, %v4442
        %v4480 = vadd.f32 %v4292, %v4444
        %v4481 = vadd.f32 %v4293, %v4446
        %v4482 = vadd.f32 %v4294, %v4450
        %v4483 = vadd.f32 %v4295, %v4452
        %v4484 = vadd.f32 %v4296, %v4454
        %v4485 = vadd.f32 %v4297, %v4456
        %v4486 = vadd.f32 %v4298, %v4460
        %v4487 = vadd.f32 %v4299, %v4462
        %v4488 = vadd.f32 %v4300, %v4464
        %v4489 = vadd.f32 %v4301, %v4466
        %v4490 = vadd.f32 %v4302, %v4470
        %v4491 = vadd.f32 %v4303, %v4472
        %v4492 = vadd.f32 %v4304, %v4474
        %v4493 = vadd.f32 %v4305, %v4476
        %v4494 = vadd.f32 %v4478, %v4480
        %v4495 = vadd.f32 %v4494, %v4482
        %v4496 = vadd.f32 %v4495, %v4484
        %v4497 = vadd.f32 %v4496, %v4486
        %v4498 = vadd.f32 %v4497, %v4488
        %v4499 = vadd.f32 %v4498, %v4490
        %v4500 = vadd.f32 %v4499, %v4492
        %v4501 = vrot.slane %v4500, 4
        %v4502 = vadd.f32 %v4500, %v4501
        %v4503 = vrot.slane %v4502, 2
        %v4504 = vadd.f32 %v4502, %v4503
        %v4505 = vrot.slane %v4504, 1
        %v4506 = vadd.f32 %v4504, %v4505
        %v4507 = vadd.f32 %v4479, %v4481
        %v4508 = vadd.f32 %v4507, %v4483
        %v4509 = vadd.f32 %v4508, %v4485
        %v4510 = vadd.f32 %v4509, %v4487
        %v4511 = vadd.f32 %v4510, %v4489
        %v4512 = vadd.f32 %v4511, %v4491
        %v4513 = vadd.f32 %v4512, %v4493
        %v4514 = vrot.slane %v4513, 4
        %v4515 = vadd.f32 %v4513, %v4514
        %v4516 = vrot.slane %v4515, 2
        %v4517 = vadd.f32 %v4515, %v4516
        %v4518 = vrot.slane %v4517, 1
        %v4519 = vadd.f32 %v4517, %v4518
        %v4520 = vrcp.pop 64.0
        %v4521 = vmul.f32 %v4506, %v4520
        %v4522 = vmul.f32 %v4519, %v4520
        %v4523 = vmax.f32 %v4478, %v4482
        %v4524 = vmax.f32 %v4480, %v4484
        %v4525 = vmax.f32 %v4523, %v4486
        %v4526 = vmax.f32 %v4524, %v4488
        %v4527 = vmax.f32 %v4525, %v4490
        %v4528 = vmax.f32 %v4526, %v4492
        %v4529 = vmax.f32 %v4527, %v4528
        %v4530 = vrot.slane %v4529, 4
        %v4531 = vmax.f32 %v4529, %v4530
        %v4532 = vrot.slane %v4531, 2
        %v4533 = vmax.f32 %v4531, %v4532
        %v4534 = vrot.slane %v4533, 1
        %v4535 = vmax.f32 %v4533, %v4534
        %v4536 = vmax.f32 %v4479, %v4483
        %v4537 = vmax.f32 %v4481, %v4485
        %v4538 = vmax.f32 %v4536, %v4487
        %v4539 = vmax.f32 %v4537, %v4489
        %v4540 = vmax.f32 %v4538, %v4491
        %v4541 = vmax.f32 %v4539, %v4493
        %v4542 = vmax.f32 %v4540, %v4541
        %v4543 = vrot.slane %v4542, 4
        %v4544 = vmax.f32 %v4542, %v4543
        %v4545 = vrot.slane %v4544, 2
        %v4546 = vmax.f32 %v4544, %v4545
        %v4547 = vrot.slane %v4546, 1
        %v4548 = vmax.f32 %v4546, %v4547
        %vm4549 = vcmask 1040384
        %v4550 = vsel %vm4549, %v4521, %v4535
        %v4551 = vsel %vm4549, %v4522, %v4548
        %v4552 = vld [vmem:[%s5] sm:$0xff]
        %v4553 = vld [vmem:[%s5 + $0x8] sm:$0xff]
        %v4554 = vld [vmem:[%s5 + $0x10] sm:$0xff]
        %v4555 = vld [vmem:[%s5 + $0x18] sm:$0xff]
        %v4556 = vld [vmem:[%s5 + $0x20] sm:$0xff]
        %v4557 = vld [vmem:[%s5 + $0x28] sm:$0xff]
        %v4558 = vld [vmem:[%s5 + $0x30] sm:$0xff]
        %v4559 = vld [vmem:[%s5 + $0x38] sm:$0xff]
        %v4560 = vld [vmem:[%s5 + $0x40] sm:$0xff]
        %v4561 = vld [vmem:[%s5 + $0x48] sm:$0xff]
        %v4562 = vld [vmem:[%s5 + $0x50] sm:$0xff]
        %v4563 = vld [vmem:[%s5 + $0x58] sm:$0xff]
        %v4564 = vld [vmem:[%s5 + $0x60] sm:$0xff]
        %v4565 = vld [vmem:[%s5 + $0x68] sm:$0xff]
        %v4566 = vld [vmem:[%s5 + $0x70] sm:$0xff]
        %v4567 = vld [vmem:[%s5 + $0x78] sm:$0xff]
        %v4568 = vld [vmem:[%s5 + $0x80] sm:$0xff]
        %v4569 = vld [vmem:[%s5 + $0x88] sm:$0xff]
        %v4570 = vld [vmem:[%s5 + $0x90] sm:$0xff]
        %v4571 = vld [vmem:[%s5 + $0x98] sm:$0xff]
        %v4572 = vld [vmem:[%s5 + $0xa0] sm:$0xff]
        %v4573 = vld [vmem:[%s5 + $0xa8] sm:$0xff]
        %v4574 = vld [vmem:[%s5 + $0xb0] sm:$0xff]
        %v4575 = vld [vmem:[%s5 + $0xb8] sm:$0xff]
        %v4576 = vld [vmem:[%s5 + $0xc0] sm:$0xff]
        %v4577 = vld [vmem:[%s5 + $0xc8] sm:$0xff]
        %v4578 = vld [vmem:[%s5 + $0xd0] sm:$0xff]
        %v4579 = vld [vmem:[%s5 + $0xd8] sm:$0xff]
        %v4580 = vld [vmem:[%s5 + $0xe0] sm:$0xff]
        %v4581 = vld [vmem:[%s5 + $0xe8] sm:$0xff]
        %v4582 = vld [vmem:[%s5 + $0xf0] sm:$0xff]
        %v4583 = vld [vmem:[%s5 + $0xf8] sm:$0xff]
        %v4584 = vld [vmem:[%s6] sm:$0x1]
        %v4586 = vlaneseq
        %v4587 = vshrl.u32 %v4586, 7
        %v4588 = vsub.s32 0, %v4587
        %v4589 = vrot.slane %v4584, %v4588
        %4591 = vmatprep.subr.mxu0 0.0
        %4592 = vmatpush1.msra.mxu0 %v4552
        %4593 = vmatprep.subr.mxu0 0.0
        %4594 = vmatpush1.msra.mxu0 %v4553
        %4595 = vmatprep.subr.mxu0 0.0
        %4596 = vmatpush1.msra.mxu0 %v4554
        %4597 = vmatprep.subr.mxu0 0.0
        %4598 = vmatpush1.msra.mxu0 %v4555
        %4599 = vmatprep.subr.mxu0 0.0
        %4600 = vmatpush1.msra.mxu0 %v4556
        %4601 = vmatprep.subr.mxu0 0.0
        %4602 = vmatpush1.msra.mxu0 %v4557
        %4603 = vmatprep.subr.mxu0 0.0
        %4604 = vmatpush1.msra.mxu0 %v4558
        %4605 = vmatprep.subr.mxu0 0.0
        %4606 = vmatpush1.msra.mxu0 %v4559
        %4607 = vmatprep.subr.mxu0 0.0
        %4608 = vmatpush1.msra.mxu0 %v4560
        %4609 = vmatprep.subr.mxu0 0.0
        %4610 = vmatpush1.msra.mxu0 %v4561
        %4611 = vmatprep.subr.mxu0 0.0
        %4612 = vmatpush1.msra.mxu0 %v4562
        %4613 = vmatprep.subr.mxu0 0.0
        %4614 = vmatpush1.msra.mxu0 %v4563
        %4615 = vmatprep.subr.mxu0 0.0
        %4616 = vmatpush1.msra.mxu0 %v4564
        %4617 = vmatprep.subr.mxu0 0.0
        %4618 = vmatpush1.msra.mxu0 %v4565
        %4619 = vmatprep.subr.mxu0 0.0
        %4620 = vmatpush1.msra.mxu0 %v4566
        %4621 = vmatprep.subr.mxu0 0.0
        %4622 = vmatpush1.msra.mxu0 %v4567
        %4623 = vmatprep.subr.mxu0 0.0
        %4624 = vmatpush1.msra.mxu0 %v4568
        %4625 = vmatprep.subr.mxu0 0.0
        %4626 = vmatpush1.msra.mxu0 %v4569
        %4627 = vmatprep.subr.mxu0 0.0
        %4628 = vmatpush1.msra.mxu0 %v4570
        %4629 = vmatprep.subr.mxu0 0.0
        %4630 = vmatpush1.msra.mxu0 %v4571
        %4631 = vmatprep.subr.mxu0 0.0
        %4632 = vmatpush1.msra.mxu0 %v4572
        %4633 = vmatprep.subr.mxu0 0.0
        %4634 = vmatpush1.msra.mxu0 %v4573
        %4635 = vmatprep.subr.mxu0 0.0
        %4636 = vmatpush1.msra.mxu0 %v4574
        %4637 = vmatprep.subr.mxu0 0.0
        %4638 = vmatpush1.msra.mxu0 %v4575
        %4639 = vmatprep.subr.mxu0 0.0
        %4640 = vmatpush1.msra.mxu0 %v4576
        %4641 = vmatprep.subr.mxu0 0.0
        %4642 = vmatpush1.msra.mxu0 %v4577
        %4643 = vmatprep.subr.mxu0 0.0
        %4644 = vmatpush1.msra.mxu0 %v4578
        %4645 = vmatprep.subr.mxu0 0.0
        %4646 = vmatpush1.msra.mxu0 %v4579
        %4647 = vmatprep.subr.mxu0 0.0
        %4648 = vmatpush1.msra.mxu0 %v4580
        %4649 = vmatprep.subr.mxu0 0.0
        %4650 = vmatpush1.msra.mxu0 %v4581
        %4651 = vmatprep.subr.mxu0 0.0
        %4652 = vmatpush1.msra.mxu0 %v4582
        %4653 = vmatprep.subr.mxu0 0.0
        %4654 = vmatpush1.msra.mxu0 %v4583
        %4655 = vmatprep.mubr.f32.mxu0 %v4551
        %4656 = vmatmul.mubr.f32.gmra.mrb[0].mxu0 %v4550
        %v4657 = vpop.f32.mrb[0].mxu0
        %v4658 = vadd.f32 %v4589, %v4657
        %v4659 = vpop.f32.mrb[0].mxu0
        %4660 = vdwg.mxu0
        %v4661 = vmax.f32 %v4658, 0.0
        %v4662 = vld [vmem:[%s7] sm:$0xff]
        %v4663 = vld [vmem:[%s7 + $0x8] sm:$0xff]
        %v4664 = vld [vmem:[%s7 + $0x10] sm:$0xff]
        %v4665 = vld [vmem:[%s7 + $0x18] sm:$0xff]
        %v4666 = vld [vmem:[%s8] sm:$0x3]
        %v4668 = vlaneseq
        %v4669 = vshrl.u32 %v4668, 7
        %v4670 = vsub.s32 0, %v4669
        %v4671 = vrot.slane %v4666, %v4670
        %v4672 = vlaneseq
        %v4673 = vshrl.u32 %v4672, 7
        %v4674 = vsub.s32 1, %v4673
        %v4675 = vrot.slane %v4666, %v4674
        %vm4678 = vcmask 130048
        %v4680 = vsel %vm4678, %v4661, 0
        %4682 = vmatprep.subr.mxu0 %v4663
        %4683 = vmatpush1.msra.mxu0 %v4662
        %4684 = vmatprep.subr.mxu0 %v4665
        %4685 = vmatpush1.msra.mxu0 %v4664
        %4686 = vmatprep.subr.mxu0 0.0
        %4687 = vmatpush1.msra.mxu0 0.0
        %4688 = vmatprep.subr.mxu0 0.0
        %4689 = vmatpush1.msra.mxu0 0.0
        %4690 = vmatprep.subr.mxu0 0.0
        %4691 = vmatpush1.msra.mxu0 0.0
        %4692 = vmatprep.subr.mxu0 0.0
        %4693 = vmatpush1.msra.mxu0 0.0
        %4694 = vmatprep.subr.mxu0 0.0
        %4695 = vmatpush1.msra.mxu0 0.0
        %4696 = vmatprep.subr.mxu0 0.0
        %4697 = vmatpush1.msra.mxu0 0.0
        %4698 = vmatprep.subr.mxu0 0.0
        %4699 = vmatpush1.msra.mxu0 0.0
        %4700 = vmatprep.subr.mxu0 0.0
        %4701 = vmatpush1.msra.mxu0 0.0
        %4702 = vmatprep.subr.mxu0 0.0
        %4703 = vmatpush1.msra.mxu0 0.0
        %4704 = vmatprep.subr.mxu0 0.0
        %4705 = vmatpush1.msra.mxu0 0.0
        %4706 = vmatprep.subr.mxu0 0.0
        %4707 = vmatpush1.msra.mxu0 0.0
        %4708 = vmatprep.subr.mxu0 0.0
        %4709 = vmatpush1.msra.mxu0 0.0
        %4710 = vmatprep.subr.mxu0 0.0
        %4711 = vmatpush1.msra.mxu0 0.0
        %4712 = vmatprep.subr.mxu0 0.0
        %4713 = vmatpush1.msra.mxu0 0.0
        %4714 = vmatprep.subr.mxu0 0.0
        %4715 = vmatpush1.msra.mxu0 0.0
        %4716 = vmatprep.subr.mxu0 0.0
        %4717 = vmatpush1.msra.mxu0 0.0
        %4718 = vmatprep.subr.mxu0 0.0
        %4719 = vmatpush1.msra.mxu0 0.0
        %4720 = vmatprep.subr.mxu0 0.0
        %4721 = vmatpush1.msra.mxu0 0.0
        %4722 = vmatprep.subr.mxu0 0.0
        %4723 = vmatpush1.msra.mxu0 0.0
        %4724 = vmatprep.subr.mxu0 0.0
        %4725 = vmatpush1.msra.mxu0 0.0
        %4726 = vmatprep.subr.mxu0 0.0
        %4727 = vmatpush1.msra.mxu0 0.0
        %4728 = vmatprep.subr.mxu0 0.0
        %4729 = vmatpush1.msra.mxu0 0.0
        %4730 = vmatprep.subr.mxu0 0.0
        %4731 = vmatpush1.msra.mxu0 0.0
        %4732 = vmatprep.subr.mxu0 0.0
        %4733 = vmatpush1.msra.mxu0 0.0
        %4734 = vmatprep.subr.mxu0 0.0
        %4735 = vmatpush1.msra.mxu0 0.0
        %4736 = vmatprep.subr.mxu0 0.0
        %4737 = vmatpush1.msra.mxu0 0.0
        %4738 = vmatprep.subr.mxu0 0.0
        %4739 = vmatpush1.msra.mxu0 0.0
        %4740 = vmatprep.subr.mxu0 0.0
        %4741 = vmatpush1.msra.mxu0 0.0
        %4742 = vmatprep.subr.mxu0 0.0
        %4743 = vmatpush1.msra.mxu0 0.0
        %4744 = vmatprep.subr.mxu0 0.0
        %4745 = vmatpush1.msra.mxu0 0.0
        %4746 = vmatprep.mubr.f32.mxu0 0.0
        %4747 = vmatmul.mubr.f32.gmra.mrb[0].mxu0 %v4680
        %v4748 = vpop.f32.mrb[0].mxu0
        %v4749 = vadd.f32 %v4671, %v4748
        %v4750 = vpop.f32.mrb[0].mxu0
        %v4751 = vadd.f32 %v4675, %v4750
        %4752 = vdwg.mxu0
        %v4755 = vrot.slane %v4749, 1
        %v4756 = vrot.slane %v4751, 1
        %v4759 = vadd.f32 %v4749, %v4755
        %v4760 = vadd.f32 %v4751, %v4756
        %v4761 = vxor.u32 %v4759, 2147483648
        %v4762 = vxor.u32 %v4760, 2147483648
        %v4763 = vmul.f32 %v4761, 1.442695
        %v4764 = vpow.pop %v4763
        %v4765 = vmul.f32 %v4762, 1.442695
        %v4766 = vpow.pop %v4765
        %v4767 = vadd.f32 %v4764, 1.0
        %v4768 = vadd.f32 %v4766, 1.0
        %v4769 = vrcp.pop %v4767
        %v4770 = vmul.f32 1.0, %v4769
        %v4771 = vrcp.pop %v4768
        %v4772 = vmul.f32 1.0, %v4771
        %v4773 = vlaneseq
        %v4774 = vshrl.u32 %v4773, 7
        %v4775 = vsub.s32 0, %v4774
        %v4776 = vrot.slane %v4770, %v4775
        %v4777 = vlaneseq
        %v4778 = vshrl.u32 %v4777, 7
        %v4779 = vsub.s32 0, %v4778
        %v4780 = vrot.slane %v4772, %v4779
        %v4781 = vmul.f32 %v4478, %v4776
        %v4782 = vmul.f32 %v4479, %v4780
        %v4783 = vmul.f32 %v4480, %v4776
        %v4784 = vmul.f32 %v4481, %v4780
        %v4785 = vmul.f32 %v4482, %v4776
        %v4786 = vmul.f32 %v4483, %v4780
        %v4787 = vmul.f32 %v4484, %v4776
        %v4788 = vmul.f32 %v4485, %v4780
        %v4789 = vmul.f32 %v4486, %v4776
        %v4790 = vmul.f32 %v4487, %v4780
        %v4791 = vmul.f32 %v4488, %v4776
        %v4792 = vmul.f32 %v4489, %v4780
        %v4793 = vmul.f32 %v4490, %v4776
        %v4794 = vmul.f32 %v4491, %v4780
        %v4795 = vmul.f32 %v4492, %v4776
        %v4796 = vmul.f32 %v4493, %v4780
        %4797 = vst [vmem:[%s339] sm:$0xff] %v4781
        %4798 = vst [vmem:[%s339 + $0x8] sm:$0xff] %v4782
        %4799 = vst [vmem:[%s339 + $0x10] sm:$0xff] %v4783
        %4800 = vst [vmem:[%s339 + $0x18] sm:$0xff] %v4784
        %4801 = vst [vmem:[%s339 + $0x20] sm:$0xff] %v4785
        %4802 = vst [vmem:[%s339 + $0x28] sm:$0xff] %v4786
        %4803 = vst [vmem:[%s339 + $0x30] sm:$0xff] %v4787
        %4804 = vst [vmem:[%s339 + $0x38] sm:$0xff] %v4788
        %4805 = vst [vmem:[%s339 + $0x40] sm:$0xff] %v4789
        %4806 = vst [vmem:[%s339 + $0x48] sm:$0xff] %v4790
        %4807 = vst [vmem:[%s339 + $0x50] sm:$0xff] %v4791
        %4808 = vst [vmem:[%s339 + $0x58] sm:$0xff] %v4792
        %4809 = vst [vmem:[%s339 + $0x60] sm:$0xff] %v4793
        %4810 = vst [vmem:[%s339 + $0x68] sm:$0xff] %v4794
        %4811 = vst [vmem:[%s339 + $0x70] sm:$0xff] %v4795
        %4812 = vst [vmem:[%s339 + $0x78] sm:$0xff] %v4796
        %s4813 = sand.u32 %s226, 1
        %s4814 = scalar_lea.sflag [#allocation3], %s4813
        %s4815 = sand.u32 %s226, 1
        %s4816 = smul.addr %s4815, 128
        %s4817 = scalar_lea.vmem [#allocation5], %s4816
        // Predicated region
        $region61: #{grid_dense_channel_ext.1} parent=55 // pred_check
          %p4818 = pneg %p236
        $region62: #{grid_dense_channel_ext.1} parent=55 // pred_check_branch
          %4820 = sbr.rel (%p4818) target = $region64
        $region63: #{grid_dense_channel_ext.1} parent=55 // pred_region
          %s4822 = ssub.s32 2048, 2048
          %4823 = vsyncadd %s4814, %s4822
          %s4824 = smul.addr %s24, 16
          %s4825 = smul.addr %s4824, 128
          %s4826 = scalar_lea.hbm %s9, %s4825
          %s4827 = sshll.u32 %s4817, 4
          %s4828 = int_to_ptr.vmem [resolvable:$true] %s4827
          %4833 = dma.vmem_to_hbm [thread:$0]  %s4828, 2048, %s4826, %s4814, 256, 256, 16
        $region64: #{grid_dense_channel_ext.1} parent=55 // pred_fallthru
          _
      $region56: #{grid_dense_channel_ext.1} parent=5 // pred_fallthru
        _
      %p4834 = scmp.le.s32.totalorder 2, %s19
      // Predicated region
      $region65: #{grid_dense_channel_ext.1} parent=5 // pred_check
        %p4835 = pneg %p4834
      $region66: #{grid_dense_channel_ext.1} parent=5 // pred_check_branch
        %4837 = sbr.rel (%p4835) target = $region68
      $region67: #{grid_dense_channel_ext.1} parent=5 // pred_region
        %s4838 = ssub.s32 %s19, 2
        // Predicated region
        $region69: #{grid_dense_channel_ext.1} parent=67 // pred_check
          %p4839 = pneg %p242
        $region70: #{grid_dense_channel_ext.1} parent=67 // pred_check_branch
          %4841 = sbr.rel (%p4839) target = $region72
        $region71: #{grid_dense_channel_ext.1} parent=67 // pred_region
          %s4842 = sand.u32 %s227, 1
          %s4843 = scalar_lea.sflag [#allocation3], %s4842
          %s4844 = sand.u32 %s227, 1
          %s4845 = smul.addr %s4844, 128
          %s4846 = scalar_lea.vmem [#allocation5], %s4845
          %4847 = dma.done %s4843, 2048
        $region72: #{grid_dense_channel_ext.1} parent=67 // pred_fallthru
          _
      $region68: #{grid_dense_channel_ext.1} parent=5 // pred_fallthru
        _
    $region6: #{grid_dense_channel_ext.1} parent=1 // loop_footer
      %s23 = sadd.s32 1, %s19
    $region7: #{grid_dense_channel_ext.1} parent=1 // loop_footer_branch
      %18 = sbr.rel target = $region3
    $region8: #{grid_dense_channel_ext.1} parent=1 // loop_exit
      _
    %4848 = vsyncpa [#allocation3], 1
    %s4849 = scalar_lea.sflag [#allocation3], 1
    %4850 = vsyncpa %s4849, 1
    %4851 = vsyncpa [#allocation4], 1
    %s4852 = scalar_lea.sflag [#allocation4], 1
    %4853 = vsyncpa %s4852, 1

</llo_original>
